<compile_context>
chip_gen: v6e
topology: v6e:2x2x1
jax: 0.10.0
libtpu: 0.0.40
codegen_flags: <defaults>
</compile_context>

<pallas_src>
import jax
import jax.numpy as jnp
from jax.experimental import pallas as pl
from jax.experimental.pallas import tpu as pltpu

VMEM_SPEC = pl.BlockSpec(memory_space=pltpu.MemorySpace.VMEM)


# ------------------------------- fused kernel ------------------------------ #

def _cpic_kernel(xp_ref, xf_ref, wblk_ref, bblk_ref,
                 cw1x_ref, cw1y_ref, cb1_ref, cw2_ref, cb2_ref, cw3_ref, cb3_ref,
                 yw1x_ref, yw1y_ref, yb1_ref, yw2_ref, yb2_ref, yw3_ref, yb3_ref,
                 out_ref,
                 hxc_ref, hxy_ref):
    B = xp_ref.shape[0]

    xp = xp_ref[...]                      # (B, T*xdim)
    xf = xf_ref[...]                      # (B, T*xdim)
    wblk = wblk_ref[...]                  # (T*xdim, T*ydim) block-diagonal encoder weight
    bblk = bblk_ref[...]                  # (1, T*ydim)

    # StructuredEncoder (linear, deterministic): per-timestep Linear folded block-diagonally.
    enc_p = jnp.dot(xp, wblk, preferred_element_type=jnp.float32) + bblk   # (B, T*ydim)
    enc_f = jnp.dot(xf, wblk, preferred_element_type=jnp.float32) + bblk   # (B, T*ydim)

    # Split first critic layer: h1[i, j] = enc_p[i] @ W1_x + y[j] @ W1_y + b1.
    # Hx rows are consumed one at a time -> keep them in VMEM scratch for pl.ds row reads.
    hxc_ref[...] = jnp.dot(enc_p, cw1x_ref[...], preferred_element_type=jnp.float32)
    hxy_ref[...] = jnp.dot(enc_p, yw1x_ref[...], preferred_element_type=jnp.float32)

    # Loop-invariant terms, loaded/broadcast once (b1 folded into Hy).
    hyc = jnp.dot(enc_f, cw1y_ref[...], preferred_element_type=jnp.float32) + cb1_ref[...]
    hyy = jnp.dot(xf, yw1y_ref[...], preferred_element_type=jnp.float32) + yb1_ref[...]
    cw2 = cw2_ref[...]; cb2 = cb2_ref[...]; cw3 = cw3_ref[...]; cb3 = cb3_ref[...]
    yw2 = yw2_ref[...]; yb2 = yb2_ref[...]; yw3 = yw3_ref[...]; yb3 = yb3_ref[...]

    row_ids = jax.lax.broadcasted_iota(jnp.int32, (B, 1), 0)

    def scores_col(hx_row, hy_full, w2, b2, w3row, b3):
        # Row i of the (transposed) score matrix: s[j] = MLP(concat(x[i], y[j])).
        h1 = jnp.maximum(hx_row + hy_full, 0.0)                                   # (B, H)
        h2 = jnp.maximum(jnp.dot(h1, w2, preferred_element_type=jnp.float32) + b2, 0.0)
        return jnp.sum(h2 * w3row, axis=1, keepdims=True) + b3                    # (B, 1)

    def infonce_term(s, i):
        # diag(S)[i] - logsumexp_j S[i, j]
        diag = jnp.sum(jnp.where(row_ids == i, s, 0.0), axis=0, keepdims=True)    # (1, 1)
        m = jnp.max(s, axis=0, keepdims=True)
        lse = m + jnp.log(jnp.sum(jnp.exp(s - m), axis=0, keepdims=True))
        return diag - lse

    def body(i, carry):
        acc_pred, acc_yx = carry
        hxc_i = hxc_ref[pl.ds(i, 1), :]                                           # (1, H)
        hxy_i = hxy_ref[pl.ds(i, 1), :]
        s_pred = scores_col(hxc_i, hyc, cw2, cb2, cw3, cb3)
        s_yx = scores_col(hxy_i, hyy, yw2, yb2, yw3, yb3)
        return (acc_pred + infonce_term(s_pred, i),
                acc_yx + infonce_term(s_yx, i))

    zero = jnp.zeros((1, 1), jnp.float32)
    acc_pred, acc_yx = jax.lax.fori_loop(0, B, body, (zero, zero), unroll=True)

    log_b = jnp.log(jnp.float32(B))
    inv_b = 1.0 / jnp.float32(B)
    out_ref[:, 0:1] = log_b + acc_pred * inv_b
    out_ref[:, 1:2] = log_b + acc_yx * inv_b


# ------------------------------ model wrapper ------------------------------ #

def cpic_forward(params, x_past, x_future, beta=1e-3, beta1=1.0, beta2=1.0):
    B, T, xdim = x_past.shape
    ydim = params["enc_w"].shape[1]
    H = params["critic"][0][0].shape[1]
    dlat = T * ydim

    # Feature-last 2-D views (matches torch .reshape(batch_size, -1)).
    xp2d = x_past.reshape(B, T * xdim)
    xf2d = x_future.reshape(B, T * xdim)

    # Per-timestep Linear(xdim -> ydim) as one block-diagonal matmul.
    wblk = jnp.kron(jnp.eye(T, dtype=jnp.float32), params["enc_w"])     # (T*xdim, T*ydim)
    bblk = jnp.tile(params["enc_b"], (1, T))                            # (1, T*ydim)

    # ConcatCritic weights: split W1 so the B^2 pair tensor is never built.
    (cw1, cb1), (cw2, cb2), (cw3, cb3) = params["critic"]
    (yw1, yb1), (yw2, yb2), (yw3, yb3) = params["critic_YX"]
    cw1x, cw1y = cw1[:dlat], cw1[dlat:]
    yw1x, yw1y = yw1[:dlat], yw1[dlat:]
    cw3r, yw3r = cw3.T, yw3.T                                           # (1, H) rows

    out = pl.pallas_call(
        _cpic_kernel,
        out_shape=jax.ShapeDtypeStruct((1, 2), jnp.float32),
        in_specs=[VMEM_SPEC] * 18,
        out_specs=VMEM_SPEC,
        scratch_shapes=[pltpu.VMEM((B, H), jnp.float32),
                        pltpu.VMEM((B, H), jnp.float32)],
    )(xp2d, xf2d, wblk, bblk,
      cw1x, cw1y, cb1, cw2, cb2, cw3r, cb3,
      yw1x, yw1y, yb1, yw2, yb2, yw3r, yb3)

    I_predictive_bound = out[0, 0]
    I_YX_bound = out[0, 1]
    # deterministic=True path: I_compress_bound = torch.tensor([0])
    I_compress_bound = jnp.zeros((1,), jnp.float32)

    L = beta * I_compress_bound - beta1 * I_predictive_bound - beta2 * I_YX_bound
    return L, I_compress_bound, I_predictive_bound


# ------------------------- pure-JAX reference check ------------------------- #

def _reference_forward(params, x_past, x_future, beta=1e-3, beta1=1.0, beta2=1.0):
    B = x_past.shape[0]

    def enc(x):
        return jnp.dot(x, params["enc_w"]) + params["enc_b"]

    ep = enc(x_past).reshape(B, -1)
    ef = enc(x_future).reshape(B, -1)
    fr = x_future.reshape(B, -1)

    def mlp3(x, p):
        (w1, b1), (w2, b2), (w3, b3) = p
        h = jnp.maximum(jnp.dot(x, w1) + b1, 0.0)
        h = jnp.maximum(jnp.dot(h, w2) + b2, 0.0)
        return jnp.dot(h, w3) + b3

    def concat_critic(x, y, p):
        xt = jnp.tile(x[None, :, :], (B, 1, 1))
        yt = jnp.tile(y[:, None, :], (1, B, 1))
        pairs = jnp.concatenate([xt, yt], axis=2).reshape(B * B, -1)
        return mlp3(pairs, p).reshape(B, B).T

    def infonce(s):
        return jnp.log(jnp.float32(B)) + jnp.mean(
            jnp.diag(s) - jax.scipy.special.logsumexp(s, axis=1))

    I_pred = infonce(concat_critic(ep, ef, params["critic"]))
    I_yx = infonce(concat_critic(ep, fr, params["critic_YX"]))
    I_comp = jnp.zeros((1,), jnp.float32)
    L = beta * I_comp - beta1 * I_pred - beta2 * I_yx
    return L, I_comp, I_pred


# --------------------------- deterministic init ----------------------------- #

def init_linear(key, fan_in, fan_out):
    kw, kb = jax.random.split(key)
    bound = 1.0 / jnp.sqrt(jnp.float32(fan_in))
    w = jax.random.uniform(kw, (fan_in, fan_out), jnp.float32, -bound, bound)
    b = jax.random.uniform(kb, (1, fan_out), jnp.float32, -bound, bound)
    return w, b


def init_mlp3(key, d_in, hidden, d_out):
    k1, k2, k3 = jax.random.split(key, 3)
    return (
        init_linear(k1, d_in, hidden),
        init_linear(k2, hidden, hidden),
        init_linear(k3, hidden, d_out),
    )


if __name__ == "__main__":
    key = jax.random.PRNGKey(0)
    B, T, xdim, ydim, hidden = 8, 4, 6, 3, 32

    k_enc, k_c, k_cyx, kx, kf = jax.random.split(key, 5)
    params = {}
    params["enc_w"], params["enc_b"] = init_linear(k_enc, xdim, ydim)
    # ConcatCritic (latent past, latent future): input dim = T*ydim + T*ydim
    params["critic"] = init_mlp3(k_c, 2 * T * ydim, hidden, 1)
    # ConcatCritic_YX (latent past, raw future): input dim = T*ydim + T*xdim
    params["critic_YX"] = init_mlp3(k_cyx, T * ydim + T * xdim, hidden, 1)

    x_past = jax.random.normal(kx, (B, T, xdim), jnp.float32)
    x_future = jax.random.normal(kf, (B, T, xdim), jnp.float32)

    L, I_compress, I_predictive = jax.jit(cpic_forward)(params, x_past, x_future)
    jax.block_until_ready((L, I_compress, I_predictive))

    ref_L, _, ref_Ip = jax.jit(_reference_forward)(params, x_past, x_future)
    jax.block_until_ready((ref_L, ref_Ip))
    assert bool(jnp.allclose(L, ref_L, rtol=1e-4, atol=1e-4)), (L, ref_L)
    assert bool(jnp.allclose(I_predictive, ref_Ip, rtol=1e-4, atol=1e-4)), (I_predictive, ref_Ip)

    print("KERNEL_OK")
</pallas_src>

<mosaic_0001>
module attributes {stable_mosaic.version = 11 : i64} {
  func.func @_cpic_kernel(%arg0: memref<8x24xf32, #tpu.memory_space<vmem>>, %arg1: memref<8x24xf32, #tpu.memory_space<vmem>>, %arg2: memref<24x12xf32, #tpu.memory_space<vmem>>, %arg3: memref<1x12xf32, #tpu.memory_space<vmem>>, %arg4: memref<12x32xf32, #tpu.memory_space<vmem>>, %arg5: memref<12x32xf32, #tpu.memory_space<vmem>>, %arg6: memref<1x32xf32, #tpu.memory_space<vmem>>, %arg7: memref<32x32xf32, #tpu.memory_space<vmem>>, %arg8: memref<1x32xf32, #tpu.memory_space<vmem>>, %arg9: memref<1x32xf32, #tpu.memory_space<vmem>>, %arg10: memref<1x1xf32, #tpu.memory_space<vmem>>, %arg11: memref<12x32xf32, #tpu.memory_space<vmem>>, %arg12: memref<24x32xf32, #tpu.memory_space<vmem>>, %arg13: memref<1x32xf32, #tpu.memory_space<vmem>>, %arg14: memref<32x32xf32, #tpu.memory_space<vmem>>, %arg15: memref<1x32xf32, #tpu.memory_space<vmem>>, %arg16: memref<1x32xf32, #tpu.memory_space<vmem>>, %arg17: memref<1x1xf32, #tpu.memory_space<vmem>>, %arg18: memref<1x2xf32, #tpu.memory_space<vmem>>, %arg19: memref<8x32xf32, #tpu.memory_space<vmem>>, %arg20: memref<8x32xf32, #tpu.memory_space<vmem>>) attributes {dimension_semantics = [], scalar_prefetch = 0 : i64, scratch_operands = 2 : i64, tpu.core_type = #tpu.core_type<tc>} {
    %c0 = arith.constant 0 : index
    %c0_0 = arith.constant 0 : index
    %0 = vector.load %arg0[%c0, %c0_0] : memref<8x24xf32, #tpu.memory_space<vmem>>, vector<8x24xf32>
    %c0_1 = arith.constant 0 : index
    %c0_2 = arith.constant 0 : index
    %1 = vector.load %arg1[%c0_1, %c0_2] : memref<8x24xf32, #tpu.memory_space<vmem>>, vector<8x24xf32>
    %c0_3 = arith.constant 0 : index
    %c0_4 = arith.constant 0 : index
    %2 = vector.load %arg2[%c0_3, %c0_4] : memref<24x12xf32, #tpu.memory_space<vmem>>, vector<24x12xf32>
    %c0_5 = arith.constant 0 : index
    %c0_6 = arith.constant 0 : index
    %3 = vector.load %arg3[%c0_5, %c0_6] : memref<1x12xf32, #tpu.memory_space<vmem>>, vector<1x12xf32>
    %cst = arith.constant dense<0.000000e+00> : vector<8x12xf32>
    %4 = tpu.matmul %0, %2, %cst {dimension_numbers = #tpu.dot_dimension_numbers<[1], [0], [0], [1], [0, 0, 1, 1], [], []>} : vector<8x24xf32>, vector<24x12xf32>, vector<8x12xf32> -> vector<8x12xf32>
    %5 = vector.broadcast %3 : vector<1x12xf32> to vector<8x12xf32>
    %6 = arith.addf %4, %5 : vector<8x12xf32>
    %cst_7 = arith.constant dense<0.000000e+00> : vector<8x12xf32>
    %7 = tpu.matmul %1, %2, %cst_7 {dimension_numbers = #tpu.dot_dimension_numbers<[1], [0], [0], [1], [0, 0, 1, 1], [], []>} : vector<8x24xf32>, vector<24x12xf32>, vector<8x12xf32> -> vector<8x12xf32>
    %8 = vector.broadcast %3 : vector<1x12xf32> to vector<8x12xf32>
    %9 = arith.addf %7, %8 : vector<8x12xf32>
    %c0_8 = arith.constant 0 : index
    %c0_9 = arith.constant 0 : index
    %10 = vector.load %arg4[%c0_8, %c0_9] : memref<12x32xf32, #tpu.memory_space<vmem>>, vector<12x32xf32>
    %cst_10 = arith.constant dense<0.000000e+00> : vector<8x32xf32>
    %11 = tpu.matmul %6, %10, %cst_10 {dimension_numbers = #tpu.dot_dimension_numbers<[1], [0], [0], [1], [0, 0, 1, 1], [], []>} : vector<8x12xf32>, vector<12x32xf32>, vector<8x32xf32> -> vector<8x32xf32>
    %c0_11 = arith.constant 0 : index
    %c0_12 = arith.constant 0 : index
    %12 = vector.load %arg19[%c0_11, %c0_12] : memref<8x32xf32, #tpu.memory_space<vmem>>, vector<8x32xf32>
    tpu.vector_store %arg19[%c0_11, %c0_12], %11 {strides = array<i32>} : memref<8x32xf32, #tpu.memory_space<vmem>>, vector<8x32xf32>,
    %c0_13 = arith.constant 0 : index
    %c0_14 = arith.constant 0 : index
    %13 = vector.load %arg11[%c0_13, %c0_14] : memref<12x32xf32, #tpu.memory_space<vmem>>, vector<12x32xf32>
    %cst_15 = arith.constant dense<0.000000e+00> : vector<8x32xf32>
    %14 = tpu.matmul %6, %13, %cst_15 {dimension_numbers = #tpu.dot_dimension_numbers<[1], [0], [0], [1], [0, 0, 1, 1], [], []>} : vector<8x12xf32>, vector<12x32xf32>, vector<8x32xf32> -> vector<8x32xf32>
    %c0_16 = arith.constant 0 : index
    %c0_17 = arith.constant 0 : index
    %15 = vector.load %arg20[%c0_16, %c0_17] : memref<8x32xf32, #tpu.memory_space<vmem>>, vector<8x32xf32>
    tpu.vector_store %arg20[%c0_16, %c0_17], %14 {strides = array<i32>} : memref<8x32xf32, #tpu.memory_space<vmem>>, vector<8x32xf32>,
    %c0_18 = arith.constant 0 : index
    %c0_19 = arith.constant 0 : index
    %16 = vector.load %arg5[%c0_18, %c0_19] : memref<12x32xf32, #tpu.memory_space<vmem>>, vector<12x32xf32>
    %cst_20 = arith.constant dense<0.000000e+00> : vector<8x32xf32>
    %17 = tpu.matmul %9, %16, %cst_20 {dimension_numbers = #tpu.dot_dimension_numbers<[1], [0], [0], [1], [0, 0, 1, 1], [], []>} : vector<8x12xf32>, vector<12x32xf32>, vector<8x32xf32> -> vector<8x32xf32>
    %c0_21 = arith.constant 0 : index
    %c0_22 = arith.constant 0 : index
    %18 = vector.load %arg6[%c0_21, %c0_22] : memref<1x32xf32, #tpu.memory_space<vmem>>, vector<1x32xf32>
    %19 = vector.broadcast %18 : vector<1x32xf32> to vector<8x32xf32>
    %20 = arith.addf %17, %19 : vector<8x32xf32>
    %c0_23 = arith.constant 0 : index
    %c0_24 = arith.constant 0 : index
    %21 = vector.load %arg12[%c0_23, %c0_24] : memref<24x32xf32, #tpu.memory_space<vmem>>, vector<24x32xf32>
    %cst_25 = arith.constant dense<0.000000e+00> : vector<8x32xf32>
    %22 = tpu.matmul %1, %21, %cst_25 {dimension_numbers = #tpu.dot_dimension_numbers<[1], [0], [0], [1], [0, 0, 1, 1], [], []>} : vector<8x24xf32>, vector<24x32xf32>, vector<8x32xf32> -> vector<8x32xf32>
    %c0_26 = arith.constant 0 : index
    %c0_27 = arith.constant 0 : index
    %23 = vector.load %arg13[%c0_26, %c0_27] : memref<1x32xf32, #tpu.memory_space<vmem>>, vector<1x32xf32>
    %24 = vector.broadcast %23 : vector<1x32xf32> to vector<8x32xf32>
    %25 = arith.addf %22, %24 : vector<8x32xf32>
    %c0_28 = arith.constant 0 : index
    %c0_29 = arith.constant 0 : index
    %26 = vector.load %arg7[%c0_28, %c0_29] : memref<32x32xf32, #tpu.memory_space<vmem>>, vector<32x32xf32>
    %c0_30 = arith.constant 0 : index
    %c0_31 = arith.constant 0 : index
    %27 = vector.load %arg8[%c0_30, %c0_31] : memref<1x32xf32, #tpu.memory_space<vmem>>, vector<1x32xf32>
    %c0_32 = arith.constant 0 : index
    %c0_33 = arith.constant 0 : index
    %28 = vector.load %arg9[%c0_32, %c0_33] : memref<1x32xf32, #tpu.memory_space<vmem>>, vector<1x32xf32>
    %c0_34 = arith.constant 0 : index
    %c0_35 = arith.constant 0 : index
    %29 = vector.load %arg10[%c0_34, %c0_35] : memref<1x1xf32, #tpu.memory_space<vmem>>, vector<1x1xf32>
    %c0_36 = arith.constant 0 : index
    %c0_37 = arith.constant 0 : index
    %30 = vector.load %arg14[%c0_36, %c0_37] : memref<32x32xf32, #tpu.memory_space<vmem>>, vector<32x32xf32>
    %c0_38 = arith.constant 0 : index
    %c0_39 = arith.constant 0 : index
    %31 = vector.load %arg15[%c0_38, %c0_39] : memref<1x32xf32, #tpu.memory_space<vmem>>, vector<1x32xf32>
    %c0_40 = arith.constant 0 : index
    %c0_41 = arith.constant 0 : index
    %32 = vector.load %arg16[%c0_40, %c0_41] : memref<1x32xf32, #tpu.memory_space<vmem>>, vector<1x32xf32>
    %c0_42 = arith.constant 0 : index
    %c0_43 = arith.constant 0 : index
    %33 = vector.load %arg17[%c0_42, %c0_43] : memref<1x1xf32, #tpu.memory_space<vmem>>, vector<1x1xf32>
    %34 = tpu.iota {dimensions = array<i32: 0>} : vector<8x1xi32>
    %cst_44 = arith.constant 0.000000e+00 : f32
    %35 = vector.broadcast %cst_44 : f32 to vector<1x1xf32>
    %c0_i32 = arith.constant 0 : i32
    %36 = arith.index_cast %c0_i32 : i32 to index
    %c0_45 = arith.constant 0 : index
    %37 = vector.load %arg19[%36, %c0_45] : memref<8x32xf32, #tpu.memory_space<vmem>>, vector<1x32xf32>
    %38 = arith.index_cast %c0_i32 : i32 to index
    %c0_46 = arith.constant 0 : index
    %39 = vector.load %arg20[%38, %c0_46] : memref<8x32xf32, #tpu.memory_space<vmem>>, vector<1x32xf32>
    %40 = vector.broadcast %37 : vector<1x32xf32> to vector<8x32xf32>
    %41 = arith.addf %40, %20 : vector<8x32xf32>
    %cst_47 = arith.constant 0.000000e+00 : f32
    %42 = vector.broadcast %cst_47 : f32 to vector<8x32xf32>
    %43 = arith.maximumf %41, %42 : vector<8x32xf32>
    %cst_48 = arith.constant dense<0.000000e+00> : vector<8x32xf32>
    %44 = tpu.matmul %43, %26, %cst_48 {dimension_numbers = #tpu.dot_dimension_numbers<[1], [0], [0], [1], [0, 0, 1, 1], [], []>} : vector<8x32xf32>, vector<32x32xf32>, vector<8x32xf32> -> vector<8x32xf32>
    %45 = vector.broadcast %27 : vector<1x32xf32> to vector<8x32xf32>
    %46 = arith.addf %44, %45 : vector<8x32xf32>
    %cst_49 = arith.constant 0.000000e+00 : f32
    %47 = vector.broadcast %cst_49 : f32 to vector<8x32xf32>
    %48 = arith.maximumf %46, %47 : vector<8x32xf32>
    %49 = vector.broadcast %28 : vector<1x32xf32> to vector<8x32xf32>
    %50 = arith.mulf %48, %49 : vector<8x32xf32>
    %cst_50 = arith.constant dense<0.000000e+00> : vector<8xf32>
    %51 = vector.multi_reduction <add>, %50, %cst_50 [1] : vector<8x32xf32> to vector<8xf32>
    %52 = vector.shape_cast %51 : vector<8xf32> to vector<8x1xf32>
    %53 = vector.broadcast %29 : vector<1x1xf32> to vector<8x1xf32>
    %54 = arith.addf %52, %53 : vector<8x1xf32>
    %55 = vector.broadcast %39 : vector<1x32xf32> to vector<8x32xf32>
    %56 = arith.addf %55, %25 : vector<8x32xf32>
    %cst_51 = arith.constant 0.000000e+00 : f32
    %57 = vector.broadcast %cst_51 : f32 to vector<8x32xf32>
    %58 = arith.maximumf %56, %57 : vector<8x32xf32>
    %cst_52 = arith.constant dense<0.000000e+00> : vector<8x32xf32>
    %59 = tpu.matmul %58, %30, %cst_52 {dimension_numbers = #tpu.dot_dimension_numbers<[1], [0], [0], [1], [0, 0, 1, 1], [], []>} : vector<8x32xf32>, vector<32x32xf32>, vector<8x32xf32> -> vector<8x32xf32>
    %60 = vector.broadcast %31 : vector<1x32xf32> to vector<8x32xf32>
    %61 = arith.addf %59, %60 : vector<8x32xf32>
    %cst_53 = arith.constant 0.000000e+00 : f32
    %62 = vector.broadcast %cst_53 : f32 to vector<8x32xf32>
    %63 = arith.maximumf %61, %62 : vector<8x32xf32>
    %64 = vector.broadcast %32 : vector<1x32xf32> to vector<8x32xf32>
    %65 = arith.mulf %63, %64 : vector<8x32xf32>
    %cst_54 = arith.constant dense<0.000000e+00> : vector<8xf32>
    %66 = vector.multi_reduction <add>, %65, %cst_54 [1] : vector<8x32xf32> to vector<8xf32>
    %67 = vector.shape_cast %66 : vector<8xf32> to vector<8x1xf32>
    %68 = vector.broadcast %33 : vector<1x1xf32> to vector<8x1xf32>
    %69 = arith.addf %67, %68 : vector<8x1xf32>
    %70 = vector.broadcast %c0_i32 : i32 to vector<8x1xi32>
    %71 = arith.cmpi eq, %34, %70 : vector<8x1xi32>
    %cst_55 = arith.constant 0.000000e+00 : f32
    %72 = vector.broadcast %cst_55 : f32 to vector<8x1xf32>
    %73 = arith.select %71, %54, %72 : vector<8x1xi1>, vector<8x1xf32>
    %cst_56 = arith.constant dense<0.000000e+00> : vector<1xf32>
    %74 = vector.multi_reduction <add>, %73, %cst_56 [0] : vector<8x1xf32> to vector<1xf32>
    %75 = vector.shape_cast %74 : vector<1xf32> to vector<1x1xf32>
    %cst_57 = arith.constant dense<0xFF800000> : vector<1xf32>
    %76 = vector.multi_reduction <maximumf>, %54, %cst_57 [0] : vector<8x1xf32> to vector<1xf32>
    %77 = vector.shape_cast %76 : vector<1xf32> to vector<1x1xf32>
    %78 = vector.broadcast %77 : vector<1x1xf32> to vector<8x1xf32>
    %79 = arith.subf %54, %78 : vector<8x1xf32>
    %80 = math.exp %79 : vector<8x1xf32>
    %cst_58 = arith.constant dense<0.000000e+00> : vector<1xf32>
    %81 = vector.multi_reduction <add>, %80, %cst_58 [0] : vector<8x1xf32> to vector<1xf32>
    %82 = vector.shape_cast %81 : vector<1xf32> to vector<1x1xf32>
    %83 = math.log %82 : vector<1x1xf32>
    %84 = arith.addf %77, %83 : vector<1x1xf32>
    %85 = arith.subf %75, %84 : vector<1x1xf32>
    %86 = arith.addf %35, %85 : vector<1x1xf32>
    %87 = vector.broadcast %c0_i32 : i32 to vector<8x1xi32>
    %88 = arith.cmpi eq, %34, %87 : vector<8x1xi32>
    %cst_59 = arith.constant 0.000000e+00 : f32
    %89 = vector.broadcast %cst_59 : f32 to vector<8x1xf32>
    %90 = arith.select %88, %69, %89 : vector<8x1xi1>, vector<8x1xf32>
    %cst_60 = arith.constant dense<0.000000e+00> : vector<1xf32>
    %91 = vector.multi_reduction <add>, %90, %cst_60 [0] : vector<8x1xf32> to vector<1xf32>
    %92 = vector.shape_cast %91 : vector<1xf32> to vector<1x1xf32>
    %cst_61 = arith.constant dense<0xFF800000> : vector<1xf32>
    %93 = vector.multi_reduction <maximumf>, %69, %cst_61 [0] : vector<8x1xf32> to vector<1xf32>
    %94 = vector.shape_cast %93 : vector<1xf32> to vector<1x1xf32>
    %95 = vector.broadcast %94 : vector<1x1xf32> to vector<8x1xf32>
    %96 = arith.subf %69, %95 : vector<8x1xf32>
    %97 = math.exp %96 : vector<8x1xf32>
    %cst_62 = arith.constant dense<0.000000e+00> : vector<1xf32>
    %98 = vector.multi_reduction <add>, %97, %cst_62 [0] : vector<8x1xf32> to vector<1xf32>
    %99 = vector.shape_cast %98 : vector<1xf32> to vector<1x1xf32>
    %100 = math.log %99 : vector<1x1xf32>
    %101 = arith.addf %94, %100 : vector<1x1xf32>
    %102 = arith.subf %92, %101 : vector<1x1xf32>
    %103 = arith.addf %35, %102 : vector<1x1xf32>
    %c1_i32 = arith.constant 1 : i32
    %104 = arith.index_cast %c1_i32 : i32 to index
    %c0_63 = arith.constant 0 : index
    %105 = vector.load %arg19[%104, %c0_63] : memref<8x32xf32, #tpu.memory_space<vmem>>, vector<1x32xf32>
    %106 = arith.index_cast %c1_i32 : i32 to index
    %c0_64 = arith.constant 0 : index
    %107 = vector.load %arg20[%106, %c0_64] : memref<8x32xf32, #tpu.memory_space<vmem>>, vector<1x32xf32>
    %108 = vector.broadcast %105 : vector<1x32xf32> to vector<8x32xf32>
    %109 = arith.addf %108, %20 : vector<8x32xf32>
    %cst_65 = arith.constant 0.000000e+00 : f32
    %110 = vector.broadcast %cst_65 : f32 to vector<8x32xf32>
    %111 = arith.maximumf %109, %110 : vector<8x32xf32>
    %cst_66 = arith.constant dense<0.000000e+00> : vector<8x32xf32>
    %112 = tpu.matmul %111, %26, %cst_66 {dimension_numbers = #tpu.dot_dimension_numbers<[1], [0], [0], [1], [0, 0, 1, 1], [], []>} : vector<8x32xf32>, vector<32x32xf32>, vector<8x32xf32> -> vector<8x32xf32>
    %113 = vector.broadcast %27 : vector<1x32xf32> to vector<8x32xf32>
    %114 = arith.addf %112, %113 : vector<8x32xf32>
    %cst_67 = arith.constant 0.000000e+00 : f32
    %115 = vector.broadcast %cst_67 : f32 to vector<8x32xf32>
    %116 = arith.maximumf %114, %115 : vector<8x32xf32>
    %117 = vector.broadcast %28 : vector<1x32xf32> to vector<8x32xf32>
    %118 = arith.mulf %116, %117 : vector<8x32xf32>
    %cst_68 = arith.constant dense<0.000000e+00> : vector<8xf32>
    %119 = vector.multi_reduction <add>, %118, %cst_68 [1] : vector<8x32xf32> to vector<8xf32>
    %120 = vector.shape_cast %119 : vector<8xf32> to vector<8x1xf32>
    %121 = vector.broadcast %29 : vector<1x1xf32> to vector<8x1xf32>
    %122 = arith.addf %120, %121 : vector<8x1xf32>
    %123 = vector.broadcast %107 : vector<1x32xf32> to vector<8x32xf32>
    %124 = arith.addf %123, %25 : vector<8x32xf32>
    %cst_69 = arith.constant 0.000000e+00 : f32
    %125 = vector.broadcast %cst_69 : f32 to vector<8x32xf32>
    %126 = arith.maximumf %124, %125 : vector<8x32xf32>
    %cst_70 = arith.constant dense<0.000000e+00> : vector<8x32xf32>
    %127 = tpu.matmul %126, %30, %cst_70 {dimension_numbers = #tpu.dot_dimension_numbers<[1], [0], [0], [1], [0, 0, 1, 1], [], []>} : vector<8x32xf32>, vector<32x32xf32>, vector<8x32xf32> -> vector<8x32xf32>
    %128 = vector.broadcast %31 : vector<1x32xf32> to vector<8x32xf32>
    %129 = arith.addf %127, %128 : vector<8x32xf32>
    %cst_71 = arith.constant 0.000000e+00 : f32
    %130 = vector.broadcast %cst_71 : f32 to vector<8x32xf32>
    %131 = arith.maximumf %129, %130 : vector<8x32xf32>
    %132 = vector.broadcast %32 : vector<1x32xf32> to vector<8x32xf32>
    %133 = arith.mulf %131, %132 : vector<8x32xf32>
    %cst_72 = arith.constant dense<0.000000e+00> : vector<8xf32>
    %134 = vector.multi_reduction <add>, %133, %cst_72 [1] : vector<8x32xf32> to vector<8xf32>
    %135 = vector.shape_cast %134 : vector<8xf32> to vector<8x1xf32>
    %136 = vector.broadcast %33 : vector<1x1xf32> to vector<8x1xf32>
    %137 = arith.addf %135, %136 : vector<8x1xf32>
    %138 = vector.broadcast %c1_i32 : i32 to vector<8x1xi32>
    %139 = arith.cmpi eq, %34, %138 : vector<8x1xi32>
    %cst_73 = arith.constant 0.000000e+00 : f32
    %140 = vector.broadcast %cst_73 : f32 to vector<8x1xf32>
    %141 = arith.select %139, %122, %140 : vector<8x1xi1>, vector<8x1xf32>
    %cst_74 = arith.constant dense<0.000000e+00> : vector<1xf32>
    %142 = vector.multi_reduction <add>, %141, %cst_74 [0] : vector<8x1xf32> to vector<1xf32>
    %143 = vector.shape_cast %142 : vector<1xf32> to vector<1x1xf32>
    %cst_75 = arith.constant dense<0xFF800000> : vector<1xf32>
    %144 = vector.multi_reduction <maximumf>, %122, %cst_75 [0] : vector<8x1xf32> to vector<1xf32>
    %145 = vector.shape_cast %144 : vector<1xf32> to vector<1x1xf32>
    %146 = vector.broadcast %145 : vector<1x1xf32> to vector<8x1xf32>
    %147 = arith.subf %122, %146 : vector<8x1xf32>
    %148 = math.exp %147 : vector<8x1xf32>
    %cst_76 = arith.constant dense<0.000000e+00> : vector<1xf32>
    %149 = vector.multi_reduction <add>, %148, %cst_76 [0] : vector<8x1xf32> to vector<1xf32>
    %150 = vector.shape_cast %149 : vector<1xf32> to vector<1x1xf32>
    %151 = math.log %150 : vector<1x1xf32>
    %152 = arith.addf %145, %151 : vector<1x1xf32>
    %153 = arith.subf %143, %152 : vector<1x1xf32>
    %154 = arith.addf %86, %153 : vector<1x1xf32>
    %155 = vector.broadcast %c1_i32 : i32 to vector<8x1xi32>
    %156 = arith.cmpi eq, %34, %155 : vector<8x1xi32>
    %cst_77 = arith.constant 0.000000e+00 : f32
    %157 = vector.broadcast %cst_77 : f32 to vector<8x1xf32>
    %158 = arith.select %156, %137, %157 : vector<8x1xi1>, vector<8x1xf32>
    %cst_78 = arith.constant dense<0.000000e+00> : vector<1xf32>
    %159 = vector.multi_reduction <add>, %158, %cst_78 [0] : vector<8x1xf32> to vector<1xf32>
    %160 = vector.shape_cast %159 : vector<1xf32> to vector<1x1xf32>
    %cst_79 = arith.constant dense<0xFF800000> : vector<1xf32>
    %161 = vector.multi_reduction <maximumf>, %137, %cst_79 [0] : vector<8x1xf32> to vector<1xf32>
    %162 = vector.shape_cast %161 : vector<1xf32> to vector<1x1xf32>
    %163 = vector.broadcast %162 : vector<1x1xf32> to vector<8x1xf32>
    %164 = arith.subf %137, %163 : vector<8x1xf32>
    %165 = math.exp %164 : vector<8x1xf32>
    %cst_80 = arith.constant dense<0.000000e+00> : vector<1xf32>
    %166 = vector.multi_reduction <add>, %165, %cst_80 [0] : vector<8x1xf32> to vector<1xf32>
    %167 = vector.shape_cast %166 : vector<1xf32> to vector<1x1xf32>
    %168 = math.log %167 : vector<1x1xf32>
    %169 = arith.addf %162, %168 : vector<1x1xf32>
    %170 = arith.subf %160, %169 : vector<1x1xf32>
    %171 = arith.addf %103, %170 : vector<1x1xf32>
    %c2_i32 = arith.constant 2 : i32
    %172 = arith.index_cast %c2_i32 : i32 to index
    %c0_81 = arith.constant 0 : index
    %173 = vector.load %arg19[%172, %c0_81] : memref<8x32xf32, #tpu.memory_space<vmem>>, vector<1x32xf32>
    %174 = arith.index_cast %c2_i32 : i32 to index
    %c0_82 = arith.constant 0 : index
    %175 = vector.load %arg20[%174, %c0_82] : memref<8x32xf32, #tpu.memory_space<vmem>>, vector<1x32xf32>
    %176 = vector.broadcast %173 : vector<1x32xf32> to vector<8x32xf32>
    %177 = arith.addf %176, %20 : vector<8x32xf32>
    %cst_83 = arith.constant 0.000000e+00 : f32
    %178 = vector.broadcast %cst_83 : f32 to vector<8x32xf32>
    %179 = arith.maximumf %177, %178 : vector<8x32xf32>
    %cst_84 = arith.constant dense<0.000000e+00> : vector<8x32xf32>
    %180 = tpu.matmul %179, %26, %cst_84 {dimension_numbers = #tpu.dot_dimension_numbers<[1], [0], [0], [1], [0, 0, 1, 1], [], []>} : vector<8x32xf32>, vector<32x32xf32>, vector<8x32xf32> -> vector<8x32xf32>
    %181 = vector.broadcast %27 : vector<1x32xf32> to vector<8x32xf32>
    %182 = arith.addf %180, %181 : vector<8x32xf32>
    %cst_85 = arith.constant 0.000000e+00 : f32
    %183 = vector.broadcast %cst_85 : f32 to vector<8x32xf32>
    %184 = arith.maximumf %182, %183 : vector<8x32xf32>
    %185 = vector.broadcast %28 : vector<1x32xf32> to vector<8x32xf32>
    %186 = arith.mulf %184, %185 : vector<8x32xf32>
    %cst_86 = arith.constant dense<0.000000e+00> : vector<8xf32>
    %187 = vector.multi_reduction <add>, %186, %cst_86 [1] : vector<8x32xf32> to vector<8xf32>
    %188 = vector.shape_cast %187 : vector<8xf32> to vector<8x1xf32>
    %189 = vector.broadcast %29 : vector<1x1xf32> to vector<8x1xf32>
    %190 = arith.addf %188, %189 : vector<8x1xf32>
    %191 = vector.broadcast %175 : vector<1x32xf32> to vector<8x32xf32>
    %192 = arith.addf %191, %25 : vector<8x32xf32>
    %cst_87 = arith.constant 0.000000e+00 : f32
    %193 = vector.broadcast %cst_87 : f32 to vector<8x32xf32>
    %194 = arith.maximumf %192, %193 : vector<8x32xf32>
    %cst_88 = arith.constant dense<0.000000e+00> : vector<8x32xf32>
    %195 = tpu.matmul %194, %30, %cst_88 {dimension_numbers = #tpu.dot_dimension_numbers<[1], [0], [0], [1], [0, 0, 1, 1], [], []>} : vector<8x32xf32>, vector<32x32xf32>, vector<8x32xf32> -> vector<8x32xf32>
    %196 = vector.broadcast %31 : vector<1x32xf32> to vector<8x32xf32>
    %197 = arith.addf %195, %196 : vector<8x32xf32>
    %cst_89 = arith.constant 0.000000e+00 : f32
    %198 = vector.broadcast %cst_89 : f32 to vector<8x32xf32>
    %199 = arith.maximumf %197, %198 : vector<8x32xf32>
    %200 = vector.broadcast %32 : vector<1x32xf32> to vector<8x32xf32>
    %201 = arith.mulf %199, %200 : vector<8x32xf32>
    %cst_90 = arith.constant dense<0.000000e+00> : vector<8xf32>
    %202 = vector.multi_reduction <add>, %201, %cst_90 [1] : vector<8x32xf32> to vector<8xf32>
    %203 = vector.shape_cast %202 : vector<8xf32> to vector<8x1xf32>
    %204 = vector.broadcast %33 : vector<1x1xf32> to vector<8x1xf32>
    %205 = arith.addf %203, %204 : vector<8x1xf32>
    %206 = vector.broadcast %c2_i32 : i32 to vector<8x1xi32>
    %207 = arith.cmpi eq, %34, %206 : vector<8x1xi32>
    %cst_91 = arith.constant 0.000000e+00 : f32
    %208 = vector.broadcast %cst_91 : f32 to vector<8x1xf32>
    %209 = arith.select %207, %190, %208 : vector<8x1xi1>, vector<8x1xf32>
    %cst_92 = arith.constant dense<0.000000e+00> : vector<1xf32>
    %210 = vector.multi_reduction <add>, %209, %cst_92 [0] : vector<8x1xf32> to vector<1xf32>
    %211 = vector.shape_cast %210 : vector<1xf32> to vector<1x1xf32>
    %cst_93 = arith.constant dense<0xFF800000> : vector<1xf32>
    %212 = vector.multi_reduction <maximumf>, %190, %cst_93 [0] : vector<8x1xf32> to vector<1xf32>
    %213 = vector.shape_cast %212 : vector<1xf32> to vector<1x1xf32>
    %214 = vector.broadcast %213 : vector<1x1xf32> to vector<8x1xf32>
    %215 = arith.subf %190, %214 : vector<8x1xf32>
    %216 = math.exp %215 : vector<8x1xf32>
    %cst_94 = arith.constant dense<0.000000e+00> : vector<1xf32>
    %217 = vector.multi_reduction <add>, %216, %cst_94 [0] : vector<8x1xf32> to vector<1xf32>
    %218 = vector.shape_cast %217 : vector<1xf32> to vector<1x1xf32>
    %219 = math.log %218 : vector<1x1xf32>
    %220 = arith.addf %213, %219 : vector<1x1xf32>
    %221 = arith.subf %211, %220 : vector<1x1xf32>
    %222 = arith.addf %154, %221 : vector<1x1xf32>
    %223 = vector.broadcast %c2_i32 : i32 to vector<8x1xi32>
    %224 = arith.cmpi eq, %34, %223 : vector<8x1xi32>
    %cst_95 = arith.constant 0.000000e+00 : f32
    %225 = vector.broadcast %cst_95 : f32 to vector<8x1xf32>
    %226 = arith.select %224, %205, %225 : vector<8x1xi1>, vector<8x1xf32>
    %cst_96 = arith.constant dense<0.000000e+00> : vector<1xf32>
    %227 = vector.multi_reduction <add>, %226, %cst_96 [0] : vector<8x1xf32> to vector<1xf32>
    %228 = vector.shape_cast %227 : vector<1xf32> to vector<1x1xf32>
    %cst_97 = arith.constant dense<0xFF800000> : vector<1xf32>
    %229 = vector.multi_reduction <maximumf>, %205, %cst_97 [0] : vector<8x1xf32> to vector<1xf32>
    %230 = vector.shape_cast %229 : vector<1xf32> to vector<1x1xf32>
    %231 = vector.broadcast %230 : vector<1x1xf32> to vector<8x1xf32>
    %232 = arith.subf %205, %231 : vector<8x1xf32>
    %233 = math.exp %232 : vector<8x1xf32>
    %cst_98 = arith.constant dense<0.000000e+00> : vector<1xf32>
    %234 = vector.multi_reduction <add>, %233, %cst_98 [0] : vector<8x1xf32> to vector<1xf32>
    %235 = vector.shape_cast %234 : vector<1xf32> to vector<1x1xf32>
    %236 = math.log %235 : vector<1x1xf32>
    %237 = arith.addf %230, %236 : vector<1x1xf32>
    %238 = arith.subf %228, %237 : vector<1x1xf32>
    %239 = arith.addf %171, %238 : vector<1x1xf32>
    %c3_i32 = arith.constant 3 : i32
    %240 = arith.index_cast %c3_i32 : i32 to index
    %c0_99 = arith.constant 0 : index
    %241 = vector.load %arg19[%240, %c0_99] : memref<8x32xf32, #tpu.memory_space<vmem>>, vector<1x32xf32>
    %242 = arith.index_cast %c3_i32 : i32 to index
    %c0_100 = arith.constant 0 : index
    %243 = vector.load %arg20[%242, %c0_100] : memref<8x32xf32, #tpu.memory_space<vmem>>, vector<1x32xf32>
    %244 = vector.broadcast %241 : vector<1x32xf32> to vector<8x32xf32>
    %245 = arith.addf %244, %20 : vector<8x32xf32>
    %cst_101 = arith.constant 0.000000e+00 : f32
    %246 = vector.broadcast %cst_101 : f32 to vector<8x32xf32>
    %247 = arith.maximumf %245, %246 : vector<8x32xf32>
    %cst_102 = arith.constant dense<0.000000e+00> : vector<8x32xf32>
    %248 = tpu.matmul %247, %26, %cst_102 {dimension_numbers = #tpu.dot_dimension_numbers<[1], [0], [0], [1], [0, 0, 1, 1], [], []>} : vector<8x32xf32>, vector<32x32xf32>, vector<8x32xf32> -> vector<8x32xf32>
    %249 = vector.broadcast %27 : vector<1x32xf32> to vector<8x32xf32>
    %250 = arith.addf %248, %249 : vector<8x32xf32>
    %cst_103 = arith.constant 0.000000e+00 : f32
    %251 = vector.broadcast %cst_103 : f32 to vector<8x32xf32>
    %252 = arith.maximumf %250, %251 : vector<8x32xf32>
    %253 = vector.broadcast %28 : vector<1x32xf32> to vector<8x32xf32>
    %254 = arith.mulf %252, %253 : vector<8x32xf32>
    %cst_104 = arith.constant dense<0.000000e+00> : vector<8xf32>
    %255 = vector.multi_reduction <add>, %254, %cst_104 [1] : vector<8x32xf32> to vector<8xf32>
    %256 = vector.shape_cast %255 : vector<8xf32> to vector<8x1xf32>
    %257 = vector.broadcast %29 : vector<1x1xf32> to vector<8x1xf32>
    %258 = arith.addf %256, %257 : vector<8x1xf32>
    %259 = vector.broadcast %243 : vector<1x32xf32> to vector<8x32xf32>
    %260 = arith.addf %259, %25 : vector<8x32xf32>
    %cst_105 = arith.constant 0.000000e+00 : f32
    %261 = vector.broadcast %cst_105 : f32 to vector<8x32xf32>
    %262 = arith.maximumf %260, %261 : vector<8x32xf32>
    %cst_106 = arith.constant dense<0.000000e+00> : vector<8x32xf32>
    %263 = tpu.matmul %262, %30, %cst_106 {dimension_numbers = #tpu.dot_dimension_numbers<[1], [0], [0], [1], [0, 0, 1, 1], [], []>} : vector<8x32xf32>, vector<32x32xf32>, vector<8x32xf32> -> vector<8x32xf32>
    %264 = vector.broadcast %31 : vector<1x32xf32> to vector<8x32xf32>
    %265 = arith.addf %263, %264 : vector<8x32xf32>
    %cst_107 = arith.constant 0.000000e+00 : f32
    %266 = vector.broadcast %cst_107 : f32 to vector<8x32xf32>
    %267 = arith.maximumf %265, %266 : vector<8x32xf32>
    %268 = vector.broadcast %32 : vector<1x32xf32> to vector<8x32xf32>
    %269 = arith.mulf %267, %268 : vector<8x32xf32>
    %cst_108 = arith.constant dense<0.000000e+00> : vector<8xf32>
    %270 = vector.multi_reduction <add>, %269, %cst_108 [1] : vector<8x32xf32> to vector<8xf32>
    %271 = vector.shape_cast %270 : vector<8xf32> to vector<8x1xf32>
    %272 = vector.broadcast %33 : vector<1x1xf32> to vector<8x1xf32>
    %273 = arith.addf %271, %272 : vector<8x1xf32>
    %274 = vector.broadcast %c3_i32 : i32 to vector<8x1xi32>
    %275 = arith.cmpi eq, %34, %274 : vector<8x1xi32>
    %cst_109 = arith.constant 0.000000e+00 : f32
    %276 = vector.broadcast %cst_109 : f32 to vector<8x1xf32>
    %277 = arith.select %275, %258, %276 : vector<8x1xi1>, vector<8x1xf32>
    %cst_110 = arith.constant dense<0.000000e+00> : vector<1xf32>
    %278 = vector.multi_reduction <add>, %277, %cst_110 [0] : vector<8x1xf32> to vector<1xf32>
    %279 = vector.shape_cast %278 : vector<1xf32> to vector<1x1xf32>
    %cst_111 = arith.constant dense<0xFF800000> : vector<1xf32>
    %280 = vector.multi_reduction <maximumf>, %258, %cst_111 [0] : vector<8x1xf32> to vector<1xf32>
    %281 = vector.shape_cast %280 : vector<1xf32> to vector<1x1xf32>
    %282 = vector.broadcast %281 : vector<1x1xf32> to vector<8x1xf32>
    %283 = arith.subf %258, %282 : vector<8x1xf32>
    %284 = math.exp %283 : vector<8x1xf32>
    %cst_112 = arith.constant dense<0.000000e+00> : vector<1xf32>
    %285 = vector.multi_reduction <add>, %284, %cst_112 [0] : vector<8x1xf32> to vector<1xf32>
    %286 = vector.shape_cast %285 : vector<1xf32> to vector<1x1xf32>
    %287 = math.log %286 : vector<1x1xf32>
    %288 = arith.addf %281, %287 : vector<1x1xf32>
    %289 = arith.subf %279, %288 : vector<1x1xf32>
    %290 = arith.addf %222, %289 : vector<1x1xf32>
    %291 = vector.broadcast %c3_i32 : i32 to vector<8x1xi32>
    %292 = arith.cmpi eq, %34, %291 : vector<8x1xi32>
    %cst_113 = arith.constant 0.000000e+00 : f32
    %293 = vector.broadcast %cst_113 : f32 to vector<8x1xf32>
    %294 = arith.select %292, %273, %293 : vector<8x1xi1>, vector<8x1xf32>
    %cst_114 = arith.constant dense<0.000000e+00> : vector<1xf32>
    %295 = vector.multi_reduction <add>, %294, %cst_114 [0] : vector<8x1xf32> to vector<1xf32>
    %296 = vector.shape_cast %295 : vector<1xf32> to vector<1x1xf32>
    %cst_115 = arith.constant dense<0xFF800000> : vector<1xf32>
    %297 = vector.multi_reduction <maximumf>, %273, %cst_115 [0] : vector<8x1xf32> to vector<1xf32>
    %298 = vector.shape_cast %297 : vector<1xf32> to vector<1x1xf32>
    %299 = vector.broadcast %298 : vector<1x1xf32> to vector<8x1xf32>
    %300 = arith.subf %273, %299 : vector<8x1xf32>
    %301 = math.exp %300 : vector<8x1xf32>
    %cst_116 = arith.constant dense<0.000000e+00> : vector<1xf32>
    %302 = vector.multi_reduction <add>, %301, %cst_116 [0] : vector<8x1xf32> to vector<1xf32>
    %303 = vector.shape_cast %302 : vector<1xf32> to vector<1x1xf32>
    %304 = math.log %303 : vector<1x1xf32>
    %305 = arith.addf %298, %304 : vector<1x1xf32>
    %306 = arith.subf %296, %305 : vector<1x1xf32>
    %307 = arith.addf %239, %306 : vector<1x1xf32>
    %c4_i32 = arith.constant 4 : i32
    %308 = arith.index_cast %c4_i32 : i32 to index
    %c0_117 = arith.constant 0 : index
    %309 = vector.load %arg19[%308, %c0_117] : memref<8x32xf32, #tpu.memory_space<vmem>>, vector<1x32xf32>
    %310 = arith.index_cast %c4_i32 : i32 to index
    %c0_118 = arith.constant 0 : index
    %311 = vector.load %arg20[%310, %c0_118] : memref<8x32xf32, #tpu.memory_space<vmem>>, vector<1x32xf32>
    %312 = vector.broadcast %309 : vector<1x32xf32> to vector<8x32xf32>
    %313 = arith.addf %312, %20 : vector<8x32xf32>
    %cst_119 = arith.constant 0.000000e+00 : f32
    %314 = vector.broadcast %cst_119 : f32 to vector<8x32xf32>
    %315 = arith.maximumf %313, %314 : vector<8x32xf32>
    %cst_120 = arith.constant dense<0.000000e+00> : vector<8x32xf32>
    %316 = tpu.matmul %315, %26, %cst_120 {dimension_numbers = #tpu.dot_dimension_numbers<[1], [0], [0], [1], [0, 0, 1, 1], [], []>} : vector<8x32xf32>, vector<32x32xf32>, vector<8x32xf32> -> vector<8x32xf32>
    %317 = vector.broadcast %27 : vector<1x32xf32> to vector<8x32xf32>
    %318 = arith.addf %316, %317 : vector<8x32xf32>
    %cst_121 = arith.constant 0.000000e+00 : f32
    %319 = vector.broadcast %cst_121 : f32 to vector<8x32xf32>
    %320 = arith.maximumf %318, %319 : vector<8x32xf32>
    %321 = vector.broadcast %28 : vector<1x32xf32> to vector<8x32xf32>
    %322 = arith.mulf %320, %321 : vector<8x32xf32>
    %cst_122 = arith.constant dense<0.000000e+00> : vector<8xf32>
    %323 = vector.multi_reduction <add>, %322, %cst_122 [1] : vector<8x32xf32> to vector<8xf32>
    %324 = vector.shape_cast %323 : vector<8xf32> to vector<8x1xf32>
    %325 = vector.broadcast %29 : vector<1x1xf32> to vector<8x1xf32>
    %326 = arith.addf %324, %325 : vector<8x1xf32>
    %327 = vector.broadcast %311 : vector<1x32xf32> to vector<8x32xf32>
    %328 = arith.addf %327, %25 : vector<8x32xf32>
    %cst_123 = arith.constant 0.000000e+00 : f32
    %329 = vector.broadcast %cst_123 : f32 to vector<8x32xf32>
    %330 = arith.maximumf %328, %329 : vector<8x32xf32>
    %cst_124 = arith.constant dense<0.000000e+00> : vector<8x32xf32>
    %331 = tpu.matmul %330, %30, %cst_124 {dimension_numbers = #tpu.dot_dimension_numbers<[1], [0], [0], [1], [0, 0, 1, 1], [], []>} : vector<8x32xf32>, vector<32x32xf32>, vector<8x32xf32> -> vector<8x32xf32>
    %332 = vector.broadcast %31 : vector<1x32xf32> to vector<8x32xf32>
    %333 = arith.addf %331, %332 : vector<8x32xf32>
    %cst_125 = arith.constant 0.000000e+00 : f32
    %334 = vector.broadcast %cst_125 : f32 to vector<8x32xf32>
    %335 = arith.maximumf %333, %334 : vector<8x32xf32>
    %336 = vector.broadcast %32 : vector<1x32xf32> to vector<8x32xf32>
    %337 = arith.mulf %335, %336 : vector<8x32xf32>
    %cst_126 = arith.constant dense<0.000000e+00> : vector<8xf32>
    %338 = vector.multi_reduction <add>, %337, %cst_126 [1] : vector<8x32xf32> to vector<8xf32>
    %339 = vector.shape_cast %338 : vector<8xf32> to vector<8x1xf32>
    %340 = vector.broadcast %33 : vector<1x1xf32> to vector<8x1xf32>
    %341 = arith.addf %339, %340 : vector<8x1xf32>
    %342 = vector.broadcast %c4_i32 : i32 to vector<8x1xi32>
    %343 = arith.cmpi eq, %34, %342 : vector<8x1xi32>
    %cst_127 = arith.constant 0.000000e+00 : f32
    %344 = vector.broadcast %cst_127 : f32 to vector<8x1xf32>
    %345 = arith.select %343, %326, %344 : vector<8x1xi1>, vector<8x1xf32>
    %cst_128 = arith.constant dense<0.000000e+00> : vector<1xf32>
    %346 = vector.multi_reduction <add>, %345, %cst_128 [0] : vector<8x1xf32> to vector<1xf32>
    %347 = vector.shape_cast %346 : vector<1xf32> to vector<1x1xf32>
    %cst_129 = arith.constant dense<0xFF800000> : vector<1xf32>
    %348 = vector.multi_reduction <maximumf>, %326, %cst_129 [0] : vector<8x1xf32> to vector<1xf32>
    %349 = vector.shape_cast %348 : vector<1xf32> to vector<1x1xf32>
    %350 = vector.broadcast %349 : vector<1x1xf32> to vector<8x1xf32>
    %351 = arith.subf %326, %350 : vector<8x1xf32>
    %352 = math.exp %351 : vector<8x1xf32>
    %cst_130 = arith.constant dense<0.000000e+00> : vector<1xf32>
    %353 = vector.multi_reduction <add>, %352, %cst_130 [0] : vector<8x1xf32> to vector<1xf32>
    %354 = vector.shape_cast %353 : vector<1xf32> to vector<1x1xf32>
    %355 = math.log %354 : vector<1x1xf32>
    %356 = arith.addf %349, %355 : vector<1x1xf32>
    %357 = arith.subf %347, %356 : vector<1x1xf32>
    %358 = arith.addf %290, %357 : vector<1x1xf32>
    %359 = vector.broadcast %c4_i32 : i32 to vector<8x1xi32>
    %360 = arith.cmpi eq, %34, %359 : vector<8x1xi32>
    %cst_131 = arith.constant 0.000000e+00 : f32
    %361 = vector.broadcast %cst_131 : f32 to vector<8x1xf32>
    %362 = arith.select %360, %341, %361 : vector<8x1xi1>, vector<8x1xf32>
    %cst_132 = arith.constant dense<0.000000e+00> : vector<1xf32>
    %363 = vector.multi_reduction <add>, %362, %cst_132 [0] : vector<8x1xf32> to vector<1xf32>
    %364 = vector.shape_cast %363 : vector<1xf32> to vector<1x1xf32>
    %cst_133 = arith.constant dense<0xFF800000> : vector<1xf32>
    %365 = vector.multi_reduction <maximumf>, %341, %cst_133 [0] : vector<8x1xf32> to vector<1xf32>
    %366 = vector.shape_cast %365 : vector<1xf32> to vector<1x1xf32>
    %367 = vector.broadcast %366 : vector<1x1xf32> to vector<8x1xf32>
    %368 = arith.subf %341, %367 : vector<8x1xf32>
    %369 = math.exp %368 : vector<8x1xf32>
    %cst_134 = arith.constant dense<0.000000e+00> : vector<1xf32>
    %370 = vector.multi_reduction <add>, %369, %cst_134 [0] : vector<8x1xf32> to vector<1xf32>
    %371 = vector.shape_cast %370 : vector<1xf32> to vector<1x1xf32>
    %372 = math.log %371 : vector<1x1xf32>
    %373 = arith.addf %366, %372 : vector<1x1xf32>
    %374 = arith.subf %364, %373 : vector<1x1xf32>
    %375 = arith.addf %307, %374 : vector<1x1xf32>
    %c5_i32 = arith.constant 5 : i32
    %376 = arith.index_cast %c5_i32 : i32 to index
    %c0_135 = arith.constant 0 : index
    %377 = vector.load %arg19[%376, %c0_135] : memref<8x32xf32, #tpu.memory_space<vmem>>, vector<1x32xf32>
    %378 = arith.index_cast %c5_i32 : i32 to index
    %c0_136 = arith.constant 0 : index
    %379 = vector.load %arg20[%378, %c0_136] : memref<8x32xf32, #tpu.memory_space<vmem>>, vector<1x32xf32>
    %380 = vector.broadcast %377 : vector<1x32xf32> to vector<8x32xf32>
    %381 = arith.addf %380, %20 : vector<8x32xf32>
    %cst_137 = arith.constant 0.000000e+00 : f32
    %382 = vector.broadcast %cst_137 : f32 to vector<8x32xf32>
    %383 = arith.maximumf %381, %382 : vector<8x32xf32>
    %cst_138 = arith.constant dense<0.000000e+00> : vector<8x32xf32>
    %384 = tpu.matmul %383, %26, %cst_138 {dimension_numbers = #tpu.dot_dimension_numbers<[1], [0], [0], [1], [0, 0, 1, 1], [], []>} : vector<8x32xf32>, vector<32x32xf32>, vector<8x32xf32> -> vector<8x32xf32>
    %385 = vector.broadcast %27 : vector<1x32xf32> to vector<8x32xf32>
    %386 = arith.addf %384, %385 : vector<8x32xf32>
    %cst_139 = arith.constant 0.000000e+00 : f32
    %387 = vector.broadcast %cst_139 : f32 to vector<8x32xf32>
    %388 = arith.maximumf %386, %387 : vector<8x32xf32>
    %389 = vector.broadcast %28 : vector<1x32xf32> to vector<8x32xf32>
    %390 = arith.mulf %388, %389 : vector<8x32xf32>
    %cst_140 = arith.constant dense<0.000000e+00> : vector<8xf32>
    %391 = vector.multi_reduction <add>, %390, %cst_140 [1] : vector<8x32xf32> to vector<8xf32>
    %392 = vector.shape_cast %391 : vector<8xf32> to vector<8x1xf32>
    %393 = vector.broadcast %29 : vector<1x1xf32> to vector<8x1xf32>
    %394 = arith.addf %392, %393 : vector<8x1xf32>
    %395 = vector.broadcast %379 : vector<1x32xf32> to vector<8x32xf32>
    %396 = arith.addf %395, %25 : vector<8x32xf32>
    %cst_141 = arith.constant 0.000000e+00 : f32
    %397 = vector.broadcast %cst_141 : f32 to vector<8x32xf32>
    %398 = arith.maximumf %396, %397 : vector<8x32xf32>
    %cst_142 = arith.constant dense<0.000000e+00> : vector<8x32xf32>
    %399 = tpu.matmul %398, %30, %cst_142 {dimension_numbers = #tpu.dot_dimension_numbers<[1], [0], [0], [1], [0, 0, 1, 1], [], []>} : vector<8x32xf32>, vector<32x32xf32>, vector<8x32xf32> -> vector<8x32xf32>
    %400 = vector.broadcast %31 : vector<1x32xf32> to vector<8x32xf32>
    %401 = arith.addf %399, %400 : vector<8x32xf32>
    %cst_143 = arith.constant 0.000000e+00 : f32
    %402 = vector.broadcast %cst_143 : f32 to vector<8x32xf32>
    %403 = arith.maximumf %401, %402 : vector<8x32xf32>
    %404 = vector.broadcast %32 : vector<1x32xf32> to vector<8x32xf32>
    %405 = arith.mulf %403, %404 : vector<8x32xf32>
    %cst_144 = arith.constant dense<0.000000e+00> : vector<8xf32>
    %406 = vector.multi_reduction <add>, %405, %cst_144 [1] : vector<8x32xf32> to vector<8xf32>
    %407 = vector.shape_cast %406 : vector<8xf32> to vector<8x1xf32>
    %408 = vector.broadcast %33 : vector<1x1xf32> to vector<8x1xf32>
    %409 = arith.addf %407, %408 : vector<8x1xf32>
    %410 = vector.broadcast %c5_i32 : i32 to vector<8x1xi32>
    %411 = arith.cmpi eq, %34, %410 : vector<8x1xi32>
    %cst_145 = arith.constant 0.000000e+00 : f32
    %412 = vector.broadcast %cst_145 : f32 to vector<8x1xf32>
    %413 = arith.select %411, %394, %412 : vector<8x1xi1>, vector<8x1xf32>
    %cst_146 = arith.constant dense<0.000000e+00> : vector<1xf32>
    %414 = vector.multi_reduction <add>, %413, %cst_146 [0] : vector<8x1xf32> to vector<1xf32>
    %415 = vector.shape_cast %414 : vector<1xf32> to vector<1x1xf32>
    %cst_147 = arith.constant dense<0xFF800000> : vector<1xf32>
    %416 = vector.multi_reduction <maximumf>, %394, %cst_147 [0] : vector<8x1xf32> to vector<1xf32>
    %417 = vector.shape_cast %416 : vector<1xf32> to vector<1x1xf32>
    %418 = vector.broadcast %417 : vector<1x1xf32> to vector<8x1xf32>
    %419 = arith.subf %394, %418 : vector<8x1xf32>
    %420 = math.exp %419 : vector<8x1xf32>
    %cst_148 = arith.constant dense<0.000000e+00> : vector<1xf32>
    %421 = vector.multi_reduction <add>, %420, %cst_148 [0] : vector<8x1xf32> to vector<1xf32>
    %422 = vector.shape_cast %421 : vector<1xf32> to vector<1x1xf32>
    %423 = math.log %422 : vector<1x1xf32>
    %424 = arith.addf %417, %423 : vector<1x1xf32>
    %425 = arith.subf %415, %424 : vector<1x1xf32>
    %426 = arith.addf %358, %425 : vector<1x1xf32>
    %427 = vector.broadcast %c5_i32 : i32 to vector<8x1xi32>
    %428 = arith.cmpi eq, %34, %427 : vector<8x1xi32>
    %cst_149 = arith.constant 0.000000e+00 : f32
    %429 = vector.broadcast %cst_149 : f32 to vector<8x1xf32>
    %430 = arith.select %428, %409, %429 : vector<8x1xi1>, vector<8x1xf32>
    %cst_150 = arith.constant dense<0.000000e+00> : vector<1xf32>
    %431 = vector.multi_reduction <add>, %430, %cst_150 [0] : vector<8x1xf32> to vector<1xf32>
    %432 = vector.shape_cast %431 : vector<1xf32> to vector<1x1xf32>
    %cst_151 = arith.constant dense<0xFF800000> : vector<1xf32>
    %433 = vector.multi_reduction <maximumf>, %409, %cst_151 [0] : vector<8x1xf32> to vector<1xf32>
    %434 = vector.shape_cast %433 : vector<1xf32> to vector<1x1xf32>
    %435 = vector.broadcast %434 : vector<1x1xf32> to vector<8x1xf32>
    %436 = arith.subf %409, %435 : vector<8x1xf32>
    %437 = math.exp %436 : vector<8x1xf32>
    %cst_152 = arith.constant dense<0.000000e+00> : vector<1xf32>
    %438 = vector.multi_reduction <add>, %437, %cst_152 [0] : vector<8x1xf32> to vector<1xf32>
    %439 = vector.shape_cast %438 : vector<1xf32> to vector<1x1xf32>
    %440 = math.log %439 : vector<1x1xf32>
    %441 = arith.addf %434, %440 : vector<1x1xf32>
    %442 = arith.subf %432, %441 : vector<1x1xf32>
    %443 = arith.addf %375, %442 : vector<1x1xf32>
    %c6_i32 = arith.constant 6 : i32
    %444 = arith.index_cast %c6_i32 : i32 to index
    %c0_153 = arith.constant 0 : index
    %445 = vector.load %arg19[%444, %c0_153] : memref<8x32xf32, #tpu.memory_space<vmem>>, vector<1x32xf32>
    %446 = arith.index_cast %c6_i32 : i32 to index
    %c0_154 = arith.constant 0 : index
    %447 = vector.load %arg20[%446, %c0_154] : memref<8x32xf32, #tpu.memory_space<vmem>>, vector<1x32xf32>
    %448 = vector.broadcast %445 : vector<1x32xf32> to vector<8x32xf32>
    %449 = arith.addf %448, %20 : vector<8x32xf32>
    %cst_155 = arith.constant 0.000000e+00 : f32
    %450 = vector.broadcast %cst_155 : f32 to vector<8x32xf32>
    %451 = arith.maximumf %449, %450 : vector<8x32xf32>
    %cst_156 = arith.constant dense<0.000000e+00> : vector<8x32xf32>
    %452 = tpu.matmul %451, %26, %cst_156 {dimension_numbers = #tpu.dot_dimension_numbers<[1], [0], [0], [1], [0, 0, 1, 1], [], []>} : vector<8x32xf32>, vector<32x32xf32>, vector<8x32xf32> -> vector<8x32xf32>
    %453 = vector.broadcast %27 : vector<1x32xf32> to vector<8x32xf32>
    %454 = arith.addf %452, %453 : vector<8x32xf32>
    %cst_157 = arith.constant 0.000000e+00 : f32
    %455 = vector.broadcast %cst_157 : f32 to vector<8x32xf32>
    %456 = arith.maximumf %454, %455 : vector<8x32xf32>
    %457 = vector.broadcast %28 : vector<1x32xf32> to vector<8x32xf32>
    %458 = arith.mulf %456, %457 : vector<8x32xf32>
    %cst_158 = arith.constant dense<0.000000e+00> : vector<8xf32>
    %459 = vector.multi_reduction <add>, %458, %cst_158 [1] : vector<8x32xf32> to vector<8xf32>
    %460 = vector.shape_cast %459 : vector<8xf32> to vector<8x1xf32>
    %461 = vector.broadcast %29 : vector<1x1xf32> to vector<8x1xf32>
    %462 = arith.addf %460, %461 : vector<8x1xf32>
    %463 = vector.broadcast %447 : vector<1x32xf32> to vector<8x32xf32>
    %464 = arith.addf %463, %25 : vector<8x32xf32>
    %cst_159 = arith.constant 0.000000e+00 : f32
    %465 = vector.broadcast %cst_159 : f32 to vector<8x32xf32>
    %466 = arith.maximumf %464, %465 : vector<8x32xf32>
    %cst_160 = arith.constant dense<0.000000e+00> : vector<8x32xf32>
    %467 = tpu.matmul %466, %30, %cst_160 {dimension_numbers = #tpu.dot_dimension_numbers<[1], [0], [0], [1], [0, 0, 1, 1], [], []>} : vector<8x32xf32>, vector<32x32xf32>, vector<8x32xf32> -> vector<8x32xf32>
    %468 = vector.broadcast %31 : vector<1x32xf32> to vector<8x32xf32>
    %469 = arith.addf %467, %468 : vector<8x32xf32>
    %cst_161 = arith.constant 0.000000e+00 : f32
    %470 = vector.broadcast %cst_161 : f32 to vector<8x32xf32>
    %471 = arith.maximumf %469, %470 : vector<8x32xf32>
    %472 = vector.broadcast %32 : vector<1x32xf32> to vector<8x32xf32>
    %473 = arith.mulf %471, %472 : vector<8x32xf32>
    %cst_162 = arith.constant dense<0.000000e+00> : vector<8xf32>
    %474 = vector.multi_reduction <add>, %473, %cst_162 [1] : vector<8x32xf32> to vector<8xf32>
    %475 = vector.shape_cast %474 : vector<8xf32> to vector<8x1xf32>
    %476 = vector.broadcast %33 : vector<1x1xf32> to vector<8x1xf32>
    %477 = arith.addf %475, %476 : vector<8x1xf32>
    %478 = vector.broadcast %c6_i32 : i32 to vector<8x1xi32>
    %479 = arith.cmpi eq, %34, %478 : vector<8x1xi32>
    %cst_163 = arith.constant 0.000000e+00 : f32
    %480 = vector.broadcast %cst_163 : f32 to vector<8x1xf32>
    %481 = arith.select %479, %462, %480 : vector<8x1xi1>, vector<8x1xf32>
    %cst_164 = arith.constant dense<0.000000e+00> : vector<1xf32>
    %482 = vector.multi_reduction <add>, %481, %cst_164 [0] : vector<8x1xf32> to vector<1xf32>
    %483 = vector.shape_cast %482 : vector<1xf32> to vector<1x1xf32>
    %cst_165 = arith.constant dense<0xFF800000> : vector<1xf32>
    %484 = vector.multi_reduction <maximumf>, %462, %cst_165 [0] : vector<8x1xf32> to vector<1xf32>
    %485 = vector.shape_cast %484 : vector<1xf32> to vector<1x1xf32>
    %486 = vector.broadcast %485 : vector<1x1xf32> to vector<8x1xf32>
    %487 = arith.subf %462, %486 : vector<8x1xf32>
    %488 = math.exp %487 : vector<8x1xf32>
    %cst_166 = arith.constant dense<0.000000e+00> : vector<1xf32>
    %489 = vector.multi_reduction <add>, %488, %cst_166 [0] : vector<8x1xf32> to vector<1xf32>
    %490 = vector.shape_cast %489 : vector<1xf32> to vector<1x1xf32>
    %491 = math.log %490 : vector<1x1xf32>
    %492 = arith.addf %485, %491 : vector<1x1xf32>
    %493 = arith.subf %483, %492 : vector<1x1xf32>
    %494 = arith.addf %426, %493 : vector<1x1xf32>
    %495 = vector.broadcast %c6_i32 : i32 to vector<8x1xi32>
    %496 = arith.cmpi eq, %34, %495 : vector<8x1xi32>
    %cst_167 = arith.constant 0.000000e+00 : f32
    %497 = vector.broadcast %cst_167 : f32 to vector<8x1xf32>
    %498 = arith.select %496, %477, %497 : vector<8x1xi1>, vector<8x1xf32>
    %cst_168 = arith.constant dense<0.000000e+00> : vector<1xf32>
    %499 = vector.multi_reduction <add>, %498, %cst_168 [0] : vector<8x1xf32> to vector<1xf32>
    %500 = vector.shape_cast %499 : vector<1xf32> to vector<1x1xf32>
    %cst_169 = arith.constant dense<0xFF800000> : vector<1xf32>
    %501 = vector.multi_reduction <maximumf>, %477, %cst_169 [0] : vector<8x1xf32> to vector<1xf32>
    %502 = vector.shape_cast %501 : vector<1xf32> to vector<1x1xf32>
    %503 = vector.broadcast %502 : vector<1x1xf32> to vector<8x1xf32>
    %504 = arith.subf %477, %503 : vector<8x1xf32>
    %505 = math.exp %504 : vector<8x1xf32>
    %cst_170 = arith.constant dense<0.000000e+00> : vector<1xf32>
    %506 = vector.multi_reduction <add>, %505, %cst_170 [0] : vector<8x1xf32> to vector<1xf32>
    %507 = vector.shape_cast %506 : vector<1xf32> to vector<1x1xf32>
    %508 = math.log %507 : vector<1x1xf32>
    %509 = arith.addf %502, %508 : vector<1x1xf32>
    %510 = arith.subf %500, %509 : vector<1x1xf32>
    %511 = arith.addf %443, %510 : vector<1x1xf32>
    %c7_i32 = arith.constant 7 : i32
    %512 = arith.index_cast %c7_i32 : i32 to index
    %c0_171 = arith.constant 0 : index
    %513 = vector.load %arg19[%512, %c0_171] : memref<8x32xf32, #tpu.memory_space<vmem>>, vector<1x32xf32>
    %514 = arith.index_cast %c7_i32 : i32 to index
    %c0_172 = arith.constant 0 : index
    %515 = vector.load %arg20[%514, %c0_172] : memref<8x32xf32, #tpu.memory_space<vmem>>, vector<1x32xf32>
    %516 = vector.broadcast %513 : vector<1x32xf32> to vector<8x32xf32>
    %517 = arith.addf %516, %20 : vector<8x32xf32>
    %cst_173 = arith.constant 0.000000e+00 : f32
    %518 = vector.broadcast %cst_173 : f32 to vector<8x32xf32>
    %519 = arith.maximumf %517, %518 : vector<8x32xf32>
    %cst_174 = arith.constant dense<0.000000e+00> : vector<8x32xf32>
    %520 = tpu.matmul %519, %26, %cst_174 {dimension_numbers = #tpu.dot_dimension_numbers<[1], [0], [0], [1], [0, 0, 1, 1], [], []>} : vector<8x32xf32>, vector<32x32xf32>, vector<8x32xf32> -> vector<8x32xf32>
    %521 = vector.broadcast %27 : vector<1x32xf32> to vector<8x32xf32>
    %522 = arith.addf %520, %521 : vector<8x32xf32>
    %cst_175 = arith.constant 0.000000e+00 : f32
    %523 = vector.broadcast %cst_175 : f32 to vector<8x32xf32>
    %524 = arith.maximumf %522, %523 : vector<8x32xf32>
    %525 = vector.broadcast %28 : vector<1x32xf32> to vector<8x32xf32>
    %526 = arith.mulf %524, %525 : vector<8x32xf32>
    %cst_176 = arith.constant dense<0.000000e+00> : vector<8xf32>
    %527 = vector.multi_reduction <add>, %526, %cst_176 [1] : vector<8x32xf32> to vector<8xf32>
    %528 = vector.shape_cast %527 : vector<8xf32> to vector<8x1xf32>
    %529 = vector.broadcast %29 : vector<1x1xf32> to vector<8x1xf32>
    %530 = arith.addf %528, %529 : vector<8x1xf32>
    %531 = vector.broadcast %515 : vector<1x32xf32> to vector<8x32xf32>
    %532 = arith.addf %531, %25 : vector<8x32xf32>
    %cst_177 = arith.constant 0.000000e+00 : f32
    %533 = vector.broadcast %cst_177 : f32 to vector<8x32xf32>
    %534 = arith.maximumf %532, %533 : vector<8x32xf32>
    %cst_178 = arith.constant dense<0.000000e+00> : vector<8x32xf32>
    %535 = tpu.matmul %534, %30, %cst_178 {dimension_numbers = #tpu.dot_dimension_numbers<[1], [0], [0], [1], [0, 0, 1, 1], [], []>} : vector<8x32xf32>, vector<32x32xf32>, vector<8x32xf32> -> vector<8x32xf32>
    %536 = vector.broadcast %31 : vector<1x32xf32> to vector<8x32xf32>
    %537 = arith.addf %535, %536 : vector<8x32xf32>
    %cst_179 = arith.constant 0.000000e+00 : f32
    %538 = vector.broadcast %cst_179 : f32 to vector<8x32xf32>
    %539 = arith.maximumf %537, %538 : vector<8x32xf32>
    %540 = vector.broadcast %32 : vector<1x32xf32> to vector<8x32xf32>
    %541 = arith.mulf %539, %540 : vector<8x32xf32>
    %cst_180 = arith.constant dense<0.000000e+00> : vector<8xf32>
    %542 = vector.multi_reduction <add>, %541, %cst_180 [1] : vector<8x32xf32> to vector<8xf32>
    %543 = vector.shape_cast %542 : vector<8xf32> to vector<8x1xf32>
    %544 = vector.broadcast %33 : vector<1x1xf32> to vector<8x1xf32>
    %545 = arith.addf %543, %544 : vector<8x1xf32>
    %546 = vector.broadcast %c7_i32 : i32 to vector<8x1xi32>
    %547 = arith.cmpi eq, %34, %546 : vector<8x1xi32>
    %cst_181 = arith.constant 0.000000e+00 : f32
    %548 = vector.broadcast %cst_181 : f32 to vector<8x1xf32>
    %549 = arith.select %547, %530, %548 : vector<8x1xi1>, vector<8x1xf32>
    %cst_182 = arith.constant dense<0.000000e+00> : vector<1xf32>
    %550 = vector.multi_reduction <add>, %549, %cst_182 [0] : vector<8x1xf32> to vector<1xf32>
    %551 = vector.shape_cast %550 : vector<1xf32> to vector<1x1xf32>
    %cst_183 = arith.constant dense<0xFF800000> : vector<1xf32>
    %552 = vector.multi_reduction <maximumf>, %530, %cst_183 [0] : vector<8x1xf32> to vector<1xf32>
    %553 = vector.shape_cast %552 : vector<1xf32> to vector<1x1xf32>
    %554 = vector.broadcast %553 : vector<1x1xf32> to vector<8x1xf32>
    %555 = arith.subf %530, %554 : vector<8x1xf32>
    %556 = math.exp %555 : vector<8x1xf32>
    %cst_184 = arith.constant dense<0.000000e+00> : vector<1xf32>
    %557 = vector.multi_reduction <add>, %556, %cst_184 [0] : vector<8x1xf32> to vector<1xf32>
    %558 = vector.shape_cast %557 : vector<1xf32> to vector<1x1xf32>
    %559 = math.log %558 : vector<1x1xf32>
    %560 = arith.addf %553, %559 : vector<1x1xf32>
    %561 = arith.subf %551, %560 : vector<1x1xf32>
    %562 = arith.addf %494, %561 : vector<1x1xf32>
    %563 = vector.broadcast %c7_i32 : i32 to vector<8x1xi32>
    %564 = arith.cmpi eq, %34, %563 : vector<8x1xi32>
    %cst_185 = arith.constant 0.000000e+00 : f32
    %565 = vector.broadcast %cst_185 : f32 to vector<8x1xf32>
    %566 = arith.select %564, %545, %565 : vector<8x1xi1>, vector<8x1xf32>
    %cst_186 = arith.constant dense<0.000000e+00> : vector<1xf32>
    %567 = vector.multi_reduction <add>, %566, %cst_186 [0] : vector<8x1xf32> to vector<1xf32>
    %568 = vector.shape_cast %567 : vector<1xf32> to vector<1x1xf32>
    %cst_187 = arith.constant dense<0xFF800000> : vector<1xf32>
    %569 = vector.multi_reduction <maximumf>, %545, %cst_187 [0] : vector<8x1xf32> to vector<1xf32>
    %570 = vector.shape_cast %569 : vector<1xf32> to vector<1x1xf32>
    %571 = vector.broadcast %570 : vector<1x1xf32> to vector<8x1xf32>
    %572 = arith.subf %545, %571 : vector<8x1xf32>
    %573 = math.exp %572 : vector<8x1xf32>
    %cst_188 = arith.constant dense<0.000000e+00> : vector<1xf32>
    %574 = vector.multi_reduction <add>, %573, %cst_188 [0] : vector<8x1xf32> to vector<1xf32>
    %575 = vector.shape_cast %574 : vector<1xf32> to vector<1x1xf32>
    %576 = math.log %575 : vector<1x1xf32>
    %577 = arith.addf %570, %576 : vector<1x1xf32>
    %578 = arith.subf %568, %577 : vector<1x1xf32>
    %579 = arith.addf %511, %578 : vector<1x1xf32>
    %c8_i32 = arith.constant 8 : i32
    %cst_189 = arith.constant 8.000000e+00 : f32
    %580 = math.log %cst_189 : f32
    %cst_190 = arith.constant 1.000000e+00 : f32
    %cst_191 = arith.constant 8.000000e+00 : f32
    %581 = arith.divf %cst_190, %cst_191 : f32
    %582 = vector.broadcast %581 : f32 to vector<1x1xf32>
    %583 = arith.mulf %562, %582 : vector<1x1xf32>
    %584 = vector.broadcast %580 : f32 to vector<1x1xf32>
    %585 = arith.addf %584, %583 : vector<1x1xf32>
    %c0_192 = arith.constant 0 : index
    %c0_193 = arith.constant 0 : index
    %586 = vector.load %arg18[%c0_192, %c0_193] : memref<1x2xf32, #tpu.memory_space<vmem>>, vector<1x1xf32>
    tpu.vector_store %arg18[%c0_192, %c0_193], %585 {strides = array<i32>} : memref<1x2xf32, #tpu.memory_space<vmem>>, vector<1x1xf32>,
    %587 = vector.broadcast %581 : f32 to vector<1x1xf32>
    %588 = arith.mulf %579, %587 : vector<1x1xf32>
    %589 = vector.broadcast %580 : f32 to vector<1x1xf32>
    %590 = arith.addf %589, %588 : vector<1x1xf32>
    %c0_194 = arith.constant 0 : index
    %c1 = arith.constant 1 : index
    %591 = vector.load %arg18[%c0_194, %c1] : memref<1x2xf32, #tpu.memory_space<vmem>>, vector<1x1xf32>
    tpu.vector_store %arg18[%c0_194, %c1], %590 {strides = array<i32>} : memref<1x2xf32, #tpu.memory_space<vmem>>, vector<1x1xf32>,
    return
  }
}

</mosaic_0001>

<llo_original>
// kernel: cpic_forward.1
$region0: #{cpic_forward.1}
  #allocation0 [shape = 'u32[]', space=smem, size = 0x4, offset = 0x4, fixed_abs, tag = 'smem constant byte address 0x4 - core index']
  #allocation1 [shape = 'u32[144,128]{1,0:T(1,128)}', space=vmem, size = 0x12000, scoped, tag = 'internal scratch']
  #allocation2 [shape = 'f32[8,32]{1,0:T(8,128)}', space=vmem, size = 0x1000, scoped, tag = 'scratch operand']
  #allocation3 [shape = 'f32[8,32]{1,0:T(8,128)}', space=vmem, size = 0x1000, scoped, tag = 'scratch operand']
  #allocation4 [shape = 'f32[1,1]{1,0:T(1,128)S(1)}', space=vmem, size = 0x200, scoped, tag = 'scoped memory for cpic_forward.1']
  #allocation5 [shape = 'f32[1,1]{1,0:T(1,128)S(1)}', space=vmem, size = 0x200, scoped, tag = 'scoped memory for cpic_forward.1']
  %s0 = inlined_call_operand.vmem [shape: f32[8,24], index: 0, kind: input, shape index: {}]
  %s1 = inlined_call_operand.vmem [shape: f32[8,24], index: 1, kind: input, shape index: {}]
  %s2 = inlined_call_operand.vmem [shape: f32[24,12], index: 2, kind: input, shape index: {}]
  %s3 = inlined_call_operand.vmem [shape: f32[1,12], index: 3, kind: input, shape index: {}]
  %s4 = inlined_call_operand.vmem [shape: f32[12,32], index: 4, kind: input, shape index: {}]
  %s5 = inlined_call_operand.vmem [shape: f32[12,32], index: 5, kind: input, shape index: {}]
  %s6 = inlined_call_operand.vmem [shape: f32[1,32], index: 6, kind: input, shape index: {}]
  %s7 = inlined_call_operand.vmem [shape: f32[32,32], index: 7, kind: input, shape index: {}]
  %s8 = inlined_call_operand.vmem [shape: f32[1,32], index: 8, kind: input, shape index: {}]
  %s9 = inlined_call_operand.vmem [shape: f32[1,32], index: 9, kind: input, shape index: {}]
  %s10 = inlined_call_operand.<no memory space> [shape: f32[1,1], index: 10, kind: input, shape index: {}]
  %s11 = inlined_call_operand.vmem [shape: f32[12,32], index: 11, kind: input, shape index: {}]
  %s12 = inlined_call_operand.vmem [shape: f32[24,32], index: 12, kind: input, shape index: {}]
  %s13 = inlined_call_operand.vmem [shape: f32[1,32], index: 13, kind: input, shape index: {}]
  %s14 = inlined_call_operand.vmem [shape: f32[32,32], index: 14, kind: input, shape index: {}]
  %s15 = inlined_call_operand.vmem [shape: f32[1,32], index: 15, kind: input, shape index: {}]
  %s16 = inlined_call_operand.vmem [shape: f32[1,32], index: 16, kind: input, shape index: {}]
  %s17 = inlined_call_operand.<no memory space> [shape: f32[1,1], index: 17, kind: input, shape index: {}]
  %s18 = inlined_call_operand.vmem [shape: f32[1,2], index: 18, kind: output, shape index: {}]
  %s19 = sld [smem:[#allocation0]]
  $region82: #{cpic_forward.1} parent=0
    _
  %s21 = ssub.s32 1, %s19
  %s22 = scalar_select 0, %s21, %s19
  %v23 = vstv %s10
  %24 = vst [vmem:[#allocation4] sm:$0x1] %v23
  %v25 = vstv %s17
  %26 = vst [vmem:[#allocation5] sm:$0x1] %v25
  // Predicated region
  $region2: #{cpic_forward.1} parent=0 // pred_check
    _
  $region3: #{cpic_forward.1} parent=0 // pred_check_branch
    %28 = sbr.rel (0) target = $region5
  $region4: #{cpic_forward.1} parent=0 // pred_region
    _
  $region5: #{cpic_forward.1} parent=0 // pred_fallthru
    _
  // Predicated region
  $region6: #{cpic_forward.1} parent=0 // pred_check
    _
  $region7: #{cpic_forward.1} parent=0 // pred_check_branch
    %30 = sbr.rel (0) target = $region9
  $region8: #{cpic_forward.1} parent=0 // pred_region
    _
  $region9: #{cpic_forward.1} parent=0 // pred_fallthru
    _
  // Predicated region
  $region10: #{cpic_forward.1} parent=0 // pred_check
    _
  $region11: #{cpic_forward.1} parent=0 // pred_check_branch
    %32 = sbr.rel (0) target = $region13
  $region12: #{cpic_forward.1} parent=0 // pred_region
    _
  $region13: #{cpic_forward.1} parent=0 // pred_fallthru
    _
  // Predicated region
  $region14: #{cpic_forward.1} parent=0 // pred_check
    _
  $region15: #{cpic_forward.1} parent=0 // pred_check_branch
    %34 = sbr.rel (0) target = $region17
  $region16: #{cpic_forward.1} parent=0 // pred_region
    _
  $region17: #{cpic_forward.1} parent=0 // pred_fallthru
    _
  // Predicated region
  $region18: #{cpic_forward.1} parent=0 // pred_check
    _
  $region19: #{cpic_forward.1} parent=0 // pred_check_branch
    %36 = sbr.rel (0) target = $region21
  $region20: #{cpic_forward.1} parent=0 // pred_region
    _
  $region21: #{cpic_forward.1} parent=0 // pred_fallthru
    _
  // Predicated region
  $region22: #{cpic_forward.1} parent=0 // pred_check
    _
  $region23: #{cpic_forward.1} parent=0 // pred_check_branch
    %38 = sbr.rel (0) target = $region25
  $region24: #{cpic_forward.1} parent=0 // pred_region
    _
  $region25: #{cpic_forward.1} parent=0 // pred_fallthru
    _
  // Predicated region
  $region26: #{cpic_forward.1} parent=0 // pred_check
    _
  $region27: #{cpic_forward.1} parent=0 // pred_check_branch
    %40 = sbr.rel (0) target = $region29
  $region28: #{cpic_forward.1} parent=0 // pred_region
    _
  $region29: #{cpic_forward.1} parent=0 // pred_fallthru
    _
  // Predicated region
  $region30: #{cpic_forward.1} parent=0 // pred_check
    _
  $region31: #{cpic_forward.1} parent=0 // pred_check_branch
    %42 = sbr.rel (0) target = $region33
  $region32: #{cpic_forward.1} parent=0 // pred_region
    _
  $region33: #{cpic_forward.1} parent=0 // pred_fallthru
    _
  // Predicated region
  $region34: #{cpic_forward.1} parent=0 // pred_check
    _
  $region35: #{cpic_forward.1} parent=0 // pred_check_branch
    %44 = sbr.rel (0) target = $region37
  $region36: #{cpic_forward.1} parent=0 // pred_region
    _
  $region37: #{cpic_forward.1} parent=0 // pred_fallthru
    _
  // Predicated region
  $region38: #{cpic_forward.1} parent=0 // pred_check
    _
  $region39: #{cpic_forward.1} parent=0 // pred_check_branch
    %46 = sbr.rel (0) target = $region41
  $region40: #{cpic_forward.1} parent=0 // pred_region
    _
  $region41: #{cpic_forward.1} parent=0 // pred_fallthru
    _
  // Predicated region
  $region42: #{cpic_forward.1} parent=0 // pred_check
    _
  $region43: #{cpic_forward.1} parent=0 // pred_check_branch
    %48 = sbr.rel (0) target = $region45
  $region44: #{cpic_forward.1} parent=0 // pred_region
    _
  $region45: #{cpic_forward.1} parent=0 // pred_fallthru
    _
  // Predicated region
  $region46: #{cpic_forward.1} parent=0 // pred_check
    _
  $region47: #{cpic_forward.1} parent=0 // pred_check_branch
    %50 = sbr.rel (0) target = $region49
  $region48: #{cpic_forward.1} parent=0 // pred_region
    _
  $region49: #{cpic_forward.1} parent=0 // pred_fallthru
    _
  // Predicated region
  $region50: #{cpic_forward.1} parent=0 // pred_check
    _
  $region51: #{cpic_forward.1} parent=0 // pred_check_branch
    %52 = sbr.rel (0) target = $region53
  $region52: #{cpic_forward.1} parent=0 // pred_region
    _
  $region53: #{cpic_forward.1} parent=0 // pred_fallthru
    _
  // Predicated region
  $region54: #{cpic_forward.1} parent=0 // pred_check
    _
  $region55: #{cpic_forward.1} parent=0 // pred_check_branch
    %54 = sbr.rel (0) target = $region57
  $region56: #{cpic_forward.1} parent=0 // pred_region
    _
  $region57: #{cpic_forward.1} parent=0 // pred_fallthru
    _
  // Predicated region
  $region58: #{cpic_forward.1} parent=0 // pred_check
    _
  $region59: #{cpic_forward.1} parent=0 // pred_check_branch
    %56 = sbr.rel (0) target = $region61
  $region60: #{cpic_forward.1} parent=0 // pred_region
    _
  $region61: #{cpic_forward.1} parent=0 // pred_fallthru
    _
  // Predicated region
  $region62: #{cpic_forward.1} parent=0 // pred_check
    _
  $region63: #{cpic_forward.1} parent=0 // pred_check_branch
    %58 = sbr.rel (0) target = $region65
  $region64: #{cpic_forward.1} parent=0 // pred_region
    _
  $region65: #{cpic_forward.1} parent=0 // pred_fallthru
    _
  // Predicated region
  $region66: #{cpic_forward.1} parent=0 // pred_check
    _
  $region67: #{cpic_forward.1} parent=0 // pred_check_branch
    %60 = sbr.rel (0) target = $region69
  $region68: #{cpic_forward.1} parent=0 // pred_region
    _
  $region69: #{cpic_forward.1} parent=0 // pred_fallthru
    _
  // Predicated region
  $region70: #{cpic_forward.1} parent=0 // pred_check
    _
  $region71: #{cpic_forward.1} parent=0 // pred_check_branch
    %62 = sbr.rel (0) target = $region73
  $region72: #{cpic_forward.1} parent=0 // pred_region
    _
  $region73: #{cpic_forward.1} parent=0 // pred_fallthru
    _
  %v63 = vld [vmem:[%s0] sm:$0xff]
  %v64 = vld [vmem:[%s1] sm:$0xff]
  %v65 = vld [vmem:[%s2] sm:$0xff]
  %v66 = vld [vmem:[%s2 + $0x8] sm:$0xff]
  %v67 = vld [vmem:[%s2 + $0x10] sm:$0xff]
  %v68 = vld [vmem:[%s3] sm:$0x1]
  %v70 = vlaneseq
  %v71 = vshrl.u32 %v70, 7
  %v72 = vsub.s32 0, %v71
  %v73 = vrot.slane %v68, %v72
  %vm75 = vcmask 195584
  %v77 = vsel %vm75, %v63, 0
  %79 = vmatprep.subr.mxu0 0.0
  %80 = vmatpush1.msra.mxu0 0.0
  %81 = vmatprep.subr.mxu0 0.0
  %82 = vmatpush1.msra.mxu0 0.0
  %83 = vmatprep.subr.mxu0 0.0
  %84 = vmatpush1.msra.mxu0 0.0
  %85 = vmatprep.subr.mxu0 0.0
  %86 = vmatpush1.msra.mxu0 0.0
  %87 = vmatprep.subr.mxu0 0.0
  %88 = vmatpush1.msra.mxu0 0.0
  %89 = vmatprep.subr.mxu0 0.0
  %90 = vmatpush1.msra.mxu0 0.0
  %91 = vmatprep.subr.mxu0 0.0
  %92 = vmatpush1.msra.mxu0 0.0
  %93 = vmatprep.subr.mxu0 0.0
  %94 = vmatpush1.msra.mxu0 0.0
  %95 = vmatprep.subr.mxu0 0.0
  %96 = vmatpush1.msra.mxu0 0.0
  %97 = vmatprep.subr.mxu0 0.0
  %98 = vmatpush1.msra.mxu0 0.0
  %99 = vmatprep.subr.mxu0 0.0
  %100 = vmatpush1.msra.mxu0 0.0
  %101 = vmatprep.subr.mxu0 0.0
  %102 = vmatpush1.msra.mxu0 0.0
  %103 = vmatprep.subr.mxu0 0.0
  %104 = vmatpush1.msra.mxu0 0.0
  %105 = vmatprep.subr.mxu0 0.0
  %106 = vmatpush1.msra.mxu0 %v67
  %107 = vmatprep.subr.mxu0 0.0
  %108 = vmatpush1.msra.mxu0 %v66
  %109 = vmatprep.subr.mxu0 0.0
  %110 = vmatpush1.msra.mxu0 %v65
  %111 = vmatprep.subr.mxu0 0.0
  %112 = vmatpush2.msra.mxu0 0.0
  %113 = vmatprep.subr.mxu0 0.0
  %114 = vmatpush2.msra.mxu0 0.0
  %115 = vmatprep.subr.mxu0 0.0
  %116 = vmatpush2.msra.mxu0 0.0
  %117 = vmatprep.subr.mxu0 0.0
  %118 = vmatpush2.msra.mxu0 0.0
  %119 = vmatprep.subr.mxu0 0.0
  %120 = vmatpush2.msra.mxu0 0.0
  %121 = vmatprep.subr.mxu0 0.0
  %122 = vmatpush2.msra.mxu0 0.0
  %123 = vmatprep.subr.mxu0 0.0
  %124 = vmatpush2.msra.mxu0 0.0
  %125 = vmatprep.subr.mxu0 0.0
  %126 = vmatpush2.msra.mxu0 0.0
  %127 = vmatprep.subr.mxu0 0.0
  %128 = vmatpush2.msra.mxu0 0.0
  %129 = vmatprep.subr.mxu0 0.0
  %130 = vmatpush2.msra.mxu0 0.0
  %131 = vmatprep.subr.mxu0 0.0
  %132 = vmatpush2.msra.mxu0 0.0
  %133 = vmatprep.subr.mxu0 0.0
  %134 = vmatpush2.msra.mxu0 0.0
  %135 = vmatprep.subr.mxu0 0.0
  %136 = vmatpush2.msra.mxu0 0.0
  %137 = vmatprep.subr.mxu0 0.0
  %138 = vmatpush2.msra.mxu0 0.0
  %139 = vmatprep.subr.mxu0 0.0
  %140 = vmatpush2.msra.mxu0 0.0
  %141 = vmatprep.subr.mxu0 0.0
  %142 = vmatpush2.msra.mxu0 0.0
  %143 = vmatprep.mubr.f32.mxu0 0.0
  %144 = vmatmul.mubr.f32.gmra.mxu0 %v77
  %v145 = vpop.f32.mrf.mxu0
  %v146 = vadd.f32 %v73, %v145
  %v147 = vpop.f32.mrf.mxu0
  %148 = vdwg.mxu0
  %v150 = vsel %vm75, %v64, 0
  %152 = vmatprep.subr.mxu0 0.0
  %153 = vmatpush1.msra.mxu0 0.0
  %154 = vmatprep.subr.mxu0 0.0
  %155 = vmatpush1.msra.mxu0 0.0
  %156 = vmatprep.subr.mxu0 0.0
  %157 = vmatpush1.msra.mxu0 0.0
  %158 = vmatprep.subr.mxu0 0.0
  %159 = vmatpush1.msra.mxu0 0.0
  %160 = vmatprep.subr.mxu0 0.0
  %161 = vmatpush1.msra.mxu0 0.0
  %162 = vmatprep.subr.mxu0 0.0
  %163 = vmatpush1.msra.mxu0 0.0
  %164 = vmatprep.subr.mxu0 0.0
  %165 = vmatpush1.msra.mxu0 0.0
  %166 = vmatprep.subr.mxu0 0.0
  %167 = vmatpush1.msra.mxu0 0.0
  %168 = vmatprep.subr.mxu0 0.0
  %169 = vmatpush1.msra.mxu0 0.0
  %170 = vmatprep.subr.mxu0 0.0
  %171 = vmatpush1.msra.mxu0 0.0
  %172 = vmatprep.subr.mxu0 0.0
  %173 = vmatpush1.msra.mxu0 0.0
  %174 = vmatprep.subr.mxu0 0.0
  %175 = vmatpush1.msra.mxu0 0.0
  %176 = vmatprep.subr.mxu0 0.0
  %177 = vmatpush1.msra.mxu0 0.0
  %178 = vmatprep.subr.mxu0 0.0
  %179 = vmatpush1.msra.mxu0 %v67
  %180 = vmatprep.subr.mxu0 0.0
  %181 = vmatpush1.msra.mxu0 %v66
  %182 = vmatprep.subr.mxu0 0.0
  %183 = vmatpush1.msra.mxu0 %v65
  %184 = vmatprep.subr.mxu0 0.0
  %185 = vmatpush2.msra.mxu0 0.0
  %186 = vmatprep.subr.mxu0 0.0
  %187 = vmatpush2.msra.mxu0 0.0
  %188 = vmatprep.subr.mxu0 0.0
  %189 = vmatpush2.msra.mxu0 0.0
  %190 = vmatprep.subr.mxu0 0.0
  %191 = vmatpush2.msra.mxu0 0.0
  %192 = vmatprep.subr.mxu0 0.0
  %193 = vmatpush2.msra.mxu0 0.0
  %194 = vmatprep.subr.mxu0 0.0
  %195 = vmatpush2.msra.mxu0 0.0
  %196 = vmatprep.subr.mxu0 0.0
  %197 = vmatpush2.msra.mxu0 0.0
  %198 = vmatprep.subr.mxu0 0.0
  %199 = vmatpush2.msra.mxu0 0.0
  %200 = vmatprep.subr.mxu0 0.0
  %201 = vmatpush2.msra.mxu0 0.0
  %202 = vmatprep.subr.mxu0 0.0
  %203 = vmatpush2.msra.mxu0 0.0
  %204 = vmatprep.subr.mxu0 0.0
  %205 = vmatpush2.msra.mxu0 0.0
  %206 = vmatprep.subr.mxu0 0.0
  %207 = vmatpush2.msra.mxu0 0.0
  %208 = vmatprep.subr.mxu0 0.0
  %209 = vmatpush2.msra.mxu0 0.0
  %210 = vmatprep.subr.mxu0 0.0
  %211 = vmatpush2.msra.mxu0 0.0
  %212 = vmatprep.subr.mxu0 0.0
  %213 = vmatpush2.msra.mxu0 0.0
  %214 = vmatprep.subr.mxu0 0.0
  %215 = vmatpush2.msra.mxu0 0.0
  %216 = vmatprep.mubr.f32.mxu0 0.0
  %217 = vmatmul.mubr.f32.gmra.mxu0 %v150
  %v218 = vpop.f32.mrf.mxu0
  %v219 = vadd.f32 %v73, %v218
  %v220 = vpop.f32.mrf.mxu0
  %221 = vdwg.mxu0
  %v222 = vld [vmem:[%s4] sm:$0xff]
  %v223 = vld [vmem:[%s4 + $0x8] sm:$0xf]
  %vm224 = vcmask 97280
  %v226 = vsel %vm224, %v146, 0
  %vm228 = vcmask 1043456
  %v230 = vsel %vm228, %v223, 0
  %232 = vmatprep.subr.mxu0 0.0
  %233 = vmatpush1.msra.mxu0 0.0
  %234 = vmatprep.subr.mxu0 0.0
  %235 = vmatpush1.msra.mxu0 0.0
  %236 = vmatprep.subr.mxu0 0.0
  %237 = vmatpush1.msra.mxu0 0.0
  %238 = vmatprep.subr.mxu0 0.0
  %239 = vmatpush1.msra.mxu0 0.0
  %240 = vmatprep.subr.mxu0 0.0
  %241 = vmatpush1.msra.mxu0 0.0
  %242 = vmatprep.subr.mxu0 0.0
  %243 = vmatpush1.msra.mxu0 0.0
  %244 = vmatprep.subr.mxu0 0.0
  %245 = vmatpush1.msra.mxu0 0.0
  %246 = vmatprep.subr.mxu0 0.0
  %247 = vmatpush1.msra.mxu0 0.0
  %248 = vmatprep.subr.mxu0 0.0
  %249 = vmatpush1.msra.mxu0 0.0
  %250 = vmatprep.subr.mxu0 0.0
  %251 = vmatpush1.msra.mxu0 0.0
  %252 = vmatprep.subr.mxu0 0.0
  %253 = vmatpush1.msra.mxu0 0.0
  %254 = vmatprep.subr.mxu0 0.0
  %255 = vmatpush1.msra.mxu0 0.0
  %256 = vmatprep.subr.mxu0 0.0
  %257 = vmatpush1.msra.mxu0 0.0
  %258 = vmatprep.subr.mxu0 0.0
  %259 = vmatpush1.msra.mxu0 0.0
  %260 = vmatprep.subr.mxu0 0.0
  %261 = vmatpush1.msra.mxu0 %v230
  %262 = vmatprep.subr.mxu0 0.0
  %263 = vmatpush1.msra.mxu0 %v222
  %264 = vmatprep.subr.mxu0 0.0
  %265 = vmatpush2.msra.mxu0 0.0
  %266 = vmatprep.subr.mxu0 0.0
  %267 = vmatpush2.msra.mxu0 0.0
  %268 = vmatprep.subr.mxu0 0.0
  %269 = vmatpush2.msra.mxu0 0.0
  %270 = vmatprep.subr.mxu0 0.0
  %271 = vmatpush2.msra.mxu0 0.0
  %272 = vmatprep.subr.mxu0 0.0
  %273 = vmatpush2.msra.mxu0 0.0
  %274 = vmatprep.subr.mxu0 0.0
  %275 = vmatpush2.msra.mxu0 0.0
  %276 = vmatprep.subr.mxu0 0.0
  %277 = vmatpush2.msra.mxu0 0.0
  %278 = vmatprep.subr.mxu0 0.0
  %279 = vmatpush2.msra.mxu0 0.0
  %280 = vmatprep.subr.mxu0 0.0
  %281 = vmatpush2.msra.mxu0 0.0
  %282 = vmatprep.subr.mxu0 0.0
  %283 = vmatpush2.msra.mxu0 0.0
  %284 = vmatprep.subr.mxu0 0.0
  %285 = vmatpush2.msra.mxu0 0.0
  %286 = vmatprep.subr.mxu0 0.0
  %287 = vmatpush2.msra.mxu0 0.0
  %288 = vmatprep.subr.mxu0 0.0
  %289 = vmatpush2.msra.mxu0 0.0
  %290 = vmatprep.subr.mxu0 0.0
  %291 = vmatpush2.msra.mxu0 0.0
  %292 = vmatprep.subr.mxu0 0.0
  %293 = vmatpush2.msra.mxu0 0.0
  %294 = vmatprep.subr.mxu0 0.0
  %295 = vmatpush2.msra.mxu0 0.0
  %296 = vmatprep.mubr.f32.mxu0 0.0
  %297 = vmatmul.mubr.f32.gmra.mxu0 %v226
  %v298 = vpop.f32.mrf.mxu0
  %v299 = vadd.f32 0.0, %v298
  %v300 = vpop.f32.mrf.mxu0
  %301 = vdwg.mxu0
  %vm302 = vcmask 261120
  %303 = vst.msk [vmem:[#allocation2] sm:$0xff] %vm302, %v299
  %v304 = vld [vmem:[%s11] sm:$0xff]
  %v305 = vld [vmem:[%s11 + $0x8] sm:$0xf]
  %v307 = vsel %vm228, %v305, 0
  %309 = vmatprep.subr.mxu0 0.0
  %310 = vmatpush1.msra.mxu0 0.0
  %311 = vmatprep.subr.mxu0 0.0
  %312 = vmatpush1.msra.mxu0 0.0
  %313 = vmatprep.subr.mxu0 0.0
  %314 = vmatpush1.msra.mxu0 0.0
  %315 = vmatprep.subr.mxu0 0.0
  %316 = vmatpush1.msra.mxu0 0.0
  %317 = vmatprep.subr.mxu0 0.0
  %318 = vmatpush1.msra.mxu0 0.0
  %319 = vmatprep.subr.mxu0 0.0
  %320 = vmatpush1.msra.mxu0 0.0
  %321 = vmatprep.subr.mxu0 0.0
  %322 = vmatpush1.msra.mxu0 0.0
  %323 = vmatprep.subr.mxu0 0.0
  %324 = vmatpush1.msra.mxu0 0.0
  %325 = vmatprep.subr.mxu0 0.0
  %326 = vmatpush1.msra.mxu0 0.0
  %327 = vmatprep.subr.mxu0 0.0
  %328 = vmatpush1.msra.mxu0 0.0
  %329 = vmatprep.subr.mxu0 0.0
  %330 = vmatpush1.msra.mxu0 0.0
  %331 = vmatprep.subr.mxu0 0.0
  %332 = vmatpush1.msra.mxu0 0.0
  %333 = vmatprep.subr.mxu0 0.0
  %334 = vmatpush1.msra.mxu0 0.0
  %335 = vmatprep.subr.mxu0 0.0
  %336 = vmatpush1.msra.mxu0 0.0
  %337 = vmatprep.subr.mxu0 0.0
  %338 = vmatpush1.msra.mxu0 %v307
  %339 = vmatprep.subr.mxu0 0.0
  %340 = vmatpush1.msra.mxu0 %v304
  %341 = vmatprep.subr.mxu0 0.0
  %342 = vmatpush2.msra.mxu0 0.0
  %343 = vmatprep.subr.mxu0 0.0
  %344 = vmatpush2.msra.mxu0 0.0
  %345 = vmatprep.subr.mxu0 0.0
  %346 = vmatpush2.msra.mxu0 0.0
  %347 = vmatprep.subr.mxu0 0.0
  %348 = vmatpush2.msra.mxu0 0.0
  %349 = vmatprep.subr.mxu0 0.0
  %350 = vmatpush2.msra.mxu0 0.0
  %351 = vmatprep.subr.mxu0 0.0
  %352 = vmatpush2.msra.mxu0 0.0
  %353 = vmatprep.subr.mxu0 0.0
  %354 = vmatpush2.msra.mxu0 0.0
  %355 = vmatprep.subr.mxu0 0.0
  %356 = vmatpush2.msra.mxu0 0.0
  %357 = vmatprep.subr.mxu0 0.0
  %358 = vmatpush2.msra.mxu0 0.0
  %359 = vmatprep.subr.mxu0 0.0
  %360 = vmatpush2.msra.mxu0 0.0
  %361 = vmatprep.subr.mxu0 0.0
  %362 = vmatpush2.msra.mxu0 0.0
  %363 = vmatprep.subr.mxu0 0.0
  %364 = vmatpush2.msra.mxu0 0.0
  %365 = vmatprep.subr.mxu0 0.0
  %366 = vmatpush2.msra.mxu0 0.0
  %367 = vmatprep.subr.mxu0 0.0
  %368 = vmatpush2.msra.mxu0 0.0
  %369 = vmatprep.subr.mxu0 0.0
  %370 = vmatpush2.msra.mxu0 0.0
  %371 = vmatprep.subr.mxu0 0.0
  %372 = vmatpush2.msra.mxu0 0.0
  %373 = vmatprep.mubr.f32.mxu0 0.0
  %374 = vmatmul.mubr.f32.gmra.mxu0 %v226
  %v375 = vpop.f32.mrf.mxu0
  %v376 = vadd.f32 0.0, %v375
  %v377 = vpop.f32.mrf.mxu0
  %378 = vdwg.mxu0
  %379 = vst.msk [vmem:[#allocation3] sm:$0xff] %vm302, %v376
  %v380 = vld [vmem:[%s5] sm:$0xff]
  %v381 = vld [vmem:[%s5 + $0x8] sm:$0xf]
  %v382 = vld [vmem:[%s6] sm:$0x1]
  %v384 = vlaneseq
  %v385 = vshrl.u32 %v384, 7
  %v386 = vsub.s32 0, %v385
  %v387 = vrot.slane %v382, %v386
  %v390 = vsel %vm224, %v219, 0
  %v393 = vsel %vm228, %v381, 0
  %395 = vmatprep.subr.mxu0 0.0
  %396 = vmatpush1.msra.mxu0 0.0
  %397 = vmatprep.subr.mxu0 0.0
  %398 = vmatpush1.msra.mxu0 0.0
  %399 = vmatprep.subr.mxu0 0.0
  %400 = vmatpush1.msra.mxu0 0.0
  %401 = vmatprep.subr.mxu0 0.0
  %402 = vmatpush1.msra.mxu0 0.0
  %403 = vmatprep.subr.mxu0 0.0
  %404 = vmatpush1.msra.mxu0 0.0
  %405 = vmatprep.subr.mxu0 0.0
  %406 = vmatpush1.msra.mxu0 0.0
  %407 = vmatprep.subr.mxu0 0.0
  %408 = vmatpush1.msra.mxu0 0.0
  %409 = vmatprep.subr.mxu0 0.0
  %410 = vmatpush1.msra.mxu0 0.0
  %411 = vmatprep.subr.mxu0 0.0
  %412 = vmatpush1.msra.mxu0 0.0
  %413 = vmatprep.subr.mxu0 0.0
  %414 = vmatpush1.msra.mxu0 0.0
  %415 = vmatprep.subr.mxu0 0.0
  %416 = vmatpush1.msra.mxu0 0.0
  %417 = vmatprep.subr.mxu0 0.0
  %418 = vmatpush1.msra.mxu0 0.0
  %419 = vmatprep.subr.mxu0 0.0
  %420 = vmatpush1.msra.mxu0 0.0
  %421 = vmatprep.subr.mxu0 0.0
  %422 = vmatpush1.msra.mxu0 0.0
  %423 = vmatprep.subr.mxu0 0.0
  %424 = vmatpush1.msra.mxu0 %v393
  %425 = vmatprep.subr.mxu0 0.0
  %426 = vmatpush1.msra.mxu0 %v380
  %427 = vmatprep.subr.mxu0 0.0
  %428 = vmatpush2.msra.mxu0 0.0
  %429 = vmatprep.subr.mxu0 0.0
  %430 = vmatpush2.msra.mxu0 0.0
  %431 = vmatprep.subr.mxu0 0.0
  %432 = vmatpush2.msra.mxu0 0.0
  %433 = vmatprep.subr.mxu0 0.0
  %434 = vmatpush2.msra.mxu0 0.0
  %435 = vmatprep.subr.mxu0 0.0
  %436 = vmatpush2.msra.mxu0 0.0
  %437 = vmatprep.subr.mxu0 0.0
  %438 = vmatpush2.msra.mxu0 0.0
  %439 = vmatprep.subr.mxu0 0.0
  %440 = vmatpush2.msra.mxu0 0.0
  %441 = vmatprep.subr.mxu0 0.0
  %442 = vmatpush2.msra.mxu0 0.0
  %443 = vmatprep.subr.mxu0 0.0
  %444 = vmatpush2.msra.mxu0 0.0
  %445 = vmatprep.subr.mxu0 0.0
  %446 = vmatpush2.msra.mxu0 0.0
  %447 = vmatprep.subr.mxu0 0.0
  %448 = vmatpush2.msra.mxu0 0.0
  %449 = vmatprep.subr.mxu0 0.0
  %450 = vmatpush2.msra.mxu0 0.0
  %451 = vmatprep.subr.mxu0 0.0
  %452 = vmatpush2.msra.mxu0 0.0
  %453 = vmatprep.subr.mxu0 0.0
  %454 = vmatpush2.msra.mxu0 0.0
  %455 = vmatprep.subr.mxu0 0.0
  %456 = vmatpush2.msra.mxu0 0.0
  %457 = vmatprep.subr.mxu0 0.0
  %458 = vmatpush2.msra.mxu0 0.0
  %459 = vmatprep.mubr.f32.mxu0 0.0
  %460 = vmatmul.mubr.f32.gmra.mxu0 %v390
  %v461 = vpop.f32.mrf.mxu0
  %v462 = vadd.f32 %v387, %v461
  %v463 = vpop.f32.mrf.mxu0
  %464 = vdwg.mxu0
  %v465 = vld [vmem:[%s12] sm:$0xff]
  %v466 = vld [vmem:[%s12 + $0x8] sm:$0xff]
  %v467 = vld [vmem:[%s12 + $0x10] sm:$0xff]
  %v468 = vld [vmem:[%s13] sm:$0x1]
  %v470 = vlaneseq
  %v471 = vshrl.u32 %v470, 7
  %v472 = vsub.s32 0, %v471
  %v473 = vrot.slane %v468, %v472
  %475 = vmatprep.subr.mxu0 0.0
  %476 = vmatpush1.msra.mxu0 0.0
  %477 = vmatprep.subr.mxu0 0.0
  %478 = vmatpush1.msra.mxu0 0.0
  %479 = vmatprep.subr.mxu0 0.0
  %480 = vmatpush1.msra.mxu0 0.0
  %481 = vmatprep.subr.mxu0 0.0
  %482 = vmatpush1.msra.mxu0 0.0
  %483 = vmatprep.subr.mxu0 0.0
  %484 = vmatpush1.msra.mxu0 0.0
  %485 = vmatprep.subr.mxu0 0.0
  %486 = vmatpush1.msra.mxu0 0.0
  %487 = vmatprep.subr.mxu0 0.0
  %488 = vmatpush1.msra.mxu0 0.0
  %489 = vmatprep.subr.mxu0 0.0
  %490 = vmatpush1.msra.mxu0 0.0
  %491 = vmatprep.subr.mxu0 0.0
  %492 = vmatpush1.msra.mxu0 0.0
  %493 = vmatprep.subr.mxu0 0.0
  %494 = vmatpush1.msra.mxu0 0.0
  %495 = vmatprep.subr.mxu0 0.0
  %496 = vmatpush1.msra.mxu0 0.0
  %497 = vmatprep.subr.mxu0 0.0
  %498 = vmatpush1.msra.mxu0 0.0
  %499 = vmatprep.subr.mxu0 0.0
  %500 = vmatpush1.msra.mxu0 0.0
  %501 = vmatprep.subr.mxu0 0.0
  %502 = vmatpush1.msra.mxu0 %v467
  %503 = vmatprep.subr.mxu0 0.0
  %504 = vmatpush1.msra.mxu0 %v466
  %505 = vmatprep.subr.mxu0 0.0
  %506 = vmatpush1.msra.mxu0 %v465
  %507 = vmatprep.subr.mxu0 0.0
  %508 = vmatpush2.msra.mxu0 0.0
  %509 = vmatprep.subr.mxu0 0.0
  %510 = vmatpush2.msra.mxu0 0.0
  %511 = vmatprep.subr.mxu0 0.0
  %512 = vmatpush2.msra.mxu0 0.0
  %513 = vmatprep.subr.mxu0 0.0
  %514 = vmatpush2.msra.mxu0 0.0
  %515 = vmatprep.subr.mxu0 0.0
  %516 = vmatpush2.msra.mxu0 0.0
  %517 = vmatprep.subr.mxu0 0.0
  %518 = vmatpush2.msra.mxu0 0.0
  %519 = vmatprep.subr.mxu0 0.0
  %520 = vmatpush2.msra.mxu0 0.0
  %521 = vmatprep.subr.mxu0 0.0
  %522 = vmatpush2.msra.mxu0 0.0
  %523 = vmatprep.subr.mxu0 0.0
  %524 = vmatpush2.msra.mxu0 0.0
  %525 = vmatprep.subr.mxu0 0.0
  %526 = vmatpush2.msra.mxu0 0.0
  %527 = vmatprep.subr.mxu0 0.0
  %528 = vmatpush2.msra.mxu0 0.0
  %529 = vmatprep.subr.mxu0 0.0
  %530 = vmatpush2.msra.mxu0 0.0
  %531 = vmatprep.subr.mxu0 0.0
  %532 = vmatpush2.msra.mxu0 0.0
  %533 = vmatprep.subr.mxu0 0.0
  %534 = vmatpush2.msra.mxu0 0.0
  %535 = vmatprep.subr.mxu0 0.0
  %536 = vmatpush2.msra.mxu0 0.0
  %537 = vmatprep.subr.mxu0 0.0
  %538 = vmatpush2.msra.mxu0 0.0
  %539 = vmatprep.mubr.f32.mxu0 0.0
  %540 = vmatmul.mubr.f32.gmra.mxu0 %v150
  %v541 = vpop.f32.mrf.mxu0
  %v542 = vadd.f32 %v473, %v541
  %v543 = vpop.f32.mrf.mxu0
  %544 = vdwg.mxu0
  %v545 = vld [vmem:[%s7] sm:$0xff]
  %v546 = vld [vmem:[%s7 + $0x8] sm:$0xff]
  %v547 = vld [vmem:[%s7 + $0x10] sm:$0xff]
  %v548 = vld [vmem:[%s7 + $0x18] sm:$0xff]
  %v549 = vld [vmem:[%s8] sm:$0x1]
  %v550 = vld [vmem:[%s9] sm:$0x1]
  %v551 = vld [vmem:[#allocation4] sm:$0x1]
  %v552 = vld [vmem:[%s14] sm:$0xff]
  %v553 = vld [vmem:[%s14 + $0x8] sm:$0xff]
  %v554 = vld [vmem:[%s14 + $0x10] sm:$0xff]
  %v555 = vld [vmem:[%s14 + $0x18] sm:$0xff]
  %v556 = vld [vmem:[%s15] sm:$0x1]
  %v557 = vld [vmem:[%s16] sm:$0x1]
  %v558 = vld [vmem:[#allocation5] sm:$0x1]
  %v559 = vlaneseq
  %v560 = vshrl.u32 %v559, 7
  %v561 = vld [vmem:[#allocation2] sm:$0x1]
  %v562 = vld [vmem:[#allocation3] sm:$0x1]
  %v563 = vlaneseq
  %v564 = vshrl.u32 %v563, 7
  %v565 = vsub.s32 0, %v564
  %v566 = vrot.slane %v561, %v565
  %v567 = vadd.f32 %v566, %v462
  %v568 = vmax.f32 %v567, 0.0
  %v570 = vlaneseq
  %v571 = vshrl.u32 %v570, 7
  %v572 = vsub.s32 0, %v571
  %v573 = vrot.slane %v549, %v572
  %v576 = vsel %vm302, %v568, 0
  %578 = vmatprep.subr.mxu0 0.0
  %579 = vmatpush1.msra.mxu0 0.0
  %580 = vmatprep.subr.mxu0 0.0
  %581 = vmatpush1.msra.mxu0 0.0
  %582 = vmatprep.subr.mxu0 0.0
  %583 = vmatpush1.msra.mxu0 0.0
  %584 = vmatprep.subr.mxu0 0.0
  %585 = vmatpush1.msra.mxu0 0.0
  %586 = vmatprep.subr.mxu0 0.0
  %587 = vmatpush1.msra.mxu0 0.0
  %588 = vmatprep.subr.mxu0 0.0
  %589 = vmatpush1.msra.mxu0 0.0
  %590 = vmatprep.subr.mxu0 0.0
  %591 = vmatpush1.msra.mxu0 0.0
  %592 = vmatprep.subr.mxu0 0.0
  %593 = vmatpush1.msra.mxu0 0.0
  %594 = vmatprep.subr.mxu0 0.0
  %595 = vmatpush1.msra.mxu0 0.0
  %596 = vmatprep.subr.mxu0 0.0
  %597 = vmatpush1.msra.mxu0 0.0
  %598 = vmatprep.subr.mxu0 0.0
  %599 = vmatpush1.msra.mxu0 0.0
  %600 = vmatprep.subr.mxu0 0.0
  %601 = vmatpush1.msra.mxu0 0.0
  %602 = vmatprep.subr.mxu0 0.0
  %603 = vmatpush1.msra.mxu0 %v548
  %604 = vmatprep.subr.mxu0 0.0
  %605 = vmatpush1.msra.mxu0 %v547
  %606 = vmatprep.subr.mxu0 0.0
  %607 = vmatpush1.msra.mxu0 %v546
  %608 = vmatprep.subr.mxu0 0.0
  %609 = vmatpush1.msra.mxu0 %v545
  %610 = vmatprep.subr.mxu0 0.0
  %611 = vmatpush2.msra.mxu0 0.0
  %612 = vmatprep.subr.mxu0 0.0
  %613 = vmatpush2.msra.mxu0 0.0
  %614 = vmatprep.subr.mxu0 0.0
  %615 = vmatpush2.msra.mxu0 0.0
  %616 = vmatprep.subr.mxu0 0.0
  %617 = vmatpush2.msra.mxu0 0.0
  %618 = vmatprep.subr.mxu0 0.0
  %619 = vmatpush2.msra.mxu0 0.0
  %620 = vmatprep.subr.mxu0 0.0
  %621 = vmatpush2.msra.mxu0 0.0
  %622 = vmatprep.subr.mxu0 0.0
  %623 = vmatpush2.msra.mxu0 0.0
  %624 = vmatprep.subr.mxu0 0.0
  %625 = vmatpush2.msra.mxu0 0.0
  %626 = vmatprep.subr.mxu0 0.0
  %627 = vmatpush2.msra.mxu0 0.0
  %628 = vmatprep.subr.mxu0 0.0
  %629 = vmatpush2.msra.mxu0 0.0
  %630 = vmatprep.subr.mxu0 0.0
  %631 = vmatpush2.msra.mxu0 0.0
  %632 = vmatprep.subr.mxu0 0.0
  %633 = vmatpush2.msra.mxu0 0.0
  %634 = vmatprep.subr.mxu0 0.0
  %635 = vmatpush2.msra.mxu0 0.0
  %636 = vmatprep.subr.mxu0 0.0
  %637 = vmatpush2.msra.mxu0 0.0
  %638 = vmatprep.subr.mxu0 0.0
  %639 = vmatpush2.msra.mxu0 0.0
  %640 = vmatprep.subr.mxu0 0.0
  %641 = vmatpush2.msra.mxu0 0.0
  %642 = vmatprep.mubr.f32.mxu0 0.0
  %643 = vmatmul.mubr.f32.gmra.mxu0 %v576
  %v644 = vpop.f32.mrf.mxu0
  %v645 = vadd.f32 %v573, %v644
  %v646 = vpop.f32.mrf.mxu0
  %647 = vdwg.mxu0
  %v648 = vmax.f32 %v645, 0.0
  %v650 = vlaneseq
  %v651 = vshrl.u32 %v650, 7
  %v652 = vsub.s32 0, %v651
  %v653 = vrot.slane %v550, %v652
  %v655 = vmul.f32 %v648, %v653
  %v656 = vsel %vm302, %v655, 0.0
  %657 = vadd.xlane.f32.xlu0 %v656
  %v658 = vpop.xlane.xlu0 %657
  %v660 = vlaneseq
  %v661 = vshrl.u32 %v660, 7
  %v662 = vsub.s32 0, %v661
  %v663 = vrot.slane %v551, %v662
  %v665 = vadd.f32 %v658, %v663
  %v666 = vlaneseq
  %v667 = vshrl.u32 %v666, 7
  %v668 = vsub.s32 0, %v667
  %v669 = vrot.slane %v562, %v668
  %v670 = vadd.f32 %v669, %v542
  %v671 = vmax.f32 %v670, 0.0
  %v673 = vlaneseq
  %v674 = vshrl.u32 %v673, 7
  %v675 = vsub.s32 0, %v674
  %v676 = vrot.slane %v556, %v675
  %v679 = vsel %vm302, %v671, 0
  %681 = vmatprep.subr.mxu0 0.0
  %682 = vmatpush1.msra.mxu0 0.0
  %683 = vmatprep.subr.mxu0 0.0
  %684 = vmatpush1.msra.mxu0 0.0
  %685 = vmatprep.subr.mxu0 0.0
  %686 = vmatpush1.msra.mxu0 0.0
  %687 = vmatprep.subr.mxu0 0.0
  %688 = vmatpush1.msra.mxu0 0.0
  %689 = vmatprep.subr.mxu0 0.0
  %690 = vmatpush1.msra.mxu0 0.0
  %691 = vmatprep.subr.mxu0 0.0
  %692 = vmatpush1.msra.mxu0 0.0
  %693 = vmatprep.subr.mxu0 0.0
  %694 = vmatpush1.msra.mxu0 0.0
  %695 = vmatprep.subr.mxu0 0.0
  %696 = vmatpush1.msra.mxu0 0.0
  %697 = vmatprep.subr.mxu0 0.0
  %698 = vmatpush1.msra.mxu0 0.0
  %699 = vmatprep.subr.mxu0 0.0
  %700 = vmatpush1.msra.mxu0 0.0
  %701 = vmatprep.subr.mxu0 0.0
  %702 = vmatpush1.msra.mxu0 0.0
  %703 = vmatprep.subr.mxu0 0.0
  %704 = vmatpush1.msra.mxu0 0.0
  %705 = vmatprep.subr.mxu0 0.0
  %706 = vmatpush1.msra.mxu0 %v555
  %707 = vmatprep.subr.mxu0 0.0
  %708 = vmatpush1.msra.mxu0 %v554
  %709 = vmatprep.subr.mxu0 0.0
  %710 = vmatpush1.msra.mxu0 %v553
  %711 = vmatprep.subr.mxu0 0.0
  %712 = vmatpush1.msra.mxu0 %v552
  %713 = vmatprep.subr.mxu0 0.0
  %714 = vmatpush2.msra.mxu0 0.0
  %715 = vmatprep.subr.mxu0 0.0
  %716 = vmatpush2.msra.mxu0 0.0
  %717 = vmatprep.subr.mxu0 0.0
  %718 = vmatpush2.msra.mxu0 0.0
  %719 = vmatprep.subr.mxu0 0.0
  %720 = vmatpush2.msra.mxu0 0.0
  %721 = vmatprep.subr.mxu0 0.0
  %722 = vmatpush2.msra.mxu0 0.0
  %723 = vmatprep.subr.mxu0 0.0
  %724 = vmatpush2.msra.mxu0 0.0
  %725 = vmatprep.subr.mxu0 0.0
  %726 = vmatpush2.msra.mxu0 0.0
  %727 = vmatprep.subr.mxu0 0.0
  %728 = vmatpush2.msra.mxu0 0.0
  %729 = vmatprep.subr.mxu0 0.0
  %730 = vmatpush2.msra.mxu0 0.0
  %731 = vmatprep.subr.mxu0 0.0
  %732 = vmatpush2.msra.mxu0 0.0
  %733 = vmatprep.subr.mxu0 0.0
  %734 = vmatpush2.msra.mxu0 0.0
  %735 = vmatprep.subr.mxu0 0.0
  %736 = vmatpush2.msra.mxu0 0.0
  %737 = vmatprep.subr.mxu0 0.0
  %738 = vmatpush2.msra.mxu0 0.0
  %739 = vmatprep.subr.mxu0 0.0
  %740 = vmatpush2.msra.mxu0 0.0
  %741 = vmatprep.subr.mxu0 0.0
  %742 = vmatpush2.msra.mxu0 0.0
  %743 = vmatprep.subr.mxu0 0.0
  %744 = vmatpush2.msra.mxu0 0.0
  %745 = vmatprep.mubr.f32.mxu0 0.0
  %746 = vmatmul.mubr.f32.gmra.mxu0 %v679
  %v747 = vpop.f32.mrf.mxu0
  %v748 = vadd.f32 %v676, %v747
  %v749 = vpop.f32.mrf.mxu0
  %750 = vdwg.mxu0
  %v751 = vmax.f32 %v748, 0.0
  %v753 = vlaneseq
  %v754 = vshrl.u32 %v753, 7
  %v755 = vsub.s32 0, %v754
  %v756 = vrot.slane %v557, %v755
  %v758 = vmul.f32 %v751, %v756
  %v759 = vsel %vm302, %v758, 0.0
  %760 = vadd.xlane.f32.xlu0 %v759
  %v761 = vpop.xlane.xlu0 %760
  %v763 = vlaneseq
  %v764 = vshrl.u32 %v763, 7
  %v765 = vsub.s32 0, %v764
  %v766 = vrot.slane %v558, %v765
  %v768 = vadd.f32 %v761, %v766
  %vm769 = vcmp.eq.s32.totalorder %v560, 0
  %v770 = vsel %vm769, %v665, 0.0
  %vm771 = vcmask 7168
  %v772 = vsel %vm771, %v770, 0.0
  %v773 = vrot.slane %v772, 4
  %v774 = vadd.f32 %v772, %v773
  %v775 = vrot.slane %v774, 2
  %v776 = vadd.f32 %v774, %v775
  %v777 = vrot.slane %v776, 1
  %v778 = vadd.f32 %v776, %v777
  %v779 = vsel %vm771, %v665, -inf
  %v780 = vrot.slane %v779, 4
  %v781 = vmax.f32 %v779, %v780
  %v782 = vrot.slane %v781, 2
  %v783 = vmax.f32 %v781, %v782
  %v784 = vrot.slane %v783, 1
  %v785 = vmax.f32 %v783, %v784
  %v786 = vsub.f32 %v665, %v785
  %v787 = vmul.f32 %v786, 1.442695
  %v788 = vpow.pop %v787
  %v789 = vsel %vm771, %v788, 0.0
  %v790 = vrot.slane %v789, 4
  %v791 = vadd.f32 %v789, %v790
  %v792 = vrot.slane %v791, 2
  %v793 = vadd.f32 %v791, %v792
  %v794 = vrot.slane %v793, 1
  %v795 = vadd.f32 %v793, %v794
  %v796 = vlog2.pop %v795
  %v797 = vmul.f32 %v796, 0.6931472
  %v798 = vadd.f32 %v785, %v797
  %v799 = vsub.f32 %v778, %v798
  %v800 = vadd.f32 %v799, 0.0
  %v801 = vsel %vm769, %v768, 0.0
  %v802 = vsel %vm771, %v801, 0.0
  %v803 = vrot.slane %v802, 4
  %v804 = vadd.f32 %v802, %v803
  %v805 = vrot.slane %v804, 2
  %v806 = vadd.f32 %v804, %v805
  %v807 = vrot.slane %v806, 1
  %v808 = vadd.f32 %v806, %v807
  %v809 = vsel %vm771, %v768, -inf
  %v810 = vrot.slane %v809, 4
  %v811 = vmax.f32 %v809, %v810
  %v812 = vrot.slane %v811, 2
  %v813 = vmax.f32 %v811, %v812
  %v814 = vrot.slane %v813, 1
  %v815 = vmax.f32 %v813, %v814
  %v816 = vsub.f32 %v768, %v815
  %v817 = vmul.f32 %v816, 1.442695
  %v818 = vpow.pop %v817
  %v819 = vsel %vm771, %v818, 0.0
  %v820 = vrot.slane %v819, 4
  %v821 = vadd.f32 %v819, %v820
  %v822 = vrot.slane %v821, 2
  %v823 = vadd.f32 %v821, %v822
  %v824 = vrot.slane %v823, 1
  %v825 = vadd.f32 %v823, %v824
  %v826 = vlog2.pop %v825
  %v827 = vmul.f32 %v826, 0.6931472
  %v828 = vadd.f32 %v815, %v827
  %v829 = vsub.f32 %v808, %v828
  %v830 = vadd.f32 %v829, 0.0
  %v831 = vld [vmem:[#allocation2 + $0x1] sm:$0x1]
  %v832 = vld [vmem:[#allocation3 + $0x1] sm:$0x1]
  %v833 = vlaneseq
  %v834 = vshrl.u32 %v833, 7
  %v835 = vsub.s32 0, %v834
  %v836 = vrot.slane %v831, %v835
  %v837 = vadd.f32 %v836, %v462
  %v838 = vmax.f32 %v837, 0.0
  %v840 = vsel %vm302, %v838, 0
  %842 = vmatprep.subr.mxu0 0.0
  %843 = vmatpush1.msra.mxu0 0.0
  %844 = vmatprep.subr.mxu0 0.0
  %845 = vmatpush1.msra.mxu0 0.0
  %846 = vmatprep.subr.mxu0 0.0
  %847 = vmatpush1.msra.mxu0 0.0
  %848 = vmatprep.subr.mxu0 0.0
  %849 = vmatpush1.msra.mxu0 0.0
  %850 = vmatprep.subr.mxu0 0.0
  %851 = vmatpush1.msra.mxu0 0.0
  %852 = vmatprep.subr.mxu0 0.0
  %853 = vmatpush1.msra.mxu0 0.0
  %854 = vmatprep.subr.mxu0 0.0
  %855 = vmatpush1.msra.mxu0 0.0
  %856 = vmatprep.subr.mxu0 0.0
  %857 = vmatpush1.msra.mxu0 0.0
  %858 = vmatprep.subr.mxu0 0.0
  %859 = vmatpush1.msra.mxu0 0.0
  %860 = vmatprep.subr.mxu0 0.0
  %861 = vmatpush1.msra.mxu0 0.0
  %862 = vmatprep.subr.mxu0 0.0
  %863 = vmatpush1.msra.mxu0 0.0
  %864 = vmatprep.subr.mxu0 0.0
  %865 = vmatpush1.msra.mxu0 0.0
  %866 = vmatprep.subr.mxu0 0.0
  %867 = vmatpush1.msra.mxu0 %v548
  %868 = vmatprep.subr.mxu0 0.0
  %869 = vmatpush1.msra.mxu0 %v547
  %870 = vmatprep.subr.mxu0 0.0
  %871 = vmatpush1.msra.mxu0 %v546
  %872 = vmatprep.subr.mxu0 0.0
  %873 = vmatpush1.msra.mxu0 %v545
  %874 = vmatprep.subr.mxu0 0.0
  %875 = vmatpush2.msra.mxu0 0.0
  %876 = vmatprep.subr.mxu0 0.0
  %877 = vmatpush2.msra.mxu0 0.0
  %878 = vmatprep.subr.mxu0 0.0
  %879 = vmatpush2.msra.mxu0 0.0
  %880 = vmatprep.subr.mxu0 0.0
  %881 = vmatpush2.msra.mxu0 0.0
  %882 = vmatprep.subr.mxu0 0.0
  %883 = vmatpush2.msra.mxu0 0.0
  %884 = vmatprep.subr.mxu0 0.0
  %885 = vmatpush2.msra.mxu0 0.0
  %886 = vmatprep.subr.mxu0 0.0
  %887 = vmatpush2.msra.mxu0 0.0
  %888 = vmatprep.subr.mxu0 0.0
  %889 = vmatpush2.msra.mxu0 0.0
  %890 = vmatprep.subr.mxu0 0.0
  %891 = vmatpush2.msra.mxu0 0.0
  %892 = vmatprep.subr.mxu0 0.0
  %893 = vmatpush2.msra.mxu0 0.0
  %894 = vmatprep.subr.mxu0 0.0
  %895 = vmatpush2.msra.mxu0 0.0
  %896 = vmatprep.subr.mxu0 0.0
  %897 = vmatpush2.msra.mxu0 0.0
  %898 = vmatprep.subr.mxu0 0.0
  %899 = vmatpush2.msra.mxu0 0.0
  %900 = vmatprep.subr.mxu0 0.0
  %901 = vmatpush2.msra.mxu0 0.0
  %902 = vmatprep.subr.mxu0 0.0
  %903 = vmatpush2.msra.mxu0 0.0
  %904 = vmatprep.subr.mxu0 0.0
  %905 = vmatpush2.msra.mxu0 0.0
  %906 = vmatprep.mubr.f32.mxu0 0.0
  %907 = vmatmul.mubr.f32.gmra.mxu0 %v840
  %v908 = vpop.f32.mrf.mxu0
  %v909 = vadd.f32 %v573, %v908
  %v910 = vpop.f32.mrf.mxu0
  %911 = vdwg.mxu0
  %v912 = vmax.f32 %v909, 0.0
  %v913 = vmul.f32 %v912, %v653
  %v914 = vsel %vm302, %v913, 0.0
  %915 = vadd.xlane.f32.xlu0 %v914
  %v916 = vpop.xlane.xlu0 %915
  %v917 = vadd.f32 %v916, %v663
  %v918 = vlaneseq
  %v919 = vshrl.u32 %v918, 7
  %v920 = vsub.s32 0, %v919
  %v921 = vrot.slane %v832, %v920
  %v922 = vadd.f32 %v921, %v542
  %v923 = vmax.f32 %v922, 0.0
  %v925 = vsel %vm302, %v923, 0
  %927 = vmatprep.subr.mxu0 0.0
  %928 = vmatpush1.msra.mxu0 0.0
  %929 = vmatprep.subr.mxu0 0.0
  %930 = vmatpush1.msra.mxu0 0.0
  %931 = vmatprep.subr.mxu0 0.0
  %932 = vmatpush1.msra.mxu0 0.0
  %933 = vmatprep.subr.mxu0 0.0
  %934 = vmatpush1.msra.mxu0 0.0
  %935 = vmatprep.subr.mxu0 0.0
  %936 = vmatpush1.msra.mxu0 0.0
  %937 = vmatprep.subr.mxu0 0.0
  %938 = vmatpush1.msra.mxu0 0.0
  %939 = vmatprep.subr.mxu0 0.0
  %940 = vmatpush1.msra.mxu0 0.0
  %941 = vmatprep.subr.mxu0 0.0
  %942 = vmatpush1.msra.mxu0 0.0
  %943 = vmatprep.subr.mxu0 0.0
  %944 = vmatpush1.msra.mxu0 0.0
  %945 = vmatprep.subr.mxu0 0.0
  %946 = vmatpush1.msra.mxu0 0.0
  %947 = vmatprep.subr.mxu0 0.0
  %948 = vmatpush1.msra.mxu0 0.0
  %949 = vmatprep.subr.mxu0 0.0
  %950 = vmatpush1.msra.mxu0 0.0
  %951 = vmatprep.subr.mxu0 0.0
  %952 = vmatpush1.msra.mxu0 %v555
  %953 = vmatprep.subr.mxu0 0.0
  %954 = vmatpush1.msra.mxu0 %v554
  %955 = vmatprep.subr.mxu0 0.0
  %956 = vmatpush1.msra.mxu0 %v553
  %957 = vmatprep.subr.mxu0 0.0
  %958 = vmatpush1.msra.mxu0 %v552
  %959 = vmatprep.subr.mxu0 0.0
  %960 = vmatpush2.msra.mxu0 0.0
  %961 = vmatprep.subr.mxu0 0.0
  %962 = vmatpush2.msra.mxu0 0.0
  %963 = vmatprep.subr.mxu0 0.0
  %964 = vmatpush2.msra.mxu0 0.0
  %965 = vmatprep.subr.mxu0 0.0
  %966 = vmatpush2.msra.mxu0 0.0
  %967 = vmatprep.subr.mxu0 0.0
  %968 = vmatpush2.msra.mxu0 0.0
  %969 = vmatprep.subr.mxu0 0.0
  %970 = vmatpush2.msra.mxu0 0.0
  %971 = vmatprep.subr.mxu0 0.0
  %972 = vmatpush2.msra.mxu0 0.0
  %973 = vmatprep.subr.mxu0 0.0
  %974 = vmatpush2.msra.mxu0 0.0
  %975 = vmatprep.subr.mxu0 0.0
  %976 = vmatpush2.msra.mxu0 0.0
  %977 = vmatprep.subr.mxu0 0.0
  %978 = vmatpush2.msra.mxu0 0.0
  %979 = vmatprep.subr.mxu0 0.0
  %980 = vmatpush2.msra.mxu0 0.0
  %981 = vmatprep.subr.mxu0 0.0
  %982 = vmatpush2.msra.mxu0 0.0
  %983 = vmatprep.subr.mxu0 0.0
  %984 = vmatpush2.msra.mxu0 0.0
  %985 = vmatprep.subr.mxu0 0.0
  %986 = vmatpush2.msra.mxu0 0.0
  %987 = vmatprep.subr.mxu0 0.0
  %988 = vmatpush2.msra.mxu0 0.0
  %989 = vmatprep.subr.mxu0 0.0
  %990 = vmatpush2.msra.mxu0 0.0
  %991 = vmatprep.mubr.f32.mxu0 0.0
  %992 = vmatmul.mubr.f32.gmra.mxu0 %v925
  %v993 = vpop.f32.mrf.mxu0
  %v994 = vadd.f32 %v676, %v993
  %v995 = vpop.f32.mrf.mxu0
  %996 = vdwg.mxu0
  %v997 = vmax.f32 %v994, 0.0
  %v998 = vmul.f32 %v997, %v756
  %v999 = vsel %vm302, %v998, 0.0
  %1000 = vadd.xlane.f32.xlu0 %v999
  %v1001 = vpop.xlane.xlu0 %1000
  %v1002 = vadd.f32 %v1001, %v766
  %vm1003 = vcmp.eq.s32.totalorder %v560, 1
  %v1004 = vsel %vm1003, %v917, 0.0
  %v1005 = vsel %vm771, %v1004, 0.0
  %v1006 = vrot.slane %v1005, 4
  %v1007 = vadd.f32 %v1005, %v1006
  %v1008 = vrot.slane %v1007, 2
  %v1009 = vadd.f32 %v1007, %v1008
  %v1010 = vrot.slane %v1009, 1
  %v1011 = vadd.f32 %v1009, %v1010
  %v1012 = vsel %vm771, %v917, -inf
  %v1013 = vrot.slane %v1012, 4
  %v1014 = vmax.f32 %v1012, %v1013
  %v1015 = vrot.slane %v1014, 2
  %v1016 = vmax.f32 %v1014, %v1015
  %v1017 = vrot.slane %v1016, 1
  %v1018 = vmax.f32 %v1016, %v1017
  %v1019 = vsub.f32 %v917, %v1018
  %v1020 = vmul.f32 %v1019, 1.442695
  %v1021 = vpow.pop %v1020
  %v1022 = vsel %vm771, %v1021, 0.0
  %v1023 = vrot.slane %v1022, 4
  %v1024 = vadd.f32 %v1022, %v1023
  %v1025 = vrot.slane %v1024, 2
  %v1026 = vadd.f32 %v1024, %v1025
  %v1027 = vrot.slane %v1026, 1
  %v1028 = vadd.f32 %v1026, %v1027
  %v1029 = vlog2.pop %v1028
  %v1030 = vmul.f32 %v1029, 0.6931472
  %v1031 = vadd.f32 %v1018, %v1030
  %v1032 = vsub.f32 %v1011, %v1031
  %v1033 = vadd.f32 %v800, %v1032
  %v1034 = vsel %vm1003, %v1002, 0.0
  %v1035 = vsel %vm771, %v1034, 0.0
  %v1036 = vrot.slane %v1035, 4
  %v1037 = vadd.f32 %v1035, %v1036
  %v1038 = vrot.slane %v1037, 2
  %v1039 = vadd.f32 %v1037, %v1038
  %v1040 = vrot.slane %v1039, 1
  %v1041 = vadd.f32 %v1039, %v1040
  %v1042 = vsel %vm771, %v1002, -inf
  %v1043 = vrot.slane %v1042, 4
  %v1044 = vmax.f32 %v1042, %v1043
  %v1045 = vrot.slane %v1044, 2
  %v1046 = vmax.f32 %v1044, %v1045
  %v1047 = vrot.slane %v1046, 1
  %v1048 = vmax.f32 %v1046, %v1047
  %v1049 = vsub.f32 %v1002, %v1048
  %v1050 = vmul.f32 %v1049, 1.442695
  %v1051 = vpow.pop %v1050
  %v1052 = vsel %vm771, %v1051, 0.0
  %v1053 = vrot.slane %v1052, 4
  %v1054 = vadd.f32 %v1052, %v1053
  %v1055 = vrot.slane %v1054, 2
  %v1056 = vadd.f32 %v1054, %v1055
  %v1057 = vrot.slane %v1056, 1
  %v1058 = vadd.f32 %v1056, %v1057
  %v1059 = vlog2.pop %v1058
  %v1060 = vmul.f32 %v1059, 0.6931472
  %v1061 = vadd.f32 %v1048, %v1060
  %v1062 = vsub.f32 %v1041, %v1061
  %v1063 = vadd.f32 %v830, %v1062
  %v1064 = vld [vmem:[#allocation2 + $0x2] sm:$0x1]
  %v1065 = vld [vmem:[#allocation3 + $0x2] sm:$0x1]
  %v1066 = vlaneseq
  %v1067 = vshrl.u32 %v1066, 7
  %v1068 = vsub.s32 0, %v1067
  %v1069 = vrot.slane %v1064, %v1068
  %v1070 = vadd.f32 %v1069, %v462
  %v1071 = vmax.f32 %v1070, 0.0
  %v1073 = vsel %vm302, %v1071, 0
  %1075 = vmatprep.subr.mxu0 0.0
  %1076 = vmatpush1.msra.mxu0 0.0
  %1077 = vmatprep.subr.mxu0 0.0
  %1078 = vmatpush1.msra.mxu0 0.0
  %1079 = vmatprep.subr.mxu0 0.0
  %1080 = vmatpush1.msra.mxu0 0.0
  %1081 = vmatprep.subr.mxu0 0.0
  %1082 = vmatpush1.msra.mxu0 0.0
  %1083 = vmatprep.subr.mxu0 0.0
  %1084 = vmatpush1.msra.mxu0 0.0
  %1085 = vmatprep.subr.mxu0 0.0
  %1086 = vmatpush1.msra.mxu0 0.0
  %1087 = vmatprep.subr.mxu0 0.0
  %1088 = vmatpush1.msra.mxu0 0.0
  %1089 = vmatprep.subr.mxu0 0.0
  %1090 = vmatpush1.msra.mxu0 0.0
  %1091 = vmatprep.subr.mxu0 0.0
  %1092 = vmatpush1.msra.mxu0 0.0
  %1093 = vmatprep.subr.mxu0 0.0
  %1094 = vmatpush1.msra.mxu0 0.0
  %1095 = vmatprep.subr.mxu0 0.0
  %1096 = vmatpush1.msra.mxu0 0.0
  %1097 = vmatprep.subr.mxu0 0.0
  %1098 = vmatpush1.msra.mxu0 0.0
  %1099 = vmatprep.subr.mxu0 0.0
  %1100 = vmatpush1.msra.mxu0 %v548
  %1101 = vmatprep.subr.mxu0 0.0
  %1102 = vmatpush1.msra.mxu0 %v547
  %1103 = vmatprep.subr.mxu0 0.0
  %1104 = vmatpush1.msra.mxu0 %v546
  %1105 = vmatprep.subr.mxu0 0.0
  %1106 = vmatpush1.msra.mxu0 %v545
  %1107 = vmatprep.subr.mxu0 0.0
  %1108 = vmatpush2.msra.mxu0 0.0
  %1109 = vmatprep.subr.mxu0 0.0
  %1110 = vmatpush2.msra.mxu0 0.0
  %1111 = vmatprep.subr.mxu0 0.0
  %1112 = vmatpush2.msra.mxu0 0.0
  %1113 = vmatprep.subr.mxu0 0.0
  %1114 = vmatpush2.msra.mxu0 0.0
  %1115 = vmatprep.subr.mxu0 0.0
  %1116 = vmatpush2.msra.mxu0 0.0
  %1117 = vmatprep.subr.mxu0 0.0
  %1118 = vmatpush2.msra.mxu0 0.0
  %1119 = vmatprep.subr.mxu0 0.0
  %1120 = vmatpush2.msra.mxu0 0.0
  %1121 = vmatprep.subr.mxu0 0.0
  %1122 = vmatpush2.msra.mxu0 0.0
  %1123 = vmatprep.subr.mxu0 0.0
  %1124 = vmatpush2.msra.mxu0 0.0
  %1125 = vmatprep.subr.mxu0 0.0
  %1126 = vmatpush2.msra.mxu0 0.0
  %1127 = vmatprep.subr.mxu0 0.0
  %1128 = vmatpush2.msra.mxu0 0.0
  %1129 = vmatprep.subr.mxu0 0.0
  %1130 = vmatpush2.msra.mxu0 0.0
  %1131 = vmatprep.subr.mxu0 0.0
  %1132 = vmatpush2.msra.mxu0 0.0
  %1133 = vmatprep.subr.mxu0 0.0
  %1134 = vmatpush2.msra.mxu0 0.0
  %1135 = vmatprep.subr.mxu0 0.0
  %1136 = vmatpush2.msra.mxu0 0.0
  %1137 = vmatprep.subr.mxu0 0.0
  %1138 = vmatpush2.msra.mxu0 0.0
  %1139 = vmatprep.mubr.f32.mxu0 0.0
  %1140 = vmatmul.mubr.f32.gmra.mxu0 %v1073
  %v1141 = vpop.f32.mrf.mxu0
  %v1142 = vadd.f32 %v573, %v1141
  %v1143 = vpop.f32.mrf.mxu0
  %1144 = vdwg.mxu0
  %v1145 = vmax.f32 %v1142, 0.0
  %v1146 = vmul.f32 %v1145, %v653
  %v1147 = vsel %vm302, %v1146, 0.0
  %1148 = vadd.xlane.f32.xlu0 %v1147
  %v1149 = vpop.xlane.xlu0 %1148
  %v1150 = vadd.f32 %v1149, %v663
  %v1151 = vlaneseq
  %v1152 = vshrl.u32 %v1151, 7
  %v1153 = vsub.s32 0, %v1152
  %v1154 = vrot.slane %v1065, %v1153
  %v1155 = vadd.f32 %v1154, %v542
  %v1156 = vmax.f32 %v1155, 0.0
  %v1158 = vsel %vm302, %v1156, 0
  %1160 = vmatprep.subr.mxu0 0.0
  %1161 = vmatpush1.msra.mxu0 0.0
  %1162 = vmatprep.subr.mxu0 0.0
  %1163 = vmatpush1.msra.mxu0 0.0
  %1164 = vmatprep.subr.mxu0 0.0
  %1165 = vmatpush1.msra.mxu0 0.0
  %1166 = vmatprep.subr.mxu0 0.0
  %1167 = vmatpush1.msra.mxu0 0.0
  %1168 = vmatprep.subr.mxu0 0.0
  %1169 = vmatpush1.msra.mxu0 0.0
  %1170 = vmatprep.subr.mxu0 0.0
  %1171 = vmatpush1.msra.mxu0 0.0
  %1172 = vmatprep.subr.mxu0 0.0
  %1173 = vmatpush1.msra.mxu0 0.0
  %1174 = vmatprep.subr.mxu0 0.0
  %1175 = vmatpush1.msra.mxu0 0.0
  %1176 = vmatprep.subr.mxu0 0.0
  %1177 = vmatpush1.msra.mxu0 0.0
  %1178 = vmatprep.subr.mxu0 0.0
  %1179 = vmatpush1.msra.mxu0 0.0
  %1180 = vmatprep.subr.mxu0 0.0
  %1181 = vmatpush1.msra.mxu0 0.0
  %1182 = vmatprep.subr.mxu0 0.0
  %1183 = vmatpush1.msra.mxu0 0.0
  %1184 = vmatprep.subr.mxu0 0.0
  %1185 = vmatpush1.msra.mxu0 %v555
  %1186 = vmatprep.subr.mxu0 0.0
  %1187 = vmatpush1.msra.mxu0 %v554
  %1188 = vmatprep.subr.mxu0 0.0
  %1189 = vmatpush1.msra.mxu0 %v553
  %1190 = vmatprep.subr.mxu0 0.0
  %1191 = vmatpush1.msra.mxu0 %v552
  %1192 = vmatprep.subr.mxu0 0.0
  %1193 = vmatpush2.msra.mxu0 0.0
  %1194 = vmatprep.subr.mxu0 0.0
  %1195 = vmatpush2.msra.mxu0 0.0
  %1196 = vmatprep.subr.mxu0 0.0
  %1197 = vmatpush2.msra.mxu0 0.0
  %1198 = vmatprep.subr.mxu0 0.0
  %1199 = vmatpush2.msra.mxu0 0.0
  %1200 = vmatprep.subr.mxu0 0.0
  %1201 = vmatpush2.msra.mxu0 0.0
  %1202 = vmatprep.subr.mxu0 0.0
  %1203 = vmatpush2.msra.mxu0 0.0
  %1204 = vmatprep.subr.mxu0 0.0
  %1205 = vmatpush2.msra.mxu0 0.0
  %1206 = vmatprep.subr.mxu0 0.0
  %1207 = vmatpush2.msra.mxu0 0.0
  %1208 = vmatprep.subr.mxu0 0.0
  %1209 = vmatpush2.msra.mxu0 0.0
  %1210 = vmatprep.subr.mxu0 0.0
  %1211 = vmatpush2.msra.mxu0 0.0
  %1212 = vmatprep.subr.mxu0 0.0
  %1213 = vmatpush2.msra.mxu0 0.0
  %1214 = vmatprep.subr.mxu0 0.0
  %1215 = vmatpush2.msra.mxu0 0.0
  %1216 = vmatprep.subr.mxu0 0.0
  %1217 = vmatpush2.msra.mxu0 0.0
  %1218 = vmatprep.subr.mxu0 0.0
  %1219 = vmatpush2.msra.mxu0 0.0
  %1220 = vmatprep.subr.mxu0 0.0
  %1221 = vmatpush2.msra.mxu0 0.0
  %1222 = vmatprep.subr.mxu0 0.0
  %1223 = vmatpush2.msra.mxu0 0.0
  %1224 = vmatprep.mubr.f32.mxu0 0.0
  %1225 = vmatmul.mubr.f32.gmra.mxu0 %v1158
  %v1226 = vpop.f32.mrf.mxu0
  %v1227 = vadd.f32 %v676, %v1226
  %v1228 = vpop.f32.mrf.mxu0
  %1229 = vdwg.mxu0
  %v1230 = vmax.f32 %v1227, 0.0
  %v1231 = vmul.f32 %v1230, %v756
  %v1232 = vsel %vm302, %v1231, 0.0
  %1233 = vadd.xlane.f32.xlu0 %v1232
  %v1234 = vpop.xlane.xlu0 %1233
  %v1235 = vadd.f32 %v1234, %v766
  %vm1236 = vcmp.eq.s32.totalorder %v560, 2
  %v1237 = vsel %vm1236, %v1150, 0.0
  %v1238 = vsel %vm771, %v1237, 0.0
  %v1239 = vrot.slane %v1238, 4
  %v1240 = vadd.f32 %v1238, %v1239
  %v1241 = vrot.slane %v1240, 2
  %v1242 = vadd.f32 %v1240, %v1241
  %v1243 = vrot.slane %v1242, 1
  %v1244 = vadd.f32 %v1242, %v1243
  %v1245 = vsel %vm771, %v1150, -inf
  %v1246 = vrot.slane %v1245, 4
  %v1247 = vmax.f32 %v1245, %v1246
  %v1248 = vrot.slane %v1247, 2
  %v1249 = vmax.f32 %v1247, %v1248
  %v1250 = vrot.slane %v1249, 1
  %v1251 = vmax.f32 %v1249, %v1250
  %v1252 = vsub.f32 %v1150, %v1251
  %v1253 = vmul.f32 %v1252, 1.442695
  %v1254 = vpow.pop %v1253
  %v1255 = vsel %vm771, %v1254, 0.0
  %v1256 = vrot.slane %v1255, 4
  %v1257 = vadd.f32 %v1255, %v1256
  %v1258 = vrot.slane %v1257, 2
  %v1259 = vadd.f32 %v1257, %v1258
  %v1260 = vrot.slane %v1259, 1
  %v1261 = vadd.f32 %v1259, %v1260
  %v1262 = vlog2.pop %v1261
  %v1263 = vmul.f32 %v1262, 0.6931472
  %v1264 = vadd.f32 %v1251, %v1263
  %v1265 = vsub.f32 %v1244, %v1264
  %v1266 = vadd.f32 %v1033, %v1265
  %v1267 = vsel %vm1236, %v1235, 0.0
  %v1268 = vsel %vm771, %v1267, 0.0
  %v1269 = vrot.slane %v1268, 4
  %v1270 = vadd.f32 %v1268, %v1269
  %v1271 = vrot.slane %v1270, 2
  %v1272 = vadd.f32 %v1270, %v1271
  %v1273 = vrot.slane %v1272, 1
  %v1274 = vadd.f32 %v1272, %v1273
  %v1275 = vsel %vm771, %v1235, -inf
  %v1276 = vrot.slane %v1275, 4
  %v1277 = vmax.f32 %v1275, %v1276
  %v1278 = vrot.slane %v1277, 2
  %v1279 = vmax.f32 %v1277, %v1278
  %v1280 = vrot.slane %v1279, 1
  %v1281 = vmax.f32 %v1279, %v1280
  %v1282 = vsub.f32 %v1235, %v1281
  %v1283 = vmul.f32 %v1282, 1.442695
  %v1284 = vpow.pop %v1283
  %v1285 = vsel %vm771, %v1284, 0.0
  %v1286 = vrot.slane %v1285, 4
  %v1287 = vadd.f32 %v1285, %v1286
  %v1288 = vrot.slane %v1287, 2
  %v1289 = vadd.f32 %v1287, %v1288
  %v1290 = vrot.slane %v1289, 1
  %v1291 = vadd.f32 %v1289, %v1290
  %v1292 = vlog2.pop %v1291
  %v1293 = vmul.f32 %v1292, 0.6931472
  %v1294 = vadd.f32 %v1281, %v1293
  %v1295 = vsub.f32 %v1274, %v1294
  %v1296 = vadd.f32 %v1063, %v1295
  %v1297 = vld [vmem:[#allocation2 + $0x3] sm:$0x1]
  %v1298 = vld [vmem:[#allocation3 + $0x3] sm:$0x1]
  %v1299 = vlaneseq
  %v1300 = vshrl.u32 %v1299, 7
  %v1301 = vsub.s32 0, %v1300
  %v1302 = vrot.slane %v1297, %v1301
  %v1303 = vadd.f32 %v1302, %v462
  %v1304 = vmax.f32 %v1303, 0.0
  %v1306 = vsel %vm302, %v1304, 0
  %1308 = vmatprep.subr.mxu0 0.0
  %1309 = vmatpush1.msra.mxu0 0.0
  %1310 = vmatprep.subr.mxu0 0.0
  %1311 = vmatpush1.msra.mxu0 0.0
  %1312 = vmatprep.subr.mxu0 0.0
  %1313 = vmatpush1.msra.mxu0 0.0
  %1314 = vmatprep.subr.mxu0 0.0
  %1315 = vmatpush1.msra.mxu0 0.0
  %1316 = vmatprep.subr.mxu0 0.0
  %1317 = vmatpush1.msra.mxu0 0.0
  %1318 = vmatprep.subr.mxu0 0.0
  %1319 = vmatpush1.msra.mxu0 0.0
  %1320 = vmatprep.subr.mxu0 0.0
  %1321 = vmatpush1.msra.mxu0 0.0
  %1322 = vmatprep.subr.mxu0 0.0
  %1323 = vmatpush1.msra.mxu0 0.0
  %1324 = vmatprep.subr.mxu0 0.0
  %1325 = vmatpush1.msra.mxu0 0.0
  %1326 = vmatprep.subr.mxu0 0.0
  %1327 = vmatpush1.msra.mxu0 0.0
  %1328 = vmatprep.subr.mxu0 0.0
  %1329 = vmatpush1.msra.mxu0 0.0
  %1330 = vmatprep.subr.mxu0 0.0
  %1331 = vmatpush1.msra.mxu0 0.0
  %1332 = vmatprep.subr.mxu0 0.0
  %1333 = vmatpush1.msra.mxu0 %v548
  %1334 = vmatprep.subr.mxu0 0.0
  %1335 = vmatpush1.msra.mxu0 %v547
  %1336 = vmatprep.subr.mxu0 0.0
  %1337 = vmatpush1.msra.mxu0 %v546
  %1338 = vmatprep.subr.mxu0 0.0
  %1339 = vmatpush1.msra.mxu0 %v545
  %1340 = vmatprep.subr.mxu0 0.0
  %1341 = vmatpush2.msra.mxu0 0.0
  %1342 = vmatprep.subr.mxu0 0.0
  %1343 = vmatpush2.msra.mxu0 0.0
  %1344 = vmatprep.subr.mxu0 0.0
  %1345 = vmatpush2.msra.mxu0 0.0
  %1346 = vmatprep.subr.mxu0 0.0
  %1347 = vmatpush2.msra.mxu0 0.0
  %1348 = vmatprep.subr.mxu0 0.0
  %1349 = vmatpush2.msra.mxu0 0.0
  %1350 = vmatprep.subr.mxu0 0.0
  %1351 = vmatpush2.msra.mxu0 0.0
  %1352 = vmatprep.subr.mxu0 0.0
  %1353 = vmatpush2.msra.mxu0 0.0
  %1354 = vmatprep.subr.mxu0 0.0
  %1355 = vmatpush2.msra.mxu0 0.0
  %1356 = vmatprep.subr.mxu0 0.0
  %1357 = vmatpush2.msra.mxu0 0.0
  %1358 = vmatprep.subr.mxu0 0.0
  %1359 = vmatpush2.msra.mxu0 0.0
  %1360 = vmatprep.subr.mxu0 0.0
  %1361 = vmatpush2.msra.mxu0 0.0
  %1362 = vmatprep.subr.mxu0 0.0
  %1363 = vmatpush2.msra.mxu0 0.0
  %1364 = vmatprep.subr.mxu0 0.0
  %1365 = vmatpush2.msra.mxu0 0.0
  %1366 = vmatprep.subr.mxu0 0.0
  %1367 = vmatpush2.msra.mxu0 0.0
  %1368 = vmatprep.subr.mxu0 0.0
  %1369 = vmatpush2.msra.mxu0 0.0
  %1370 = vmatprep.subr.mxu0 0.0
  %1371 = vmatpush2.msra.mxu0 0.0
  %1372 = vmatprep.mubr.f32.mxu0 0.0
  %1373 = vmatmul.mubr.f32.gmra.mxu0 %v1306
  %v1374 = vpop.f32.mrf.mxu0
  %v1375 = vadd.f32 %v573, %v1374
  %v1376 = vpop.f32.mrf.mxu0
  %1377 = vdwg.mxu0
  %v1378 = vmax.f32 %v1375, 0.0
  %v1379 = vmul.f32 %v1378, %v653
  %v1380 = vsel %vm302, %v1379, 0.0
  %1381 = vadd.xlane.f32.xlu0 %v1380
  %v1382 = vpop.xlane.xlu0 %1381
  %v1383 = vadd.f32 %v1382, %v663
  %v1384 = vlaneseq
  %v1385 = vshrl.u32 %v1384, 7
  %v1386 = vsub.s32 0, %v1385
  %v1387 = vrot.slane %v1298, %v1386
  %v1388 = vadd.f32 %v1387, %v542
  %v1389 = vmax.f32 %v1388, 0.0
  %v1391 = vsel %vm302, %v1389, 0
  %1393 = vmatprep.subr.mxu0 0.0
  %1394 = vmatpush1.msra.mxu0 0.0
  %1395 = vmatprep.subr.mxu0 0.0
  %1396 = vmatpush1.msra.mxu0 0.0
  %1397 = vmatprep.subr.mxu0 0.0
  %1398 = vmatpush1.msra.mxu0 0.0
  %1399 = vmatprep.subr.mxu0 0.0
  %1400 = vmatpush1.msra.mxu0 0.0
  %1401 = vmatprep.subr.mxu0 0.0
  %1402 = vmatpush1.msra.mxu0 0.0
  %1403 = vmatprep.subr.mxu0 0.0
  %1404 = vmatpush1.msra.mxu0 0.0
  %1405 = vmatprep.subr.mxu0 0.0
  %1406 = vmatpush1.msra.mxu0 0.0
  %1407 = vmatprep.subr.mxu0 0.0
  %1408 = vmatpush1.msra.mxu0 0.0
  %1409 = vmatprep.subr.mxu0 0.0
  %1410 = vmatpush1.msra.mxu0 0.0
  %1411 = vmatprep.subr.mxu0 0.0
  %1412 = vmatpush1.msra.mxu0 0.0
  %1413 = vmatprep.subr.mxu0 0.0
  %1414 = vmatpush1.msra.mxu0 0.0
  %1415 = vmatprep.subr.mxu0 0.0
  %1416 = vmatpush1.msra.mxu0 0.0
  %1417 = vmatprep.subr.mxu0 0.0
  %1418 = vmatpush1.msra.mxu0 %v555
  %1419 = vmatprep.subr.mxu0 0.0
  %1420 = vmatpush1.msra.mxu0 %v554
  %1421 = vmatprep.subr.mxu0 0.0
  %1422 = vmatpush1.msra.mxu0 %v553
  %1423 = vmatprep.subr.mxu0 0.0
  %1424 = vmatpush1.msra.mxu0 %v552
  %1425 = vmatprep.subr.mxu0 0.0
  %1426 = vmatpush2.msra.mxu0 0.0
  %1427 = vmatprep.subr.mxu0 0.0
  %1428 = vmatpush2.msra.mxu0 0.0
  %1429 = vmatprep.subr.mxu0 0.0
  %1430 = vmatpush2.msra.mxu0 0.0
  %1431 = vmatprep.subr.mxu0 0.0
  %1432 = vmatpush2.msra.mxu0 0.0
  %1433 = vmatprep.subr.mxu0 0.0
  %1434 = vmatpush2.msra.mxu0 0.0
  %1435 = vmatprep.subr.mxu0 0.0
  %1436 = vmatpush2.msra.mxu0 0.0
  %1437 = vmatprep.subr.mxu0 0.0
  %1438 = vmatpush2.msra.mxu0 0.0
  %1439 = vmatprep.subr.mxu0 0.0
  %1440 = vmatpush2.msra.mxu0 0.0
  %1441 = vmatprep.subr.mxu0 0.0
  %1442 = vmatpush2.msra.mxu0 0.0
  %1443 = vmatprep.subr.mxu0 0.0
  %1444 = vmatpush2.msra.mxu0 0.0
  %1445 = vmatprep.subr.mxu0 0.0
  %1446 = vmatpush2.msra.mxu0 0.0
  %1447 = vmatprep.subr.mxu0 0.0
  %1448 = vmatpush2.msra.mxu0 0.0
  %1449 = vmatprep.subr.mxu0 0.0
  %1450 = vmatpush2.msra.mxu0 0.0
  %1451 = vmatprep.subr.mxu0 0.0
  %1452 = vmatpush2.msra.mxu0 0.0
  %1453 = vmatprep.subr.mxu0 0.0
  %1454 = vmatpush2.msra.mxu0 0.0
  %1455 = vmatprep.subr.mxu0 0.0
  %1456 = vmatpush2.msra.mxu0 0.0
  %1457 = vmatprep.mubr.f32.mxu0 0.0
  %1458 = vmatmul.mubr.f32.gmra.mxu0 %v1391
  %v1459 = vpop.f32.mrf.mxu0
  %v1460 = vadd.f32 %v676, %v1459
  %v1461 = vpop.f32.mrf.mxu0
  %1462 = vdwg.mxu0
  %v1463 = vmax.f32 %v1460, 0.0
  %v1464 = vmul.f32 %v1463, %v756
  %v1465 = vsel %vm302, %v1464, 0.0
  %1466 = vadd.xlane.f32.xlu0 %v1465
  %v1467 = vpop.xlane.xlu0 %1466
  %v1468 = vadd.f32 %v1467, %v766
  %vm1469 = vcmp.eq.s32.totalorder %v560, 3
  %v1470 = vsel %vm1469, %v1383, 0.0
  %v1471 = vsel %vm771, %v1470, 0.0
  %v1472 = vrot.slane %v1471, 4
  %v1473 = vadd.f32 %v1471, %v1472
  %v1474 = vrot.slane %v1473, 2
  %v1475 = vadd.f32 %v1473, %v1474
  %v1476 = vrot.slane %v1475, 1
  %v1477 = vadd.f32 %v1475, %v1476
  %v1478 = vsel %vm771, %v1383, -inf
  %v1479 = vrot.slane %v1478, 4
  %v1480 = vmax.f32 %v1478, %v1479
  %v1481 = vrot.slane %v1480, 2
  %v1482 = vmax.f32 %v1480, %v1481
  %v1483 = vrot.slane %v1482, 1
  %v1484 = vmax.f32 %v1482, %v1483
  %v1485 = vsub.f32 %v1383, %v1484
  %v1486 = vmul.f32 %v1485, 1.442695
  %v1487 = vpow.pop %v1486
  %v1488 = vsel %vm771, %v1487, 0.0
  %v1489 = vrot.slane %v1488, 4
  %v1490 = vadd.f32 %v1488, %v1489
  %v1491 = vrot.slane %v1490, 2
  %v1492 = vadd.f32 %v1490, %v1491
  %v1493 = vrot.slane %v1492, 1
  %v1494 = vadd.f32 %v1492, %v1493
  %v1495 = vlog2.pop %v1494
  %v1496 = vmul.f32 %v1495, 0.6931472
  %v1497 = vadd.f32 %v1484, %v1496
  %v1498 = vsub.f32 %v1477, %v1497
  %v1499 = vadd.f32 %v1266, %v1498
  %v1500 = vsel %vm1469, %v1468, 0.0
  %v1501 = vsel %vm771, %v1500, 0.0
  %v1502 = vrot.slane %v1501, 4
  %v1503 = vadd.f32 %v1501, %v1502
  %v1504 = vrot.slane %v1503, 2
  %v1505 = vadd.f32 %v1503, %v1504
  %v1506 = vrot.slane %v1505, 1
  %v1507 = vadd.f32 %v1505, %v1506
  %v1508 = vsel %vm771, %v1468, -inf
  %v1509 = vrot.slane %v1508, 4
  %v1510 = vmax.f32 %v1508, %v1509
  %v1511 = vrot.slane %v1510, 2
  %v1512 = vmax.f32 %v1510, %v1511
  %v1513 = vrot.slane %v1512, 1
  %v1514 = vmax.f32 %v1512, %v1513
  %v1515 = vsub.f32 %v1468, %v1514
  %v1516 = vmul.f32 %v1515, 1.442695
  %v1517 = vpow.pop %v1516
  %v1518 = vsel %vm771, %v1517, 0.0
  %v1519 = vrot.slane %v1518, 4
  %v1520 = vadd.f32 %v1518, %v1519
  %v1521 = vrot.slane %v1520, 2
  %v1522 = vadd.f32 %v1520, %v1521
  %v1523 = vrot.slane %v1522, 1
  %v1524 = vadd.f32 %v1522, %v1523
  %v1525 = vlog2.pop %v1524
  %v1526 = vmul.f32 %v1525, 0.6931472
  %v1527 = vadd.f32 %v1514, %v1526
  %v1528 = vsub.f32 %v1507, %v1527
  %v1529 = vadd.f32 %v1296, %v1528
  %v1530 = vld [vmem:[#allocation2 + $0x4] sm:$0x1]
  %v1531 = vld [vmem:[#allocation3 + $0x4] sm:$0x1]
  %v1532 = vlaneseq
  %v1533 = vshrl.u32 %v1532, 7
  %v1534 = vsub.s32 0, %v1533
  %v1535 = vrot.slane %v1530, %v1534
  %v1536 = vadd.f32 %v1535, %v462
  %v1537 = vmax.f32 %v1536, 0.0
  %v1539 = vsel %vm302, %v1537, 0
  %1541 = vmatprep.subr.mxu0 0.0
  %1542 = vmatpush1.msra.mxu0 0.0
  %1543 = vmatprep.subr.mxu0 0.0
  %1544 = vmatpush1.msra.mxu0 0.0
  %1545 = vmatprep.subr.mxu0 0.0
  %1546 = vmatpush1.msra.mxu0 0.0
  %1547 = vmatprep.subr.mxu0 0.0
  %1548 = vmatpush1.msra.mxu0 0.0
  %1549 = vmatprep.subr.mxu0 0.0
  %1550 = vmatpush1.msra.mxu0 0.0
  %1551 = vmatprep.subr.mxu0 0.0
  %1552 = vmatpush1.msra.mxu0 0.0
  %1553 = vmatprep.subr.mxu0 0.0
  %1554 = vmatpush1.msra.mxu0 0.0
  %1555 = vmatprep.subr.mxu0 0.0
  %1556 = vmatpush1.msra.mxu0 0.0
  %1557 = vmatprep.subr.mxu0 0.0
  %1558 = vmatpush1.msra.mxu0 0.0
  %1559 = vmatprep.subr.mxu0 0.0
  %1560 = vmatpush1.msra.mxu0 0.0
  %1561 = vmatprep.subr.mxu0 0.0
  %1562 = vmatpush1.msra.mxu0 0.0
  %1563 = vmatprep.subr.mxu0 0.0
  %1564 = vmatpush1.msra.mxu0 0.0
  %1565 = vmatprep.subr.mxu0 0.0
  %1566 = vmatpush1.msra.mxu0 %v548
  %1567 = vmatprep.subr.mxu0 0.0
  %1568 = vmatpush1.msra.mxu0 %v547
  %1569 = vmatprep.subr.mxu0 0.0
  %1570 = vmatpush1.msra.mxu0 %v546
  %1571 = vmatprep.subr.mxu0 0.0
  %1572 = vmatpush1.msra.mxu0 %v545
  %1573 = vmatprep.subr.mxu0 0.0
  %1574 = vmatpush2.msra.mxu0 0.0
  %1575 = vmatprep.subr.mxu0 0.0
  %1576 = vmatpush2.msra.mxu0 0.0
  %1577 = vmatprep.subr.mxu0 0.0
  %1578 = vmatpush2.msra.mxu0 0.0
  %1579 = vmatprep.subr.mxu0 0.0
  %1580 = vmatpush2.msra.mxu0 0.0
  %1581 = vmatprep.subr.mxu0 0.0
  %1582 = vmatpush2.msra.mxu0 0.0
  %1583 = vmatprep.subr.mxu0 0.0
  %1584 = vmatpush2.msra.mxu0 0.0
  %1585 = vmatprep.subr.mxu0 0.0
  %1586 = vmatpush2.msra.mxu0 0.0
  %1587 = vmatprep.subr.mxu0 0.0
  %1588 = vmatpush2.msra.mxu0 0.0
  %1589 = vmatprep.subr.mxu0 0.0
  %1590 = vmatpush2.msra.mxu0 0.0
  %1591 = vmatprep.subr.mxu0 0.0
  %1592 = vmatpush2.msra.mxu0 0.0
  %1593 = vmatprep.subr.mxu0 0.0
  %1594 = vmatpush2.msra.mxu0 0.0
  %1595 = vmatprep.subr.mxu0 0.0
  %1596 = vmatpush2.msra.mxu0 0.0
  %1597 = vmatprep.subr.mxu0 0.0
  %1598 = vmatpush2.msra.mxu0 0.0
  %1599 = vmatprep.subr.mxu0 0.0
  %1600 = vmatpush2.msra.mxu0 0.0
  %1601 = vmatprep.subr.mxu0 0.0
  %1602 = vmatpush2.msra.mxu0 0.0
  %1603 = vmatprep.subr.mxu0 0.0
  %1604 = vmatpush2.msra.mxu0 0.0
  %1605 = vmatprep.mubr.f32.mxu0 0.0
  %1606 = vmatmul.mubr.f32.gmra.mxu0 %v1539
  %v1607 = vpop.f32.mrf.mxu0
  %v1608 = vadd.f32 %v573, %v1607
  %v1609 = vpop.f32.mrf.mxu0
  %1610 = vdwg.mxu0
  %v1611 = vmax.f32 %v1608, 0.0
  %v1612 = vmul.f32 %v1611, %v653
  %v1613 = vsel %vm302, %v1612, 0.0
  %1614 = vadd.xlane.f32.xlu0 %v1613
  %v1615 = vpop.xlane.xlu0 %1614
  %v1616 = vadd.f32 %v1615, %v663
  %v1617 = vlaneseq
  %v1618 = vshrl.u32 %v1617, 7
  %v1619 = vsub.s32 0, %v1618
  %v1620 = vrot.slane %v1531, %v1619
  %v1621 = vadd.f32 %v1620, %v542
  %v1622 = vmax.f32 %v1621, 0.0
  %v1624 = vsel %vm302, %v1622, 0
  %1626 = vmatprep.subr.mxu0 0.0
  %1627 = vmatpush1.msra.mxu0 0.0
  %1628 = vmatprep.subr.mxu0 0.0
  %1629 = vmatpush1.msra.mxu0 0.0
  %1630 = vmatprep.subr.mxu0 0.0
  %1631 = vmatpush1.msra.mxu0 0.0
  %1632 = vmatprep.subr.mxu0 0.0
  %1633 = vmatpush1.msra.mxu0 0.0
  %1634 = vmatprep.subr.mxu0 0.0
  %1635 = vmatpush1.msra.mxu0 0.0
  %1636 = vmatprep.subr.mxu0 0.0
  %1637 = vmatpush1.msra.mxu0 0.0
  %1638 = vmatprep.subr.mxu0 0.0
  %1639 = vmatpush1.msra.mxu0 0.0
  %1640 = vmatprep.subr.mxu0 0.0
  %1641 = vmatpush1.msra.mxu0 0.0
  %1642 = vmatprep.subr.mxu0 0.0
  %1643 = vmatpush1.msra.mxu0 0.0
  %1644 = vmatprep.subr.mxu0 0.0
  %1645 = vmatpush1.msra.mxu0 0.0
  %1646 = vmatprep.subr.mxu0 0.0
  %1647 = vmatpush1.msra.mxu0 0.0
  %1648 = vmatprep.subr.mxu0 0.0
  %1649 = vmatpush1.msra.mxu0 0.0
  %1650 = vmatprep.subr.mxu0 0.0
  %1651 = vmatpush1.msra.mxu0 %v555
  %1652 = vmatprep.subr.mxu0 0.0
  %1653 = vmatpush1.msra.mxu0 %v554
  %1654 = vmatprep.subr.mxu0 0.0
  %1655 = vmatpush1.msra.mxu0 %v553
  %1656 = vmatprep.subr.mxu0 0.0
  %1657 = vmatpush1.msra.mxu0 %v552
  %1658 = vmatprep.subr.mxu0 0.0
  %1659 = vmatpush2.msra.mxu0 0.0
  %1660 = vmatprep.subr.mxu0 0.0
  %1661 = vmatpush2.msra.mxu0 0.0
  %1662 = vmatprep.subr.mxu0 0.0
  %1663 = vmatpush2.msra.mxu0 0.0
  %1664 = vmatprep.subr.mxu0 0.0
  %1665 = vmatpush2.msra.mxu0 0.0
  %1666 = vmatprep.subr.mxu0 0.0
  %1667 = vmatpush2.msra.mxu0 0.0
  %1668 = vmatprep.subr.mxu0 0.0
  %1669 = vmatpush2.msra.mxu0 0.0
  %1670 = vmatprep.subr.mxu0 0.0
  %1671 = vmatpush2.msra.mxu0 0.0
  %1672 = vmatprep.subr.mxu0 0.0
  %1673 = vmatpush2.msra.mxu0 0.0
  %1674 = vmatprep.subr.mxu0 0.0
  %1675 = vmatpush2.msra.mxu0 0.0
  %1676 = vmatprep.subr.mxu0 0.0
  %1677 = vmatpush2.msra.mxu0 0.0
  %1678 = vmatprep.subr.mxu0 0.0
  %1679 = vmatpush2.msra.mxu0 0.0
  %1680 = vmatprep.subr.mxu0 0.0
  %1681 = vmatpush2.msra.mxu0 0.0
  %1682 = vmatprep.subr.mxu0 0.0
  %1683 = vmatpush2.msra.mxu0 0.0
  %1684 = vmatprep.subr.mxu0 0.0
  %1685 = vmatpush2.msra.mxu0 0.0
  %1686 = vmatprep.subr.mxu0 0.0
  %1687 = vmatpush2.msra.mxu0 0.0
  %1688 = vmatprep.subr.mxu0 0.0
  %1689 = vmatpush2.msra.mxu0 0.0
  %1690 = vmatprep.mubr.f32.mxu0 0.0
  %1691 = vmatmul.mubr.f32.gmra.mxu0 %v1624
  %v1692 = vpop.f32.mrf.mxu0
  %v1693 = vadd.f32 %v676, %v1692
  %v1694 = vpop.f32.mrf.mxu0
  %1695 = vdwg.mxu0
  %v1696 = vmax.f32 %v1693, 0.0
  %v1697 = vmul.f32 %v1696, %v756
  %v1698 = vsel %vm302, %v1697, 0.0
  %1699 = vadd.xlane.f32.xlu0 %v1698
  %v1700 = vpop.xlane.xlu0 %1699
  %v1701 = vadd.f32 %v1700, %v766
  %vm1702 = vcmp.eq.s32.totalorder %v560, 4
  %v1703 = vsel %vm1702, %v1616, 0.0
  %v1704 = vsel %vm771, %v1703, 0.0
  %v1705 = vrot.slane %v1704, 4
  %v1706 = vadd.f32 %v1704, %v1705
  %v1707 = vrot.slane %v1706, 2
  %v1708 = vadd.f32 %v1706, %v1707
  %v1709 = vrot.slane %v1708, 1
  %v1710 = vadd.f32 %v1708, %v1709
  %v1711 = vsel %vm771, %v1616, -inf
  %v1712 = vrot.slane %v1711, 4
  %v1713 = vmax.f32 %v1711, %v1712
  %v1714 = vrot.slane %v1713, 2
  %v1715 = vmax.f32 %v1713, %v1714
  %v1716 = vrot.slane %v1715, 1
  %v1717 = vmax.f32 %v1715, %v1716
  %v1718 = vsub.f32 %v1616, %v1717
  %v1719 = vmul.f32 %v1718, 1.442695
  %v1720 = vpow.pop %v1719
  %v1721 = vsel %vm771, %v1720, 0.0
  %v1722 = vrot.slane %v1721, 4
  %v1723 = vadd.f32 %v1721, %v1722
  %v1724 = vrot.slane %v1723, 2
  %v1725 = vadd.f32 %v1723, %v1724
  %v1726 = vrot.slane %v1725, 1
  %v1727 = vadd.f32 %v1725, %v1726
  %v1728 = vlog2.pop %v1727
  %v1729 = vmul.f32 %v1728, 0.6931472
  %v1730 = vadd.f32 %v1717, %v1729
  %v1731 = vsub.f32 %v1710, %v1730
  %v1732 = vadd.f32 %v1499, %v1731
  %v1733 = vsel %vm1702, %v1701, 0.0
  %v1734 = vsel %vm771, %v1733, 0.0
  %v1735 = vrot.slane %v1734, 4
  %v1736 = vadd.f32 %v1734, %v1735
  %v1737 = vrot.slane %v1736, 2
  %v1738 = vadd.f32 %v1736, %v1737
  %v1739 = vrot.slane %v1738, 1
  %v1740 = vadd.f32 %v1738, %v1739
  %v1741 = vsel %vm771, %v1701, -inf
  %v1742 = vrot.slane %v1741, 4
  %v1743 = vmax.f32 %v1741, %v1742
  %v1744 = vrot.slane %v1743, 2
  %v1745 = vmax.f32 %v1743, %v1744
  %v1746 = vrot.slane %v1745, 1
  %v1747 = vmax.f32 %v1745, %v1746
  %v1748 = vsub.f32 %v1701, %v1747
  %v1749 = vmul.f32 %v1748, 1.442695
  %v1750 = vpow.pop %v1749
  %v1751 = vsel %vm771, %v1750, 0.0
  %v1752 = vrot.slane %v1751, 4
  %v1753 = vadd.f32 %v1751, %v1752
  %v1754 = vrot.slane %v1753, 2
  %v1755 = vadd.f32 %v1753, %v1754
  %v1756 = vrot.slane %v1755, 1
  %v1757 = vadd.f32 %v1755, %v1756
  %v1758 = vlog2.pop %v1757
  %v1759 = vmul.f32 %v1758, 0.6931472
  %v1760 = vadd.f32 %v1747, %v1759
  %v1761 = vsub.f32 %v1740, %v1760
  %v1762 = vadd.f32 %v1529, %v1761
  %v1763 = vld [vmem:[#allocation2 + $0x5] sm:$0x1]
  %v1764 = vld [vmem:[#allocation3 + $0x5] sm:$0x1]
  %v1765 = vlaneseq
  %v1766 = vshrl.u32 %v1765, 7
  %v1767 = vsub.s32 0, %v1766
  %v1768 = vrot.slane %v1763, %v1767
  %v1769 = vadd.f32 %v1768, %v462
  %v1770 = vmax.f32 %v1769, 0.0
  %v1772 = vsel %vm302, %v1770, 0
  %1774 = vmatprep.subr.mxu0 0.0
  %1775 = vmatpush1.msra.mxu0 0.0
  %1776 = vmatprep.subr.mxu0 0.0
  %1777 = vmatpush1.msra.mxu0 0.0
  %1778 = vmatprep.subr.mxu0 0.0
  %1779 = vmatpush1.msra.mxu0 0.0
  %1780 = vmatprep.subr.mxu0 0.0
  %1781 = vmatpush1.msra.mxu0 0.0
  %1782 = vmatprep.subr.mxu0 0.0
  %1783 = vmatpush1.msra.mxu0 0.0
  %1784 = vmatprep.subr.mxu0 0.0
  %1785 = vmatpush1.msra.mxu0 0.0
  %1786 = vmatprep.subr.mxu0 0.0
  %1787 = vmatpush1.msra.mxu0 0.0
  %1788 = vmatprep.subr.mxu0 0.0
  %1789 = vmatpush1.msra.mxu0 0.0
  %1790 = vmatprep.subr.mxu0 0.0
  %1791 = vmatpush1.msra.mxu0 0.0
  %1792 = vmatprep.subr.mxu0 0.0
  %1793 = vmatpush1.msra.mxu0 0.0
  %1794 = vmatprep.subr.mxu0 0.0
  %1795 = vmatpush1.msra.mxu0 0.0
  %1796 = vmatprep.subr.mxu0 0.0
  %1797 = vmatpush1.msra.mxu0 0.0
  %1798 = vmatprep.subr.mxu0 0.0
  %1799 = vmatpush1.msra.mxu0 %v548
  %1800 = vmatprep.subr.mxu0 0.0
  %1801 = vmatpush1.msra.mxu0 %v547
  %1802 = vmatprep.subr.mxu0 0.0
  %1803 = vmatpush1.msra.mxu0 %v546
  %1804 = vmatprep.subr.mxu0 0.0
  %1805 = vmatpush1.msra.mxu0 %v545
  %1806 = vmatprep.subr.mxu0 0.0
  %1807 = vmatpush2.msra.mxu0 0.0
  %1808 = vmatprep.subr.mxu0 0.0
  %1809 = vmatpush2.msra.mxu0 0.0
  %1810 = vmatprep.subr.mxu0 0.0
  %1811 = vmatpush2.msra.mxu0 0.0
  %1812 = vmatprep.subr.mxu0 0.0
  %1813 = vmatpush2.msra.mxu0 0.0
  %1814 = vmatprep.subr.mxu0 0.0
  %1815 = vmatpush2.msra.mxu0 0.0
  %1816 = vmatprep.subr.mxu0 0.0
  %1817 = vmatpush2.msra.mxu0 0.0
  %1818 = vmatprep.subr.mxu0 0.0
  %1819 = vmatpush2.msra.mxu0 0.0
  %1820 = vmatprep.subr.mxu0 0.0
  %1821 = vmatpush2.msra.mxu0 0.0
  %1822 = vmatprep.subr.mxu0 0.0
  %1823 = vmatpush2.msra.mxu0 0.0
  %1824 = vmatprep.subr.mxu0 0.0
  %1825 = vmatpush2.msra.mxu0 0.0
  %1826 = vmatprep.subr.mxu0 0.0
  %1827 = vmatpush2.msra.mxu0 0.0
  %1828 = vmatprep.subr.mxu0 0.0
  %1829 = vmatpush2.msra.mxu0 0.0
  %1830 = vmatprep.subr.mxu0 0.0
  %1831 = vmatpush2.msra.mxu0 0.0
  %1832 = vmatprep.subr.mxu0 0.0
  %1833 = vmatpush2.msra.mxu0 0.0
  %1834 = vmatprep.subr.mxu0 0.0
  %1835 = vmatpush2.msra.mxu0 0.0
  %1836 = vmatprep.subr.mxu0 0.0
  %1837 = vmatpush2.msra.mxu0 0.0
  %1838 = vmatprep.mubr.f32.mxu0 0.0
  %1839 = vmatmul.mubr.f32.gmra.mxu0 %v1772
  %v1840 = vpop.f32.mrf.mxu0
  %v1841 = vadd.f32 %v573, %v1840
  %v1842 = vpop.f32.mrf.mxu0
  %1843 = vdwg.mxu0
  %v1844 = vmax.f32 %v1841, 0.0
  %v1845 = vmul.f32 %v1844, %v653
  %v1846 = vsel %vm302, %v1845, 0.0
  %1847 = vadd.xlane.f32.xlu0 %v1846
  %v1848 = vpop.xlane.xlu0 %1847
  %v1849 = vadd.f32 %v1848, %v663
  %v1850 = vlaneseq
  %v1851 = vshrl.u32 %v1850, 7
  %v1852 = vsub.s32 0, %v1851
  %v1853 = vrot.slane %v1764, %v1852
  %v1854 = vadd.f32 %v1853, %v542
  %v1855 = vmax.f32 %v1854, 0.0
  %v1857 = vsel %vm302, %v1855, 0
  %1859 = vmatprep.subr.mxu0 0.0
  %1860 = vmatpush1.msra.mxu0 0.0
  %1861 = vmatprep.subr.mxu0 0.0
  %1862 = vmatpush1.msra.mxu0 0.0
  %1863 = vmatprep.subr.mxu0 0.0
  %1864 = vmatpush1.msra.mxu0 0.0
  %1865 = vmatprep.subr.mxu0 0.0
  %1866 = vmatpush1.msra.mxu0 0.0
  %1867 = vmatprep.subr.mxu0 0.0
  %1868 = vmatpush1.msra.mxu0 0.0
  %1869 = vmatprep.subr.mxu0 0.0
  %1870 = vmatpush1.msra.mxu0 0.0
  %1871 = vmatprep.subr.mxu0 0.0
  %1872 = vmatpush1.msra.mxu0 0.0
  %1873 = vmatprep.subr.mxu0 0.0
  %1874 = vmatpush1.msra.mxu0 0.0
  %1875 = vmatprep.subr.mxu0 0.0
  %1876 = vmatpush1.msra.mxu0 0.0
  %1877 = vmatprep.subr.mxu0 0.0
  %1878 = vmatpush1.msra.mxu0 0.0
  %1879 = vmatprep.subr.mxu0 0.0
  %1880 = vmatpush1.msra.mxu0 0.0
  %1881 = vmatprep.subr.mxu0 0.0
  %1882 = vmatpush1.msra.mxu0 0.0
  %1883 = vmatprep.subr.mxu0 0.0
  %1884 = vmatpush1.msra.mxu0 %v555
  %1885 = vmatprep.subr.mxu0 0.0
  %1886 = vmatpush1.msra.mxu0 %v554
  %1887 = vmatprep.subr.mxu0 0.0
  %1888 = vmatpush1.msra.mxu0 %v553
  %1889 = vmatprep.subr.mxu0 0.0
  %1890 = vmatpush1.msra.mxu0 %v552
  %1891 = vmatprep.subr.mxu0 0.0
  %1892 = vmatpush2.msra.mxu0 0.0
  %1893 = vmatprep.subr.mxu0 0.0
  %1894 = vmatpush2.msra.mxu0 0.0
  %1895 = vmatprep.subr.mxu0 0.0
  %1896 = vmatpush2.msra.mxu0 0.0
  %1897 = vmatprep.subr.mxu0 0.0
  %1898 = vmatpush2.msra.mxu0 0.0
  %1899 = vmatprep.subr.mxu0 0.0
  %1900 = vmatpush2.msra.mxu0 0.0
  %1901 = vmatprep.subr.mxu0 0.0
  %1902 = vmatpush2.msra.mxu0 0.0
  %1903 = vmatprep.subr.mxu0 0.0
  %1904 = vmatpush2.msra.mxu0 0.0
  %1905 = vmatprep.subr.mxu0 0.0
  %1906 = vmatpush2.msra.mxu0 0.0
  %1907 = vmatprep.subr.mxu0 0.0
  %1908 = vmatpush2.msra.mxu0 0.0
  %1909 = vmatprep.subr.mxu0 0.0
  %1910 = vmatpush2.msra.mxu0 0.0
  %1911 = vmatprep.subr.mxu0 0.0
  %1912 = vmatpush2.msra.mxu0 0.0
  %1913 = vmatprep.subr.mxu0 0.0
  %1914 = vmatpush2.msra.mxu0 0.0
  %1915 = vmatprep.subr.mxu0 0.0
  %1916 = vmatpush2.msra.mxu0 0.0
  %1917 = vmatprep.subr.mxu0 0.0
  %1918 = vmatpush2.msra.mxu0 0.0
  %1919 = vmatprep.subr.mxu0 0.0
  %1920 = vmatpush2.msra.mxu0 0.0
  %1921 = vmatprep.subr.mxu0 0.0
  %1922 = vmatpush2.msra.mxu0 0.0
  %1923 = vmatprep.mubr.f32.mxu0 0.0
  %1924 = vmatmul.mubr.f32.gmra.mxu0 %v1857
  %v1925 = vpop.f32.mrf.mxu0
  %v1926 = vadd.f32 %v676, %v1925
  %v1927 = vpop.f32.mrf.mxu0
  %1928 = vdwg.mxu0
  %v1929 = vmax.f32 %v1926, 0.0
  %v1930 = vmul.f32 %v1929, %v756
  %v1931 = vsel %vm302, %v1930, 0.0
  %1932 = vadd.xlane.f32.xlu0 %v1931
  %v1933 = vpop.xlane.xlu0 %1932
  %v1934 = vadd.f32 %v1933, %v766
  %vm1935 = vcmp.eq.s32.totalorder %v560, 5
  %v1936 = vsel %vm1935, %v1849, 0.0
  %v1937 = vsel %vm771, %v1936, 0.0
  %v1938 = vrot.slane %v1937, 4
  %v1939 = vadd.f32 %v1937, %v1938
  %v1940 = vrot.slane %v1939, 2
  %v1941 = vadd.f32 %v1939, %v1940
  %v1942 = vrot.slane %v1941, 1
  %v1943 = vadd.f32 %v1941, %v1942
  %v1944 = vsel %vm771, %v1849, -inf
  %v1945 = vrot.slane %v1944, 4
  %v1946 = vmax.f32 %v1944, %v1945
  %v1947 = vrot.slane %v1946, 2
  %v1948 = vmax.f32 %v1946, %v1947
  %v1949 = vrot.slane %v1948, 1
  %v1950 = vmax.f32 %v1948, %v1949
  %v1951 = vsub.f32 %v1849, %v1950
  %v1952 = vmul.f32 %v1951, 1.442695
  %v1953 = vpow.pop %v1952
  %v1954 = vsel %vm771, %v1953, 0.0
  %v1955 = vrot.slane %v1954, 4
  %v1956 = vadd.f32 %v1954, %v1955
  %v1957 = vrot.slane %v1956, 2
  %v1958 = vadd.f32 %v1956, %v1957
  %v1959 = vrot.slane %v1958, 1
  %v1960 = vadd.f32 %v1958, %v1959
  %v1961 = vlog2.pop %v1960
  %v1962 = vmul.f32 %v1961, 0.6931472
  %v1963 = vadd.f32 %v1950, %v1962
  %v1964 = vsub.f32 %v1943, %v1963
  %v1965 = vadd.f32 %v1732, %v1964
  %v1966 = vsel %vm1935, %v1934, 0.0
  %v1967 = vsel %vm771, %v1966, 0.0
  %v1968 = vrot.slane %v1967, 4
  %v1969 = vadd.f32 %v1967, %v1968
  %v1970 = vrot.slane %v1969, 2
  %v1971 = vadd.f32 %v1969, %v1970
  %v1972 = vrot.slane %v1971, 1
  %v1973 = vadd.f32 %v1971, %v1972
  %v1974 = vsel %vm771, %v1934, -inf
  %v1975 = vrot.slane %v1974, 4
  %v1976 = vmax.f32 %v1974, %v1975
  %v1977 = vrot.slane %v1976, 2
  %v1978 = vmax.f32 %v1976, %v1977
  %v1979 = vrot.slane %v1978, 1
  %v1980 = vmax.f32 %v1978, %v1979
  %v1981 = vsub.f32 %v1934, %v1980
  %v1982 = vmul.f32 %v1981, 1.442695
  %v1983 = vpow.pop %v1982
  %v1984 = vsel %vm771, %v1983, 0.0
  %v1985 = vrot.slane %v1984, 4
  %v1986 = vadd.f32 %v1984, %v1985
  %v1987 = vrot.slane %v1986, 2
  %v1988 = vadd.f32 %v1986, %v1987
  %v1989 = vrot.slane %v1988, 1
  %v1990 = vadd.f32 %v1988, %v1989
  %v1991 = vlog2.pop %v1990
  %v1992 = vmul.f32 %v1991, 0.6931472
  %v1993 = vadd.f32 %v1980, %v1992
  %v1994 = vsub.f32 %v1973, %v1993
  %v1995 = vadd.f32 %v1762, %v1994
  %v1996 = vld [vmem:[#allocation2 + $0x6] sm:$0x1]
  %v1997 = vld [vmem:[#allocation3 + $0x6] sm:$0x1]
  %v1998 = vlaneseq
  %v1999 = vshrl.u32 %v1998, 7
  %v2000 = vsub.s32 0, %v1999
  %v2001 = vrot.slane %v1996, %v2000
  %v2002 = vadd.f32 %v2001, %v462
  %v2003 = vmax.f32 %v2002, 0.0
  %v2005 = vsel %vm302, %v2003, 0
  %2007 = vmatprep.subr.mxu0 0.0
  %2008 = vmatpush1.msra.mxu0 0.0
  %2009 = vmatprep.subr.mxu0 0.0
  %2010 = vmatpush1.msra.mxu0 0.0
  %2011 = vmatprep.subr.mxu0 0.0
  %2012 = vmatpush1.msra.mxu0 0.0
  %2013 = vmatprep.subr.mxu0 0.0
  %2014 = vmatpush1.msra.mxu0 0.0
  %2015 = vmatprep.subr.mxu0 0.0
  %2016 = vmatpush1.msra.mxu0 0.0
  %2017 = vmatprep.subr.mxu0 0.0
  %2018 = vmatpush1.msra.mxu0 0.0
  %2019 = vmatprep.subr.mxu0 0.0
  %2020 = vmatpush1.msra.mxu0 0.0
  %2021 = vmatprep.subr.mxu0 0.0
  %2022 = vmatpush1.msra.mxu0 0.0
  %2023 = vmatprep.subr.mxu0 0.0
  %2024 = vmatpush1.msra.mxu0 0.0
  %2025 = vmatprep.subr.mxu0 0.0
  %2026 = vmatpush1.msra.mxu0 0.0
  %2027 = vmatprep.subr.mxu0 0.0
  %2028 = vmatpush1.msra.mxu0 0.0
  %2029 = vmatprep.subr.mxu0 0.0
  %2030 = vmatpush1.msra.mxu0 0.0
  %2031 = vmatprep.subr.mxu0 0.0
  %2032 = vmatpush1.msra.mxu0 %v548
  %2033 = vmatprep.subr.mxu0 0.0
  %2034 = vmatpush1.msra.mxu0 %v547
  %2035 = vmatprep.subr.mxu0 0.0
  %2036 = vmatpush1.msra.mxu0 %v546
  %2037 = vmatprep.subr.mxu0 0.0
  %2038 = vmatpush1.msra.mxu0 %v545
  %2039 = vmatprep.subr.mxu0 0.0
  %2040 = vmatpush2.msra.mxu0 0.0
  %2041 = vmatprep.subr.mxu0 0.0
  %2042 = vmatpush2.msra.mxu0 0.0
  %2043 = vmatprep.subr.mxu0 0.0
  %2044 = vmatpush2.msra.mxu0 0.0
  %2045 = vmatprep.subr.mxu0 0.0
  %2046 = vmatpush2.msra.mxu0 0.0
  %2047 = vmatprep.subr.mxu0 0.0
  %2048 = vmatpush2.msra.mxu0 0.0
  %2049 = vmatprep.subr.mxu0 0.0
  %2050 = vmatpush2.msra.mxu0 0.0
  %2051 = vmatprep.subr.mxu0 0.0
  %2052 = vmatpush2.msra.mxu0 0.0
  %2053 = vmatprep.subr.mxu0 0.0
  %2054 = vmatpush2.msra.mxu0 0.0
  %2055 = vmatprep.subr.mxu0 0.0
  %2056 = vmatpush2.msra.mxu0 0.0
  %2057 = vmatprep.subr.mxu0 0.0
  %2058 = vmatpush2.msra.mxu0 0.0
  %2059 = vmatprep.subr.mxu0 0.0
  %2060 = vmatpush2.msra.mxu0 0.0
  %2061 = vmatprep.subr.mxu0 0.0
  %2062 = vmatpush2.msra.mxu0 0.0
  %2063 = vmatprep.subr.mxu0 0.0
  %2064 = vmatpush2.msra.mxu0 0.0
  %2065 = vmatprep.subr.mxu0 0.0
  %2066 = vmatpush2.msra.mxu0 0.0
  %2067 = vmatprep.subr.mxu0 0.0
  %2068 = vmatpush2.msra.mxu0 0.0
  %2069 = vmatprep.subr.mxu0 0.0
  %2070 = vmatpush2.msra.mxu0 0.0
  %2071 = vmatprep.mubr.f32.mxu0 0.0
  %2072 = vmatmul.mubr.f32.gmra.mxu0 %v2005
  %v2073 = vpop.f32.mrf.mxu0
  %v2074 = vadd.f32 %v573, %v2073
  %v2075 = vpop.f32.mrf.mxu0
  %2076 = vdwg.mxu0
  %v2077 = vmax.f32 %v2074, 0.0
  %v2078 = vmul.f32 %v2077, %v653
  %v2079 = vsel %vm302, %v2078, 0.0
  %2080 = vadd.xlane.f32.xlu0 %v2079
  %v2081 = vpop.xlane.xlu0 %2080
  %v2082 = vadd.f32 %v2081, %v663
  %v2083 = vlaneseq
  %v2084 = vshrl.u32 %v2083, 7
  %v2085 = vsub.s32 0, %v2084
  %v2086 = vrot.slane %v1997, %v2085
  %v2087 = vadd.f32 %v2086, %v542
  %v2088 = vmax.f32 %v2087, 0.0
  %v2090 = vsel %vm302, %v2088, 0
  %2092 = vmatprep.subr.mxu0 0.0
  %2093 = vmatpush1.msra.mxu0 0.0
  %2094 = vmatprep.subr.mxu0 0.0
  %2095 = vmatpush1.msra.mxu0 0.0
  %2096 = vmatprep.subr.mxu0 0.0
  %2097 = vmatpush1.msra.mxu0 0.0
  %2098 = vmatprep.subr.mxu0 0.0
  %2099 = vmatpush1.msra.mxu0 0.0
  %2100 = vmatprep.subr.mxu0 0.0
  %2101 = vmatpush1.msra.mxu0 0.0
  %2102 = vmatprep.subr.mxu0 0.0
  %2103 = vmatpush1.msra.mxu0 0.0
  %2104 = vmatprep.subr.mxu0 0.0
  %2105 = vmatpush1.msra.mxu0 0.0
  %2106 = vmatprep.subr.mxu0 0.0
  %2107 = vmatpush1.msra.mxu0 0.0
  %2108 = vmatprep.subr.mxu0 0.0
  %2109 = vmatpush1.msra.mxu0 0.0
  %2110 = vmatprep.subr.mxu0 0.0
  %2111 = vmatpush1.msra.mxu0 0.0
  %2112 = vmatprep.subr.mxu0 0.0
  %2113 = vmatpush1.msra.mxu0 0.0
  %2114 = vmatprep.subr.mxu0 0.0
  %2115 = vmatpush1.msra.mxu0 0.0
  %2116 = vmatprep.subr.mxu0 0.0
  %2117 = vmatpush1.msra.mxu0 %v555
  %2118 = vmatprep.subr.mxu0 0.0
  %2119 = vmatpush1.msra.mxu0 %v554
  %2120 = vmatprep.subr.mxu0 0.0
  %2121 = vmatpush1.msra.mxu0 %v553
  %2122 = vmatprep.subr.mxu0 0.0
  %2123 = vmatpush1.msra.mxu0 %v552
  %2124 = vmatprep.subr.mxu0 0.0
  %2125 = vmatpush2.msra.mxu0 0.0
  %2126 = vmatprep.subr.mxu0 0.0
  %2127 = vmatpush2.msra.mxu0 0.0
  %2128 = vmatprep.subr.mxu0 0.0
  %2129 = vmatpush2.msra.mxu0 0.0
  %2130 = vmatprep.subr.mxu0 0.0
  %2131 = vmatpush2.msra.mxu0 0.0
  %2132 = vmatprep.subr.mxu0 0.0
  %2133 = vmatpush2.msra.mxu0 0.0
  %2134 = vmatprep.subr.mxu0 0.0
  %2135 = vmatpush2.msra.mxu0 0.0
  %2136 = vmatprep.subr.mxu0 0.0
  %2137 = vmatpush2.msra.mxu0 0.0
  %2138 = vmatprep.subr.mxu0 0.0
  %2139 = vmatpush2.msra.mxu0 0.0
  %2140 = vmatprep.subr.mxu0 0.0
  %2141 = vmatpush2.msra.mxu0 0.0
  %2142 = vmatprep.subr.mxu0 0.0
  %2143 = vmatpush2.msra.mxu0 0.0
  %2144 = vmatprep.subr.mxu0 0.0
  %2145 = vmatpush2.msra.mxu0 0.0
  %2146 = vmatprep.subr.mxu0 0.0
  %2147 = vmatpush2.msra.mxu0 0.0
  %2148 = vmatprep.subr.mxu0 0.0
  %2149 = vmatpush2.msra.mxu0 0.0
  %2150 = vmatprep.subr.mxu0 0.0
  %2151 = vmatpush2.msra.mxu0 0.0
  %2152 = vmatprep.subr.mxu0 0.0
  %2153 = vmatpush2.msra.mxu0 0.0
  %2154 = vmatprep.subr.mxu0 0.0
  %2155 = vmatpush2.msra.mxu0 0.0
  %2156 = vmatprep.mubr.f32.mxu0 0.0
  %2157 = vmatmul.mubr.f32.gmra.mxu0 %v2090
  %v2158 = vpop.f32.mrf.mxu0
  %v2159 = vadd.f32 %v676, %v2158
  %v2160 = vpop.f32.mrf.mxu0
  %2161 = vdwg.mxu0
  %v2162 = vmax.f32 %v2159, 0.0
  %v2163 = vmul.f32 %v2162, %v756
  %v2164 = vsel %vm302, %v2163, 0.0
  %2165 = vadd.xlane.f32.xlu0 %v2164
  %v2166 = vpop.xlane.xlu0 %2165
  %v2167 = vadd.f32 %v2166, %v766
  %vm2168 = vcmp.eq.s32.totalorder %v560, 6
  %v2169 = vsel %vm2168, %v2082, 0.0
  %v2170 = vsel %vm771, %v2169, 0.0
  %v2171 = vrot.slane %v2170, 4
  %v2172 = vadd.f32 %v2170, %v2171
  %v2173 = vrot.slane %v2172, 2
  %v2174 = vadd.f32 %v2172, %v2173
  %v2175 = vrot.slane %v2174, 1
  %v2176 = vadd.f32 %v2174, %v2175
  %v2177 = vsel %vm771, %v2082, -inf
  %v2178 = vrot.slane %v2177, 4
  %v2179 = vmax.f32 %v2177, %v2178
  %v2180 = vrot.slane %v2179, 2
  %v2181 = vmax.f32 %v2179, %v2180
  %v2182 = vrot.slane %v2181, 1
  %v2183 = vmax.f32 %v2181, %v2182
  %v2184 = vsub.f32 %v2082, %v2183
  %v2185 = vmul.f32 %v2184, 1.442695
  %v2186 = vpow.pop %v2185
  %v2187 = vsel %vm771, %v2186, 0.0
  %v2188 = vrot.slane %v2187, 4
  %v2189 = vadd.f32 %v2187, %v2188
  %v2190 = vrot.slane %v2189, 2
  %v2191 = vadd.f32 %v2189, %v2190
  %v2192 = vrot.slane %v2191, 1
  %v2193 = vadd.f32 %v2191, %v2192
  %v2194 = vlog2.pop %v2193
  %v2195 = vmul.f32 %v2194, 0.6931472
  %v2196 = vadd.f32 %v2183, %v2195
  %v2197 = vsub.f32 %v2176, %v2196
  %v2198 = vadd.f32 %v1965, %v2197
  %v2199 = vsel %vm2168, %v2167, 0.0
  %v2200 = vsel %vm771, %v2199, 0.0
  %v2201 = vrot.slane %v2200, 4
  %v2202 = vadd.f32 %v2200, %v2201
  %v2203 = vrot.slane %v2202, 2
  %v2204 = vadd.f32 %v2202, %v2203
  %v2205 = vrot.slane %v2204, 1
  %v2206 = vadd.f32 %v2204, %v2205
  %v2207 = vsel %vm771, %v2167, -inf
  %v2208 = vrot.slane %v2207, 4
  %v2209 = vmax.f32 %v2207, %v2208
  %v2210 = vrot.slane %v2209, 2
  %v2211 = vmax.f32 %v2209, %v2210
  %v2212 = vrot.slane %v2211, 1
  %v2213 = vmax.f32 %v2211, %v2212
  %v2214 = vsub.f32 %v2167, %v2213
  %v2215 = vmul.f32 %v2214, 1.442695
  %v2216 = vpow.pop %v2215
  %v2217 = vsel %vm771, %v2216, 0.0
  %v2218 = vrot.slane %v2217, 4
  %v2219 = vadd.f32 %v2217, %v2218
  %v2220 = vrot.slane %v2219, 2
  %v2221 = vadd.f32 %v2219, %v2220
  %v2222 = vrot.slane %v2221, 1
  %v2223 = vadd.f32 %v2221, %v2222
  %v2224 = vlog2.pop %v2223
  %v2225 = vmul.f32 %v2224, 0.6931472
  %v2226 = vadd.f32 %v2213, %v2225
  %v2227 = vsub.f32 %v2206, %v2226
  %v2228 = vadd.f32 %v1995, %v2227
  %v2229 = vld [vmem:[#allocation2 + $0x7] sm:$0x1]
  %v2230 = vld [vmem:[#allocation3 + $0x7] sm:$0x1]
  %v2231 = vlaneseq
  %v2232 = vshrl.u32 %v2231, 7
  %v2233 = vsub.s32 0, %v2232
  %v2234 = vrot.slane %v2229, %v2233
  %v2235 = vadd.f32 %v2234, %v462
  %v2236 = vmax.f32 %v2235, 0.0
  %v2238 = vsel %vm302, %v2236, 0
  %2240 = vmatprep.subr.mxu0 0.0
  %2241 = vmatpush1.msra.mxu0 0.0
  %2242 = vmatprep.subr.mxu0 0.0
  %2243 = vmatpush1.msra.mxu0 0.0
  %2244 = vmatprep.subr.mxu0 0.0
  %2245 = vmatpush1.msra.mxu0 0.0
  %2246 = vmatprep.subr.mxu0 0.0
  %2247 = vmatpush1.msra.mxu0 0.0
  %2248 = vmatprep.subr.mxu0 0.0
  %2249 = vmatpush1.msra.mxu0 0.0
  %2250 = vmatprep.subr.mxu0 0.0
  %2251 = vmatpush1.msra.mxu0 0.0
  %2252 = vmatprep.subr.mxu0 0.0
  %2253 = vmatpush1.msra.mxu0 0.0
  %2254 = vmatprep.subr.mxu0 0.0
  %2255 = vmatpush1.msra.mxu0 0.0
  %2256 = vmatprep.subr.mxu0 0.0
  %2257 = vmatpush1.msra.mxu0 0.0
  %2258 = vmatprep.subr.mxu0 0.0
  %2259 = vmatpush1.msra.mxu0 0.0
  %2260 = vmatprep.subr.mxu0 0.0
  %2261 = vmatpush1.msra.mxu0 0.0
  %2262 = vmatprep.subr.mxu0 0.0
  %2263 = vmatpush1.msra.mxu0 0.0
  %2264 = vmatprep.subr.mxu0 0.0
  %2265 = vmatpush1.msra.mxu0 %v548
  %2266 = vmatprep.subr.mxu0 0.0
  %2267 = vmatpush1.msra.mxu0 %v547
  %2268 = vmatprep.subr.mxu0 0.0
  %2269 = vmatpush1.msra.mxu0 %v546
  %2270 = vmatprep.subr.mxu0 0.0
  %2271 = vmatpush1.msra.mxu0 %v545
  %2272 = vmatprep.subr.mxu0 0.0
  %2273 = vmatpush2.msra.mxu0 0.0
  %2274 = vmatprep.subr.mxu0 0.0
  %2275 = vmatpush2.msra.mxu0 0.0
  %2276 = vmatprep.subr.mxu0 0.0
  %2277 = vmatpush2.msra.mxu0 0.0
  %2278 = vmatprep.subr.mxu0 0.0
  %2279 = vmatpush2.msra.mxu0 0.0
  %2280 = vmatprep.subr.mxu0 0.0
  %2281 = vmatpush2.msra.mxu0 0.0
  %2282 = vmatprep.subr.mxu0 0.0
  %2283 = vmatpush2.msra.mxu0 0.0
  %2284 = vmatprep.subr.mxu0 0.0
  %2285 = vmatpush2.msra.mxu0 0.0
  %2286 = vmatprep.subr.mxu0 0.0
  %2287 = vmatpush2.msra.mxu0 0.0
  %2288 = vmatprep.subr.mxu0 0.0
  %2289 = vmatpush2.msra.mxu0 0.0
  %2290 = vmatprep.subr.mxu0 0.0
  %2291 = vmatpush2.msra.mxu0 0.0
  %2292 = vmatprep.subr.mxu0 0.0
  %2293 = vmatpush2.msra.mxu0 0.0
  %2294 = vmatprep.subr.mxu0 0.0
  %2295 = vmatpush2.msra.mxu0 0.0
  %2296 = vmatprep.subr.mxu0 0.0
  %2297 = vmatpush2.msra.mxu0 0.0
  %2298 = vmatprep.subr.mxu0 0.0
  %2299 = vmatpush2.msra.mxu0 0.0
  %2300 = vmatprep.subr.mxu0 0.0
  %2301 = vmatpush2.msra.mxu0 0.0
  %2302 = vmatprep.subr.mxu0 0.0
  %2303 = vmatpush2.msra.mxu0 0.0
  %2304 = vmatprep.mubr.f32.mxu0 0.0
  %2305 = vmatmul.mubr.f32.gmra.mxu0 %v2238
  %v2306 = vpop.f32.mrf.mxu0
  %v2307 = vadd.f32 %v573, %v2306
  %v2308 = vpop.f32.mrf.mxu0
  %2309 = vdwg.mxu0
  %v2310 = vmax.f32 %v2307, 0.0
  %v2311 = vmul.f32 %v2310, %v653
  %v2312 = vsel %vm302, %v2311, 0.0
  %2313 = vadd.xlane.f32.xlu0 %v2312
  %v2314 = vpop.xlane.xlu0 %2313
  %v2315 = vadd.f32 %v2314, %v663
  %v2316 = vlaneseq
  %v2317 = vshrl.u32 %v2316, 7
  %v2318 = vsub.s32 0, %v2317
  %v2319 = vrot.slane %v2230, %v2318
  %v2320 = vadd.f32 %v2319, %v542
  %v2321 = vmax.f32 %v2320, 0.0
  %v2323 = vsel %vm302, %v2321, 0
  %2325 = vmatprep.subr.mxu0 0.0
  %2326 = vmatpush1.msra.mxu0 0.0
  %2327 = vmatprep.subr.mxu0 0.0
  %2328 = vmatpush1.msra.mxu0 0.0
  %2329 = vmatprep.subr.mxu0 0.0
  %2330 = vmatpush1.msra.mxu0 0.0
  %2331 = vmatprep.subr.mxu0 0.0
  %2332 = vmatpush1.msra.mxu0 0.0
  %2333 = vmatprep.subr.mxu0 0.0
  %2334 = vmatpush1.msra.mxu0 0.0
  %2335 = vmatprep.subr.mxu0 0.0
  %2336 = vmatpush1.msra.mxu0 0.0
  %2337 = vmatprep.subr.mxu0 0.0
  %2338 = vmatpush1.msra.mxu0 0.0
  %2339 = vmatprep.subr.mxu0 0.0
  %2340 = vmatpush1.msra.mxu0 0.0
  %2341 = vmatprep.subr.mxu0 0.0
  %2342 = vmatpush1.msra.mxu0 0.0
  %2343 = vmatprep.subr.mxu0 0.0
  %2344 = vmatpush1.msra.mxu0 0.0
  %2345 = vmatprep.subr.mxu0 0.0
  %2346 = vmatpush1.msra.mxu0 0.0
  %2347 = vmatprep.subr.mxu0 0.0
  %2348 = vmatpush1.msra.mxu0 0.0
  %2349 = vmatprep.subr.mxu0 0.0
  %2350 = vmatpush1.msra.mxu0 %v555
  %2351 = vmatprep.subr.mxu0 0.0
  %2352 = vmatpush1.msra.mxu0 %v554
  %2353 = vmatprep.subr.mxu0 0.0
  %2354 = vmatpush1.msra.mxu0 %v553
  %2355 = vmatprep.subr.mxu0 0.0
  %2356 = vmatpush1.msra.mxu0 %v552
  %2357 = vmatprep.subr.mxu0 0.0
  %2358 = vmatpush2.msra.mxu0 0.0
  %2359 = vmatprep.subr.mxu0 0.0
  %2360 = vmatpush2.msra.mxu0 0.0
  %2361 = vmatprep.subr.mxu0 0.0
  %2362 = vmatpush2.msra.mxu0 0.0
  %2363 = vmatprep.subr.mxu0 0.0
  %2364 = vmatpush2.msra.mxu0 0.0
  %2365 = vmatprep.subr.mxu0 0.0
  %2366 = vmatpush2.msra.mxu0 0.0
  %2367 = vmatprep.subr.mxu0 0.0
  %2368 = vmatpush2.msra.mxu0 0.0
  %2369 = vmatprep.subr.mxu0 0.0
  %2370 = vmatpush2.msra.mxu0 0.0
  %2371 = vmatprep.subr.mxu0 0.0
  %2372 = vmatpush2.msra.mxu0 0.0
  %2373 = vmatprep.subr.mxu0 0.0
  %2374 = vmatpush2.msra.mxu0 0.0
  %2375 = vmatprep.subr.mxu0 0.0
  %2376 = vmatpush2.msra.mxu0 0.0
  %2377 = vmatprep.subr.mxu0 0.0
  %2378 = vmatpush2.msra.mxu0 0.0
  %2379 = vmatprep.subr.mxu0 0.0
  %2380 = vmatpush2.msra.mxu0 0.0
  %2381 = vmatprep.subr.mxu0 0.0
  %2382 = vmatpush2.msra.mxu0 0.0
  %2383 = vmatprep.subr.mxu0 0.0
  %2384 = vmatpush2.msra.mxu0 0.0
  %2385 = vmatprep.subr.mxu0 0.0
  %2386 = vmatpush2.msra.mxu0 0.0
  %2387 = vmatprep.subr.mxu0 0.0
  %2388 = vmatpush2.msra.mxu0 0.0
  %2389 = vmatprep.mubr.f32.mxu0 0.0
  %2390 = vmatmul.mubr.f32.gmra.mxu0 %v2323
  %v2391 = vpop.f32.mrf.mxu0
  %v2392 = vadd.f32 %v676, %v2391
  %v2393 = vpop.f32.mrf.mxu0
  %2394 = vdwg.mxu0
  %v2395 = vmax.f32 %v2392, 0.0
  %v2396 = vmul.f32 %v2395, %v756
  %v2397 = vsel %vm302, %v2396, 0.0
  %2398 = vadd.xlane.f32.xlu0 %v2397
  %v2399 = vpop.xlane.xlu0 %2398
  %v2400 = vadd.f32 %v2399, %v766
  %vm2401 = vcmp.eq.s32.totalorder %v560, 7
  %v2402 = vsel %vm2401, %v2315, 0.0
  %v2403 = vsel %vm771, %v2402, 0.0
  %v2404 = vrot.slane %v2403, 4
  %v2405 = vadd.f32 %v2403, %v2404
  %v2406 = vrot.slane %v2405, 2
  %v2407 = vadd.f32 %v2405, %v2406
  %v2408 = vrot.slane %v2407, 1
  %v2409 = vadd.f32 %v2407, %v2408
  %v2410 = vsel %vm771, %v2315, -inf
  %v2411 = vrot.slane %v2410, 4
  %v2412 = vmax.f32 %v2410, %v2411
  %v2413 = vrot.slane %v2412, 2
  %v2414 = vmax.f32 %v2412, %v2413
  %v2415 = vrot.slane %v2414, 1
  %v2416 = vmax.f32 %v2414, %v2415
  %v2417 = vsub.f32 %v2315, %v2416
  %v2418 = vmul.f32 %v2417, 1.442695
  %v2419 = vpow.pop %v2418
  %v2420 = vsel %vm771, %v2419, 0.0
  %v2421 = vrot.slane %v2420, 4
  %v2422 = vadd.f32 %v2420, %v2421
  %v2423 = vrot.slane %v2422, 2
  %v2424 = vadd.f32 %v2422, %v2423
  %v2425 = vrot.slane %v2424, 1
  %v2426 = vadd.f32 %v2424, %v2425
  %v2427 = vlog2.pop %v2426
  %v2428 = vmul.f32 %v2427, 0.6931472
  %v2429 = vadd.f32 %v2416, %v2428
  %v2430 = vsub.f32 %v2409, %v2429
  %v2431 = vadd.f32 %v2198, %v2430
  %v2432 = vsel %vm2401, %v2400, 0.0
  %v2433 = vsel %vm771, %v2432, 0.0
  %v2434 = vrot.slane %v2433, 4
  %v2435 = vadd.f32 %v2433, %v2434
  %v2436 = vrot.slane %v2435, 2
  %v2437 = vadd.f32 %v2435, %v2436
  %v2438 = vrot.slane %v2437, 1
  %v2439 = vadd.f32 %v2437, %v2438
  %v2440 = vsel %vm771, %v2400, -inf
  %v2441 = vrot.slane %v2440, 4
  %v2442 = vmax.f32 %v2440, %v2441
  %v2443 = vrot.slane %v2442, 2
  %v2444 = vmax.f32 %v2442, %v2443
  %v2445 = vrot.slane %v2444, 1
  %v2446 = vmax.f32 %v2444, %v2445
  %v2447 = vsub.f32 %v2400, %v2446
  %v2448 = vmul.f32 %v2447, 1.442695
  %v2449 = vpow.pop %v2448
  %v2450 = vsel %vm771, %v2449, 0.0
  %v2451 = vrot.slane %v2450, 4
  %v2452 = vadd.f32 %v2450, %v2451
  %v2453 = vrot.slane %v2452, 2
  %v2454 = vadd.f32 %v2452, %v2453
  %v2455 = vrot.slane %v2454, 1
  %v2456 = vadd.f32 %v2454, %v2455
  %v2457 = vlog2.pop %v2456
  %v2458 = vmul.f32 %v2457, 0.6931472
  %v2459 = vadd.f32 %v2446, %v2458
  %v2460 = vsub.f32 %v2439, %v2459
  %v2461 = vadd.f32 %v2228, %v2460
  %v2462 = vmul.f32 %v2431, 0.125
  %v2463 = vadd.f32 %v2462, 2.0794415
  %vm2464 = vcmask 0
  %2465 = vst.msk [vmem:[%s18] sm:$0x1] %vm2464, %v2463
  %v2466 = vmul.f32 %v2461, 0.125
  %v2467 = vadd.f32 %v2466, 2.0794415
  %2469 = vrot.lane.b32.xlu0 %v2467, 1
  %v2470 = vpop.permute.xlu0 %2469
  %vm2472 = vcmask 8200
  %2473 = vst.msk [vmem:[%s18] sm:$0x1] %vm2472, %v2470
  // Predicated region
  $region74: #{cpic_forward.1} parent=0 // pred_check
    _
  $region75: #{cpic_forward.1} parent=0 // pred_check_branch
    %2475 = sbr.rel (0) target = $region77
  $region76: #{cpic_forward.1} parent=0 // pred_region
    _
  $region77: #{cpic_forward.1} parent=0 // pred_fallthru
    _
  // Predicated region
  $region78: #{cpic_forward.1} parent=0 // pred_check
    _
  $region79: #{cpic_forward.1} parent=0 // pred_check_branch
    %2477 = sbr.rel (0) target = $region81
  $region80: #{cpic_forward.1} parent=0 // pred_region
    _
  $region81: #{cpic_forward.1} parent=0 // pred_fallthru
    _

</llo_original>
